<compile_context>
chip_gen: v7x
topology: tpu7x:2x2x1
jax: 0.10.0
libtpu: 0.0.40
codegen_flags: <defaults>
</compile_context>

<pallas_src>
import jax
import jax.numpy as jnp
from jax.experimental import pallas as pl
from jax.experimental.pallas import tpu as pltpu

BN_EPS = 1e-5

# Scoped-VMEM cap: above the v5e(16)/v6e(32)/v7x(32) defaults, below v7x's 64 MiB
# physical. Raise toward 96 MiB on v5e/v6e if tiles grow.
VMEM_LIMIT = 48 * 1024 * 1024

# Set to jnp.bfloat16 on v5e/v6e/v7x for full MXU rate (accumulation stays f32).
# Kept f32 here so the demo matches the f32 reference within tight tolerance.
MXU_DTYPE = jnp.float32


def _round_up(x, m):
    return ((x + m - 1) // m) * m


# --------------------------------------------------------------------------- #
# Conv pass: optional fused input BN+ReLU prologue, one im2col matmul,
#            raw conv output + per-tile BN partial statistics.
# --------------------------------------------------------------------------- #
def _make_conv_kernel(fuse_input_bnrelu, th, w_out, h_valid):
    """Build the conv kernel for one row-group tile.

    Refs (fused):      x, w, scale_in, shift_in, y, stats
    Refs (not fused):  x, w, y, stats
      x     : (1, TH+2, W+2, Cin_pad)  zero-padded rows (with halo)
      w     : (9*Cin_pad, Co_pad)      flattened taps, row = (kh*3+kw)*Cin_pad + c
      y     : (1, TH, W, Co_pad)       raw conv output (no bias)
      stats : (1, 2, Co_pad)           per-tile [sum, centered M2]
    """
    thp2, wp2 = th + 2, w_out + 2

    def kernel(*refs):
        if fuse_input_bnrelu:
            x_ref, w_ref, sc_ref, sh_ref, y_ref, stats_ref = refs
        else:
            x_ref, w_ref, y_ref, stats_ref = refs

        cin = x_ref.shape[-1]
        co_pad = y_ref.shape[-1]

        xt = x_ref[0].astype(jnp.float32)                  # (TH+2, W+2, Cin_pad)

        if fuse_input_bnrelu:
            # Previous block's BN affine + ReLU applied in VMEM. The spatial
            # zero-padding halo must stay exactly 0 after the affine -> mask it.
            hb = pl.program_id(1)
            row0 = hb * th                                  # global padded row of tile row 0
            rows = jax.lax.broadcasted_iota(jnp.int32, (thp2, wp2, cin), 0) + row0
            cols = jax.lax.broadcasted_iota(jnp.int32, (thp2, wp2, cin), 1)
            interior = ((rows >= 1) & (rows <= h_valid) &
                        (cols >= 1) & (cols <= w_out))
            act = jnp.maximum(xt * sc_ref[...] + sh_ref[...], 0.0)
            xt = jnp.where(interior, act, 0.0)

        # im2col patch tile in VMEM: all pieces are full 128-lane wide (Cin_pad
        # is a multiple of 128), so slices/concat stay lane-aligned.
        taps = []
        for kh in range(3):
            for kw in range(3):
                taps.append(xt[kh:kh + th, kw:kw + w_out, :])   # (TH, W, Cin_pad)
        patch = jnp.concatenate(taps, axis=-1)                  # (TH, W, 9*Cin_pad)
        patch = patch.reshape(th * w_out, 9 * cin).astype(MXU_DTYPE)

        # Single big-K MXU matmul (accumulation stays inside the MXU).
        acc = jnp.dot(patch, w_ref[...].astype(MXU_DTYPE),
                      preferred_element_type=jnp.float32)       # (TH*W, Co_pad)

        y_ref[0] = acc.reshape(th, w_out, co_pad)

        # Per-tile BN partials: [sum, centered M2]; Chan combine happens in JAX.
        inv_rows = 1.0 / float(th * w_out)
        tsum = jnp.sum(acc, axis=0, keepdims=True)              # (1, Co_pad)
        centered = acc - tsum * inv_rows
        tm2 = jnp.sum(centered * centered, axis=0, keepdims=True)
        stats_ref[0] = jnp.concatenate([tsum, tm2], axis=0)     # (2, Co_pad)

    return kernel


def conv_stats_pallas(x_groups, w_flat, n, num_h, h_valid,
                      scale_in=None, shift_in=None):
    g, thp2, wp2, cin = x_groups.shape
    th, w_out = thp2 - 2, wp2 - 2
    co_pad = w_flat.shape[-1]
    fused = scale_in is not None
    kernel = _make_conv_kernel(fused, th, w_out, h_valid)

    in_specs = [
        pl.BlockSpec((1, thp2, wp2, cin), lambda b, hb: (b * num_h + hb, 0, 0, 0)),
        pl.BlockSpec((9 * cin, co_pad), lambda b, hb: (0, 0)),
    ]
    args = [x_groups, w_flat]
    if fused:
        in_specs += [pl.BlockSpec((1, co_pad), lambda b, hb: (0, 0)),
                     pl.BlockSpec((1, co_pad), lambda b, hb: (0, 0))]
        args += [scale_in.reshape(1, co_pad), shift_in.reshape(1, co_pad)]

    return pl.pallas_call(
        kernel,
        out_shape=(
            jax.ShapeDtypeStruct((n, num_h * th, w_out, co_pad), jnp.float32),
            jax.ShapeDtypeStruct((g, 2, co_pad), jnp.float32),
        ),
        grid=(n, num_h),
        in_specs=in_specs,
        out_specs=(
            pl.BlockSpec((1, th, w_out, co_pad), lambda b, hb: (b, hb, 0, 0)),
            pl.BlockSpec((1, 2, co_pad), lambda b, hb: (b * num_h + hb, 0, 0)),
        ),
        compiler_params=pltpu.CompilerParams(
            dimension_semantics=("parallel", "parallel"),
            vmem_limit_bytes=VMEM_LIMIT),
    )(*args)


# --------------------------------------------------------------------------- #
# Final pass: fused BN affine + ReLU, lane-dense (Co_pad wide) output.
# --------------------------------------------------------------------------- #
def bn_relu_kernel(y_ref, scale_ref, shift_ref, o_ref):
    o_ref[...] = jnp.maximum(y_ref[...] * scale_ref[...] + shift_ref[...], 0.0)


def bn_relu_pallas(y_flat, scale_pad, shift_pad, tm):
    m, co_pad = y_flat.shape
    m_pad = _round_up(m, tm)
    if m_pad != m:                                  # pad rows instead of shrinking tm
        y_flat = jnp.pad(y_flat, ((0, m_pad - m), (0, 0)))
    out = pl.pallas_call(
        bn_relu_kernel,
        out_shape=jax.ShapeDtypeStruct((m_pad, co_pad), jnp.float32),
        grid=(m_pad // tm,),
        in_specs=[
            pl.BlockSpec((tm, co_pad), lambda i: (i, 0)),
            pl.BlockSpec((1, co_pad), lambda i: (0, 0)),
            pl.BlockSpec((1, co_pad), lambda i: (0, 0)),
        ],
        out_specs=pl.BlockSpec((tm, co_pad), lambda i: (i, 0)),
        compiler_params=pltpu.CompilerParams(
            dimension_semantics=("parallel",),
            vmem_limit_bytes=VMEM_LIMIT),
    )(y_flat, scale_pad.reshape(1, co_pad), shift_pad.reshape(1, co_pad))
    return out[:m] if m_pad != m else out


# --------------------------------------------------------------------------- #
# Layout glue (plain JAX)
# --------------------------------------------------------------------------- #
def _pick_row_tile(h, w, k_chan, target=32, patch_budget_bytes=12 << 20):
    """Largest divisor of H <= target, capped so the (TH*W, 9*K) patch fits VMEM."""
    per_row = w * 9 * k_chan * 4
    cap = max(1, patch_budget_bytes // per_row)
    t = max(1, min(h, target, cap))
    while h % t:
        t -= 1
    # TODO(synk): for awkward H (prime etc.) pad H up and mask rows instead of
    # letting the tile degenerate toward 1.
    return t


def build_row_groups(x_nhwc, th):
    """(N,H,W,C) -> (N*(H//th), th+2, W+2, C): zero-padded overlapping row groups."""
    n, h, w, c = x_nhwc.shape
    xp = jnp.pad(x_nhwc, ((0, 0), (1, 1), (1, 1), (0, 0)))
    num_h = h // th
    groups = [xp[:, i * th:i * th + th + 2] for i in range(num_h)]
    xg = jnp.stack(groups, axis=1)                 # (N, num_h, th+2, W+2, C)
    return xg.reshape(n * num_h, th + 2, w + 2, c)


def prep_conv_weight(w_oihw, ci_pad, co_pad):
    """(Co, Ci, 3, 3) -> (9*Ci_pad, Co_pad), row = (kh*3+kw)*Ci_pad + ci."""
    co, ci, kh, kw = w_oihw.shape
    wt = jnp.pad(w_oihw, ((0, 0), (0, ci_pad - ci), (0, 0), (0, 0)))
    wt = jnp.transpose(wt, (2, 3, 1, 0)).reshape(kh * kw * ci_pad, co)
    return jnp.pad(wt, ((0, 0), (0, co_pad - co)))


def bn_affine_from_stats(stats, rows_per_tile, gamma, beta, co):
    """Chan-combine per-tile [sum, centered M2] into BN scale/shift (biased var)."""
    sums = stats[:, 0, :co]                        # (g, co)
    m2s = stats[:, 1, :co]
    g = sums.shape[0]
    m_total = g * rows_per_tile
    mean = jnp.sum(sums, axis=0) / m_total
    tile_mean = sums / rows_per_tile
    m2 = jnp.sum(m2s, axis=0) + rows_per_tile * jnp.sum((tile_mean - mean) ** 2, axis=0)
    var = jnp.maximum(m2 / m_total, 0.0)
    inv_std = jax.lax.rsqrt(var + BN_EPS)
    scale = gamma * inv_std
    shift = beta - mean * scale
    return scale, shift


# --------------------------------------------------------------------------- #
# Forward
# --------------------------------------------------------------------------- #
def double_conv(x_nchw, params):
    """Forward of DoubleConv. Input/output are NCHW float32, like PyTorch."""
    (w1, _b1, g1, be1, w2, _b2, g2, be2) = params  # conv bias cancels under train-mode BN
    n, cin, h, w = x_nchw.shape
    co = w1.shape[0]
    cin_pad = _round_up(cin, 128)                  # lane-aligned K pieces in the kernel
    co_pad = _round_up(co, 128)
    th = _pick_row_tile(h, w, max(cin_pad, co_pad), target=32)
    num_h = h // th
    m_total = n * h * w
    tm = min(2048, _round_up(m_total, 8))

    x_nhwc = jnp.transpose(x_nchw, (0, 2, 3, 1))   # NHWC end-to-end
    x_nhwc = jnp.pad(x_nhwc, ((0, 0), (0, 0), (0, 0), (0, cin_pad - cin)))

    # ---- block 1: conv1 + BN1 partial stats ----
    xg1 = build_row_groups(x_nhwc, th)
    w1f = prep_conv_weight(w1, cin_pad, co_pad)
    y1, st1 = conv_stats_pallas(xg1, w1f, n, num_h, h)
    scale1, shift1 = bn_affine_from_stats(st1, th * w, g1, be1, co)
    scale1p = jnp.pad(scale1, (0, co_pad - co))    # padded channels stay exactly 0
    shift1p = jnp.pad(shift1, (0, co_pad - co))

    # ---- block 2: BN1 affine + ReLU fused into conv2's prologue, + BN2 stats ----
    xg2 = build_row_groups(y1, th)                 # y1 flows at co_pad channels
    w2f = prep_conv_weight(w2, co_pad, co_pad)     # K rows zero-padded to co_pad
    y2, st2 = conv_stats_pallas(xg2, w2f, n, num_h, h,
                                scale_in=scale1p, shift_in=shift1p)
    scale2, shift2 = bn_affine_from_stats(st2, th * w, g2, be2, co)
    scale2p = jnp.pad(scale2, (0, co_pad - co))
    shift2p = jnp.pad(shift2, (0, co_pad - co))

    # ---- final BN2 + ReLU: lane-dense (co_pad wide); slice to co only here ----
    out = bn_relu_pallas(y2.reshape(m_total, co_pad), scale2p, shift2p, tm)
    out = out.reshape(n, h, w, co_pad)[..., :co]
    return jnp.transpose(out, (0, 3, 1, 2))        # back to NCHW


# --------------------------------------------------------------------------- #
# Reference & test harness
# --------------------------------------------------------------------------- #
def reference_double_conv(x_nchw, params):
    """Pure-JAX reference mirroring PyTorch train-mode semantics."""
    (w1, b1, g1, be1, w2, b2, g2, be2) = params

    def block(x, w, b, g, beta):
        y = jax.lax.conv_general_dilated(
            x, w, window_strides=(1, 1), padding="SAME",
            dimension_numbers=("NCHW", "OIHW", "NCHW"))
        y = y + b[None, :, None, None]
        mean = jnp.mean(y, axis=(0, 2, 3), keepdims=True)
        var = jnp.mean((y - mean) ** 2, axis=(0, 2, 3), keepdims=True)
        y = (y - mean) * jax.lax.rsqrt(var + BN_EPS)
        y = y * g[None, :, None, None] + beta[None, :, None, None]
        return jnp.maximum(y, 0.0)

    return block(block(x_nchw, w1, b1, g1, be1), w2, b2, g2, be2)


def init_params(key, in_ch, out_ch):
    ks = jax.random.split(key, 8)
    s1 = 1.0 / jnp.sqrt(in_ch * 9.0)
    s2 = 1.0 / jnp.sqrt(out_ch * 9.0)
    w1 = jax.random.uniform(ks[0], (out_ch, in_ch, 3, 3), jnp.float32, -s1, s1)
    b1 = jax.random.uniform(ks[1], (out_ch,), jnp.float32, -s1, s1)
    g1 = 1.0 + 0.1 * jax.random.normal(ks[2], (out_ch,), jnp.float32)
    be1 = 0.1 * jax.random.normal(ks[3], (out_ch,), jnp.float32)
    w2 = jax.random.uniform(ks[4], (out_ch, out_ch, 3, 3), jnp.float32, -s2, s2)
    b2 = jax.random.uniform(ks[5], (out_ch,), jnp.float32, -s2, s2)
    g2 = 1.0 + 0.1 * jax.random.normal(ks[6], (out_ch,), jnp.float32)
    be2 = 0.1 * jax.random.normal(ks[7], (out_ch,), jnp.float32)
    return (w1, b1, g1, be1, w2, b2, g2, be2)


if __name__ == "__main__":
    key = jax.random.PRNGKey(0)
    k_x, k_p = jax.random.split(key)

    N, IN_CH, OUT_CH, H, W = 2, 4, 8, 16, 16
    x = jax.random.normal(k_x, (N, IN_CH, H, W), jnp.float32)
    params = init_params(k_p, IN_CH, OUT_CH)

    out = jax.block_until_ready(jax.jit(double_conv)(x, params))
    ref = jax.block_until_ready(reference_double_conv(x, params))

    assert out.shape == (N, OUT_CH, H, W), out.shape
    assert jnp.allclose(out, ref, rtol=1e-3, atol=2e-3), float(
        jnp.max(jnp.abs(out - ref)))

    print("KERNEL_OK")
</pallas_src>

<mosaic_0001>
module attributes {stable_mosaic.version = 11 : i64} {
  func.func @kernel(%arg0: i32, %arg1: i32, %arg2: memref<1x18x18x128xf32, #tpu.memory_space<vmem>>, %arg3: memref<1152x128xf32, #tpu.memory_space<vmem>>, %arg4: memref<1x16x16x128xf32, #tpu.memory_space<vmem>>, %arg5: memref<1x2x128xf32, #tpu.memory_space<vmem>>) attributes {dimension_semantics = [#tpu.dimension_semantics<parallel>, #tpu.dimension_semantics<parallel>], iteration_bounds = array<i64: 2, 1>, scalar_prefetch = 0 : i64, scratch_operands = 0 : i64, tpu.core_type = #tpu.core_type<tc>, window_params = [{transform_indices = @transform_0, window_bounds = array<i64: 1, 18, 18, 128>}, {pipeline_mode = #tpu.pipeline_mode<synchronous>, transform_indices = @transform_1, window_bounds = array<i64: 1152, 128>}, {transform_indices = @transform_2, window_bounds = array<i64: 1, 16, 16, 128>}, {transform_indices = @transform_3, window_bounds = array<i64: 1, 2, 128>}]} {
    %c0 = arith.constant 0 : index
    %c0_0 = arith.constant 0 : index
    %c0_1 = arith.constant 0 : index
    %c0_2 = arith.constant 0 : index
    %0 = vector.load %arg2[%c0, %c0_0, %c0_1, %c0_2] : memref<1x18x18x128xf32, #tpu.memory_space<vmem>>, vector<1x18x18x128xf32>
    %1 = vector.shape_cast %0 : vector<1x18x18x128xf32> to vector<18x18x128xf32>
    %2 = vector.extract_strided_slice %1 {offsets = [0, 0, 0], sizes = [16, 16, 128], strides = [1, 1, 1]} : vector<18x18x128xf32> to vector<16x16x128xf32>
    %3 = vector.extract_strided_slice %1 {offsets = [0, 1, 0], sizes = [16, 16, 128], strides = [1, 1, 1]} : vector<18x18x128xf32> to vector<16x16x128xf32>
    %4 = vector.extract_strided_slice %1 {offsets = [0, 2, 0], sizes = [16, 16, 128], strides = [1, 1, 1]} : vector<18x18x128xf32> to vector<16x16x128xf32>
    %5 = vector.extract_strided_slice %1 {offsets = [1, 0, 0], sizes = [16, 16, 128], strides = [1, 1, 1]} : vector<18x18x128xf32> to vector<16x16x128xf32>
    %6 = vector.extract_strided_slice %1 {offsets = [1, 1, 0], sizes = [16, 16, 128], strides = [1, 1, 1]} : vector<18x18x128xf32> to vector<16x16x128xf32>
    %7 = vector.extract_strided_slice %1 {offsets = [1, 2, 0], sizes = [16, 16, 128], strides = [1, 1, 1]} : vector<18x18x128xf32> to vector<16x16x128xf32>
    %8 = vector.extract_strided_slice %1 {offsets = [2, 0, 0], sizes = [16, 16, 128], strides = [1, 1, 1]} : vector<18x18x128xf32> to vector<16x16x128xf32>
    %9 = vector.extract_strided_slice %1 {offsets = [2, 1, 0], sizes = [16, 16, 128], strides = [1, 1, 1]} : vector<18x18x128xf32> to vector<16x16x128xf32>
    %10 = vector.extract_strided_slice %1 {offsets = [2, 2, 0], sizes = [16, 16, 128], strides = [1, 1, 1]} : vector<18x18x128xf32> to vector<16x16x128xf32>
    %11 = tpu.concatenate %2, %3, %4, %5, %6, %7, %8, %9, %10 in 2 : vector<16x16x128xf32>, vector<16x16x128xf32>, vector<16x16x128xf32>, vector<16x16x128xf32>, vector<16x16x128xf32>, vector<16x16x128xf32>, vector<16x16x128xf32>, vector<16x16x128xf32>, vector<16x16x128xf32> -> vector<16x16x1152xf32>
    %12 = vector.shape_cast %11 : vector<16x16x1152xf32> to vector<256x1152xf32>
    %c0_3 = arith.constant 0 : index
    %c0_4 = arith.constant 0 : index
    %13 = vector.load %arg3[%c0_3, %c0_4] : memref<1152x128xf32, #tpu.memory_space<vmem>>, vector<1152x128xf32>
    %cst = arith.constant dense<0.000000e+00> : vector<256x128xf32>
    %14 = tpu.matmul %12, %13, %cst {dimension_numbers = #tpu.dot_dimension_numbers<[1], [0], [0], [1], [0, 0, 1, 1], [], []>} : vector<256x1152xf32>, vector<1152x128xf32>, vector<256x128xf32> -> vector<256x128xf32>
    %15 = vector.shape_cast %14 : vector<256x128xf32> to vector<16x16x128xf32>
    %c0_5 = arith.constant 0 : index
    %c0_6 = arith.constant 0 : index
    %c0_7 = arith.constant 0 : index
    %c0_8 = arith.constant 0 : index
    %16 = vector.load %arg4[%c0_5, %c0_6, %c0_7, %c0_8] : memref<1x16x16x128xf32, #tpu.memory_space<vmem>>, vector<1x16x16x128xf32>
    %17 = vector.shape_cast %16 : vector<1x16x16x128xf32> to vector<16x16x128xf32>
    %18 = vector.shape_cast %15 : vector<16x16x128xf32> to vector<1x16x16x128xf32>
    tpu.vector_store %arg4[%c0_5, %c0_6, %c0_7, %c0_8], %18 {strides = array<i32>} : memref<1x16x16x128xf32, #tpu.memory_space<vmem>>, vector<1x16x16x128xf32>,
    %cst_9 = arith.constant dense<0.000000e+00> : vector<128xf32>
    %19 = vector.multi_reduction <add>, %14, %cst_9 [0] : vector<256x128xf32> to vector<128xf32>
    %20 = vector.shape_cast %19 : vector<128xf32> to vector<1x128xf32>
    %cst_10 = arith.constant 3.906250e-03 : f32
    %21 = vector.broadcast %cst_10 : f32 to vector<1x128xf32>
    %22 = arith.mulf %20, %21 : vector<1x128xf32>
    %23 = vector.broadcast %22 : vector<1x128xf32> to vector<256x128xf32>
    %24 = arith.subf %14, %23 : vector<256x128xf32>
    %25 = arith.mulf %24, %24 : vector<256x128xf32>
    %cst_11 = arith.constant dense<0.000000e+00> : vector<128xf32>
    %26 = vector.multi_reduction <add>, %25, %cst_11 [0] : vector<256x128xf32> to vector<128xf32>
    %27 = vector.shape_cast %26 : vector<128xf32> to vector<1x128xf32>
    %28 = tpu.concatenate %20, %27 in 0 : vector<1x128xf32>, vector<1x128xf32> -> vector<2x128xf32>
    %c0_12 = arith.constant 0 : index
    %c0_13 = arith.constant 0 : index
    %c0_14 = arith.constant 0 : index
    %29 = vector.load %arg5[%c0_12, %c0_13, %c0_14] : memref<1x2x128xf32, #tpu.memory_space<vmem>>, vector<1x2x128xf32>
    %30 = vector.shape_cast %29 : vector<1x2x128xf32> to vector<2x128xf32>
    %31 = vector.shape_cast %28 : vector<2x128xf32> to vector<1x2x128xf32>
    tpu.vector_store %arg5[%c0_12, %c0_13, %c0_14], %31 {strides = array<i32>} : memref<1x2x128xf32, #tpu.memory_space<vmem>>, vector<1x2x128xf32>,
    return
  }
  func.func @transform_0(%arg0: i32, %arg1: i32) -> (i32, i32, i32, i32) {
    %c1_i32 = arith.constant 1 : i32
    %0 = arith.muli %arg0, %c1_i32 : i32
    %1 = arith.addi %0, %arg1 : i32
    %c0_i32 = arith.constant 0 : i32
    %c0_i32_0 = arith.constant 0 : i32
    %c0_i32_1 = arith.constant 0 : i32
    %c0_i32_2 = arith.constant 0 : i32
    return %1, %c0_i32, %c0_i32_0, %c0_i32_1 : i32, i32, i32, i32
  }
  func.func @transform_1(%arg0: i32, %arg1: i32) -> (i32, i32) {
    %c0_i32 = arith.constant 0 : i32
    %c0_i32_0 = arith.constant 0 : i32
    %c0_i32_1 = arith.constant 0 : i32
    return %c0_i32, %c0_i32_0 : i32, i32
  }
  func.func @transform_2(%arg0: i32, %arg1: i32) -> (i32, i32, i32, i32) {
    %c0_i32 = arith.constant 0 : i32
    %c0_i32_0 = arith.constant 0 : i32
    %c0_i32_1 = arith.constant 0 : i32
    return %arg0, %arg1, %c0_i32, %c0_i32_0 : i32, i32, i32, i32
  }
  func.func @transform_3(%arg0: i32, %arg1: i32) -> (i32, i32, i32) {
    %c1_i32 = arith.constant 1 : i32
    %0 = arith.muli %arg0, %c1_i32 : i32
    %1 = arith.addi %0, %arg1 : i32
    %c0_i32 = arith.constant 0 : i32
    %c0_i32_0 = arith.constant 0 : i32
    %c0_i32_1 = arith.constant 0 : i32
    return %1, %c0_i32, %c0_i32_0 : i32, i32, i32
  }
}

module attributes {stable_mosaic.version = 11 : i64} {
  func.func @kernel(%arg0: i32, %arg1: i32, %arg2: memref<1x18x18x128xf32, #tpu.memory_space<vmem>>, %arg3: memref<1152x128xf32, #tpu.memory_space<vmem>>, %arg4: memref<1x128xf32, #tpu.memory_space<vmem>>, %arg5: memref<1x128xf32, #tpu.memory_space<vmem>>, %arg6: memref<1x16x16x128xf32, #tpu.memory_space<vmem>>, %arg7: memref<1x2x128xf32, #tpu.memory_space<vmem>>) attributes {dimension_semantics = [#tpu.dimension_semantics<parallel>, #tpu.dimension_semantics<parallel>], iteration_bounds = array<i64: 2, 1>, scalar_prefetch = 0 : i64, scratch_operands = 0 : i64, tpu.core_type = #tpu.core_type<tc>, window_params = [{transform_indices = @transform_0, window_bounds = array<i64: 1, 18, 18, 128>}, {pipeline_mode = #tpu.pipeline_mode<synchronous>, transform_indices = @transform_1, window_bounds = array<i64: 1152, 128>}, {pipeline_mode = #tpu.pipeline_mode<synchronous>, transform_indices = @transform_2, window_bounds = array<i64: 1, 128>}, {pipeline_mode = #tpu.pipeline_mode<synchronous>, transform_indices = @transform_3, window_bounds = array<i64: 1, 128>}, {transform_indices = @transform_4, window_bounds = array<i64: 1, 16, 16, 128>}, {transform_indices = @transform_5, window_bounds = array<i64: 1, 2, 128>}]} {
    %c0 = arith.constant 0 : index
    %c0_0 = arith.constant 0 : index
    %c0_1 = arith.constant 0 : index
    %c0_2 = arith.constant 0 : index
    %0 = vector.load %arg2[%c0, %c0_0, %c0_1, %c0_2] : memref<1x18x18x128xf32, #tpu.memory_space<vmem>>, vector<1x18x18x128xf32>
    %1 = vector.shape_cast %0 : vector<1x18x18x128xf32> to vector<18x18x128xf32>
    %c16_i32 = arith.constant 16 : i32
    %2 = arith.muli %arg1, %c16_i32 : i32
    %3 = tpu.iota {dimensions = array<i32: 0>} : vector<18x18x128xi32>
    %4 = vector.broadcast %2 : i32 to vector<18x18x128xi32>
    %5 = arith.addi %3, %4 : vector<18x18x128xi32>
    %6 = tpu.iota {dimensions = array<i32: 1>} : vector<18x18x128xi32>
    %c1_i32 = arith.constant 1 : i32
    %7 = vector.broadcast %c1_i32 : i32 to vector<18x18x128xi32>
    %8 = arith.cmpi sge, %5, %7 : vector<18x18x128xi32>
    %c16_i32_3 = arith.constant 16 : i32
    %9 = vector.broadcast %c16_i32_3 : i32 to vector<18x18x128xi32>
    %10 = arith.cmpi sle, %5, %9 : vector<18x18x128xi32>
    %11 = arith.andi %8, %10 : vector<18x18x128xi1>
    %c1_i32_4 = arith.constant 1 : i32
    %12 = vector.broadcast %c1_i32_4 : i32 to vector<18x18x128xi32>
    %13 = arith.cmpi sge, %6, %12 : vector<18x18x128xi32>
    %14 = arith.andi %11, %13 : vector<18x18x128xi1>
    %c16_i32_5 = arith.constant 16 : i32
    %15 = vector.broadcast %c16_i32_5 : i32 to vector<18x18x128xi32>
    %16 = arith.cmpi sle, %6, %15 : vector<18x18x128xi32>
    %17 = arith.andi %14, %16 : vector<18x18x128xi1>
    %c0_6 = arith.constant 0 : index
    %c0_7 = arith.constant 0 : index
    %18 = vector.load %arg4[%c0_6, %c0_7] : memref<1x128xf32, #tpu.memory_space<vmem>>, vector<1x128xf32>
    %19 = vector.shape_cast %18 : vector<1x128xf32> to vector<1x1x128xf32>
    %20 = vector.broadcast %19 : vector<1x1x128xf32> to vector<18x18x128xf32>
    %21 = arith.mulf %1, %20 : vector<18x18x128xf32>
    %c0_8 = arith.constant 0 : index
    %c0_9 = arith.constant 0 : index
    %22 = vector.load %arg5[%c0_8, %c0_9] : memref<1x128xf32, #tpu.memory_space<vmem>>, vector<1x128xf32>
    %23 = vector.shape_cast %22 : vector<1x128xf32> to vector<1x1x128xf32>
    %24 = vector.broadcast %23 : vector<1x1x128xf32> to vector<18x18x128xf32>
    %25 = arith.addf %21, %24 : vector<18x18x128xf32>
    %cst = arith.constant 0.000000e+00 : f32
    %26 = vector.broadcast %cst : f32 to vector<18x18x128xf32>
    %27 = arith.maximumf %25, %26 : vector<18x18x128xf32>
    %cst_10 = arith.constant 0.000000e+00 : f32
    %28 = vector.broadcast %cst_10 : f32 to vector<18x18x128xf32>
    %29 = arith.select %17, %27, %28 : vector<18x18x128xi1>, vector<18x18x128xf32>
    %30 = vector.extract_strided_slice %29 {offsets = [0, 0, 0], sizes = [16, 16, 128], strides = [1, 1, 1]} : vector<18x18x128xf32> to vector<16x16x128xf32>
    %31 = vector.extract_strided_slice %29 {offsets = [0, 1, 0], sizes = [16, 16, 128], strides = [1, 1, 1]} : vector<18x18x128xf32> to vector<16x16x128xf32>
    %32 = vector.extract_strided_slice %29 {offsets = [0, 2, 0], sizes = [16, 16, 128], strides = [1, 1, 1]} : vector<18x18x128xf32> to vector<16x16x128xf32>
    %33 = vector.extract_strided_slice %29 {offsets = [1, 0, 0], sizes = [16, 16, 128], strides = [1, 1, 1]} : vector<18x18x128xf32> to vector<16x16x128xf32>
    %34 = vector.extract_strided_slice %29 {offsets = [1, 1, 0], sizes = [16, 16, 128], strides = [1, 1, 1]} : vector<18x18x128xf32> to vector<16x16x128xf32>
    %35 = vector.extract_strided_slice %29 {offsets = [1, 2, 0], sizes = [16, 16, 128], strides = [1, 1, 1]} : vector<18x18x128xf32> to vector<16x16x128xf32>
    %36 = vector.extract_strided_slice %29 {offsets = [2, 0, 0], sizes = [16, 16, 128], strides = [1, 1, 1]} : vector<18x18x128xf32> to vector<16x16x128xf32>
    %37 = vector.extract_strided_slice %29 {offsets = [2, 1, 0], sizes = [16, 16, 128], strides = [1, 1, 1]} : vector<18x18x128xf32> to vector<16x16x128xf32>
    %38 = vector.extract_strided_slice %29 {offsets = [2, 2, 0], sizes = [16, 16, 128], strides = [1, 1, 1]} : vector<18x18x128xf32> to vector<16x16x128xf32>
    %39 = tpu.concatenate %30, %31, %32, %33, %34, %35, %36, %37, %38 in 2 : vector<16x16x128xf32>, vector<16x16x128xf32>, vector<16x16x128xf32>, vector<16x16x128xf32>, vector<16x16x128xf32>, vector<16x16x128xf32>, vector<16x16x128xf32>, vector<16x16x128xf32>, vector<16x16x128xf32> -> vector<16x16x1152xf32>
    %40 = vector.shape_cast %39 : vector<16x16x1152xf32> to vector<256x1152xf32>
    %c0_11 = arith.constant 0 : index
    %c0_12 = arith.constant 0 : index
    %41 = vector.load %arg3[%c0_11, %c0_12] : memref<1152x128xf32, #tpu.memory_space<vmem>>, vector<1152x128xf32>
    %cst_13 = arith.constant dense<0.000000e+00> : vector<256x128xf32>
    %42 = tpu.matmul %40, %41, %cst_13 {dimension_numbers = #tpu.dot_dimension_numbers<[1], [0], [0], [1], [0, 0, 1, 1], [], []>} : vector<256x1152xf32>, vector<1152x128xf32>, vector<256x128xf32> -> vector<256x128xf32>
    %43 = vector.shape_cast %42 : vector<256x128xf32> to vector<16x16x128xf32>
    %c0_14 = arith.constant 0 : index
    %c0_15 = arith.constant 0 : index
    %c0_16 = arith.constant 0 : index
    %c0_17 = arith.constant 0 : index
    %44 = vector.load %arg6[%c0_14, %c0_15, %c0_16, %c0_17] : memref<1x16x16x128xf32, #tpu.memory_space<vmem>>, vector<1x16x16x128xf32>
    %45 = vector.shape_cast %44 : vector<1x16x16x128xf32> to vector<16x16x128xf32>
    %46 = vector.shape_cast %43 : vector<16x16x128xf32> to vector<1x16x16x128xf32>
    tpu.vector_store %arg6[%c0_14, %c0_15, %c0_16, %c0_17], %46 {strides = array<i32>} : memref<1x16x16x128xf32, #tpu.memory_space<vmem>>, vector<1x16x16x128xf32>,
    %cst_18 = arith.constant dense<0.000000e+00> : vector<128xf32>
    %47 = vector.multi_reduction <add>, %42, %cst_18 [0] : vector<256x128xf32> to vector<128xf32>
    %48 = vector.shape_cast %47 : vector<128xf32> to vector<1x128xf32>
    %cst_19 = arith.constant 3.906250e-03 : f32
    %49 = vector.broadcast %cst_19 : f32 to vector<1x128xf32>
    %50 = arith.mulf %48, %49 : vector<1x128xf32>
    %51 = vector.broadcast %50 : vector<1x128xf32> to vector<256x128xf32>
    %52 = arith.subf %42, %51 : vector<256x128xf32>
    %53 = arith.mulf %52, %52 : vector<256x128xf32>
    %cst_20 = arith.constant dense<0.000000e+00> : vector<128xf32>
    %54 = vector.multi_reduction <add>, %53, %cst_20 [0] : vector<256x128xf32> to vector<128xf32>
    %55 = vector.shape_cast %54 : vector<128xf32> to vector<1x128xf32>
    %56 = tpu.concatenate %48, %55 in 0 : vector<1x128xf32>, vector<1x128xf32> -> vector<2x128xf32>
    %c0_21 = arith.constant 0 : index
    %c0_22 = arith.constant 0 : index
    %c0_23 = arith.constant 0 : index
    %57 = vector.load %arg7[%c0_21, %c0_22, %c0_23] : memref<1x2x128xf32, #tpu.memory_space<vmem>>, vector<1x2x128xf32>
    %58 = vector.shape_cast %57 : vector<1x2x128xf32> to vector<2x128xf32>
    %59 = vector.shape_cast %56 : vector<2x128xf32> to vector<1x2x128xf32>
    tpu.vector_store %arg7[%c0_21, %c0_22, %c0_23], %59 {strides = array<i32>} : memref<1x2x128xf32, #tpu.memory_space<vmem>>, vector<1x2x128xf32>,
    return
  }
  func.func @transform_0(%arg0: i32, %arg1: i32) -> (i32, i32, i32, i32) {
    %c1_i32 = arith.constant 1 : i32
    %0 = arith.muli %arg0, %c1_i32 : i32
    %1 = arith.addi %0, %arg1 : i32
    %c0_i32 = arith.constant 0 : i32
    %c0_i32_0 = arith.constant 0 : i32
    %c0_i32_1 = arith.constant 0 : i32
    %c0_i32_2 = arith.constant 0 : i32
    return %1, %c0_i32, %c0_i32_0, %c0_i32_1 : i32, i32, i32, i32
  }
  func.func @transform_1(%arg0: i32, %arg1: i32) -> (i32, i32) {
    %c0_i32 = arith.constant 0 : i32
    %c0_i32_0 = arith.constant 0 : i32
    %c0_i32_1 = arith.constant 0 : i32
    return %c0_i32, %c0_i32_0 : i32, i32
  }
  func.func @transform_2(%arg0: i32, %arg1: i32) -> (i32, i32) {
    %c0_i32 = arith.constant 0 : i32
    %c0_i32_0 = arith.constant 0 : i32
    %c0_i32_1 = arith.constant 0 : i32
    return %c0_i32, %c0_i32_0 : i32, i32
  }
  func.func @transform_3(%arg0: i32, %arg1: i32) -> (i32, i32) {
    %c0_i32 = arith.constant 0 : i32
    %c0_i32_0 = arith.constant 0 : i32
    %c0_i32_1 = arith.constant 0 : i32
    return %c0_i32, %c0_i32_0 : i32, i32
  }
  func.func @transform_4(%arg0: i32, %arg1: i32) -> (i32, i32, i32, i32) {
    %c0_i32 = arith.constant 0 : i32
    %c0_i32_0 = arith.constant 0 : i32
    %c0_i32_1 = arith.constant 0 : i32
    return %arg0, %arg1, %c0_i32, %c0_i32_0 : i32, i32, i32, i32
  }
  func.func @transform_5(%arg0: i32, %arg1: i32) -> (i32, i32, i32) {
    %c1_i32 = arith.constant 1 : i32
    %0 = arith.muli %arg0, %c1_i32 : i32
    %1 = arith.addi %0, %arg1 : i32
    %c0_i32 = arith.constant 0 : i32
    %c0_i32_0 = arith.constant 0 : i32
    %c0_i32_1 = arith.constant 0 : i32
    return %1, %c0_i32, %c0_i32_0 : i32, i32, i32
  }
}

module attributes {stable_mosaic.version = 11 : i64} {
  func.func @bn_relu_kernel(%arg0: i32, %arg1: memref<512x128xf32, #tpu.memory_space<vmem>>, %arg2: memref<1x128xf32, #tpu.memory_space<vmem>>, %arg3: memref<1x128xf32, #tpu.memory_space<vmem>>, %arg4: memref<512x128xf32, #tpu.memory_space<vmem>>) attributes {dimension_semantics = [#tpu.dimension_semantics<parallel>], iteration_bounds = array<i64: 1>, scalar_prefetch = 0 : i64, scratch_operands = 0 : i64, tpu.core_type = #tpu.core_type<tc>, window_params = [{transform_indices = @transform_0, window_bounds = array<i64: 512, 128>}, {pipeline_mode = #tpu.pipeline_mode<synchronous>, transform_indices = @transform_1, window_bounds = array<i64: 1, 128>}, {pipeline_mode = #tpu.pipeline_mode<synchronous>, transform_indices = @transform_2, window_bounds = array<i64: 1, 128>}, {transform_indices = @transform_3, window_bounds = array<i64: 512, 128>}]} {
    %c0 = arith.constant 0 : index
    %c0_0 = arith.constant 0 : index
    %0 = vector.load %arg1[%c0, %c0_0] : memref<512x128xf32, #tpu.memory_space<vmem>>, vector<512x128xf32>
    %c0_1 = arith.constant 0 : index
    %c0_2 = arith.constant 0 : index
    %1 = vector.load %arg2[%c0_1, %c0_2] : memref<1x128xf32, #tpu.memory_space<vmem>>, vector<1x128xf32>
    %2 = vector.broadcast %1 : vector<1x128xf32> to vector<512x128xf32>
    %3 = arith.mulf %0, %2 : vector<512x128xf32>
    %c0_3 = arith.constant 0 : index
    %c0_4 = arith.constant 0 : index
    %4 = vector.load %arg3[%c0_3, %c0_4] : memref<1x128xf32, #tpu.memory_space<vmem>>, vector<1x128xf32>
    %5 = vector.broadcast %4 : vector<1x128xf32> to vector<512x128xf32>
    %6 = arith.addf %3, %5 : vector<512x128xf32>
    %cst = arith.constant 0.000000e+00 : f32
    %7 = vector.broadcast %cst : f32 to vector<512x128xf32>
    %8 = arith.maximumf %6, %7 : vector<512x128xf32>
    %c0_5 = arith.constant 0 : index
    %c0_6 = arith.constant 0 : index
    %9 = vector.load %arg4[%c0_5, %c0_6] : memref<512x128xf32, #tpu.memory_space<vmem>>, vector<512x128xf32>
    tpu.vector_store %arg4[%c0_5, %c0_6], %8 {strides = array<i32>} : memref<512x128xf32, #tpu.memory_space<vmem>>, vector<512x128xf32>,
    return
  }
  func.func @transform_0(%arg0: i32) -> (i32, i32) {
    %c0_i32 = arith.constant 0 : i32
    %c0_i32_0 = arith.constant 0 : i32
    return %arg0, %c0_i32 : i32, i32
  }
  func.func @transform_1(%arg0: i32) -> (i32, i32) {
    %c0_i32 = arith.constant 0 : i32
    %c0_i32_0 = arith.constant 0 : i32
    %c0_i32_1 = arith.constant 0 : i32
    return %c0_i32, %c0_i32_0 : i32, i32
  }
  func.func @transform_2(%arg0: i32) -> (i32, i32) {
    %c0_i32 = arith.constant 0 : i32
    %c0_i32_0 = arith.constant 0 : i32
    %c0_i32_1 = arith.constant 0 : i32
    return %c0_i32, %c0_i32_0 : i32, i32
  }
  func.func @transform_3(%arg0: i32) -> (i32, i32) {
    %c0_i32 = arith.constant 0 : i32
    %c0_i32_0 = arith.constant 0 : i32
    return %arg0, %c0_i32 : i32, i32
  }
}

</mosaic_0001>

<llo_original>
// kernel: double_conv.5
$region0: #{double_conv.5}
  #allocation0 [shape = 'u32[]', space=smem, size = 0x4, offset = 0x4, fixed_abs, tag = 'smem constant byte address 0x4 - core index']
  #allocation1 [shape = 'u32[144,128]{1,0:T(1,128)}', space=vmem, size = 0x12000, scoped, tag = 'internal scratch']
  %s0 = inlined_call_operand.vmem [shape: f32[512,128], index: 0, kind: input, shape index: {}]
  %s1 = inlined_call_operand.vmem [shape: f32[1,128], index: 1, kind: input, shape index: {}]
  %s2 = inlined_call_operand.vmem [shape: f32[1,128], index: 2, kind: input, shape index: {}]
  %s3 = inlined_call_operand.vmem [shape: f32[512,128], index: 3, kind: output, shape index: {}]
  %s4 = sld [smem:[#allocation0]]
  $region22: #{double_conv.5} parent=0
    _
  %s6 = ssub.s32 1, %s4
  %s7 = scalar_select 0, %s6, %s4
  // Predicated region
  $region2: #{double_conv.5} parent=0 // pred_check
    _
  $region3: #{double_conv.5} parent=0 // pred_check_branch
    %9 = sbr.rel (0) target = $region5
  $region4: #{double_conv.5} parent=0 // pred_region
    _
  $region5: #{double_conv.5} parent=0 // pred_fallthru
    _
  // Predicated region
  $region6: #{double_conv.5} parent=0 // pred_check
    _
  $region7: #{double_conv.5} parent=0 // pred_check_branch
    %11 = sbr.rel (0) target = $region9
  $region8: #{double_conv.5} parent=0 // pred_region
    _
  $region9: #{double_conv.5} parent=0 // pred_fallthru
    _
  // Predicated region
  $region10: #{double_conv.5} parent=0 // pred_check
    _
  $region11: #{double_conv.5} parent=0 // pred_check_branch
    %13 = sbr.rel (0) target = $region13
  $region12: #{double_conv.5} parent=0 // pred_region
    _
  $region13: #{double_conv.5} parent=0 // pred_fallthru
    _
  %v14 = vld [vmem:[%s0] sm:$0xff]
  %v15 = vld [vmem:[%s0 + $0x8] sm:$0xff]
  %v16 = vld [vmem:[%s0 + $0x10] sm:$0xff]
  %v17 = vld [vmem:[%s0 + $0x18] sm:$0xff]
  %v18 = vld [vmem:[%s0 + $0x20] sm:$0xff]
  %v19 = vld [vmem:[%s0 + $0x28] sm:$0xff]
  %v20 = vld [vmem:[%s0 + $0x30] sm:$0xff]
  %v21 = vld [vmem:[%s0 + $0x38] sm:$0xff]
  %v22 = vld [vmem:[%s0 + $0x40] sm:$0xff]
  %v23 = vld [vmem:[%s0 + $0x48] sm:$0xff]
  %v24 = vld [vmem:[%s0 + $0x50] sm:$0xff]
  %v25 = vld [vmem:[%s0 + $0x58] sm:$0xff]
  %v26 = vld [vmem:[%s0 + $0x60] sm:$0xff]
  %v27 = vld [vmem:[%s0 + $0x68] sm:$0xff]
  %v28 = vld [vmem:[%s0 + $0x70] sm:$0xff]
  %v29 = vld [vmem:[%s0 + $0x78] sm:$0xff]
  %v30 = vld [vmem:[%s0 + $0x80] sm:$0xff]
  %v31 = vld [vmem:[%s0 + $0x88] sm:$0xff]
  %v32 = vld [vmem:[%s0 + $0x90] sm:$0xff]
  %v33 = vld [vmem:[%s0 + $0x98] sm:$0xff]
  %v34 = vld [vmem:[%s0 + $0xa0] sm:$0xff]
  %v35 = vld [vmem:[%s0 + $0xa8] sm:$0xff]
  %v36 = vld [vmem:[%s0 + $0xb0] sm:$0xff]
  %v37 = vld [vmem:[%s0 + $0xb8] sm:$0xff]
  %v38 = vld [vmem:[%s0 + $0xc0] sm:$0xff]
  %v39 = vld [vmem:[%s0 + $0xc8] sm:$0xff]
  %v40 = vld [vmem:[%s0 + $0xd0] sm:$0xff]
  %v41 = vld [vmem:[%s0 + $0xd8] sm:$0xff]
  %v42 = vld [vmem:[%s0 + $0xe0] sm:$0xff]
  %v43 = vld [vmem:[%s0 + $0xe8] sm:$0xff]
  %v44 = vld [vmem:[%s0 + $0xf0] sm:$0xff]
  %v45 = vld [vmem:[%s0 + $0xf8] sm:$0xff]
  %v46 = vld [vmem:[%s0 + $0x100] sm:$0xff]
  %v47 = vld [vmem:[%s0 + $0x108] sm:$0xff]
  %v48 = vld [vmem:[%s0 + $0x110] sm:$0xff]
  %v49 = vld [vmem:[%s0 + $0x118] sm:$0xff]
  %v50 = vld [vmem:[%s0 + $0x120] sm:$0xff]
  %v51 = vld [vmem:[%s0 + $0x128] sm:$0xff]
  %v52 = vld [vmem:[%s0 + $0x130] sm:$0xff]
  %v53 = vld [vmem:[%s0 + $0x138] sm:$0xff]
  %v54 = vld [vmem:[%s0 + $0x140] sm:$0xff]
  %v55 = vld [vmem:[%s0 + $0x148] sm:$0xff]
  %v56 = vld [vmem:[%s0 + $0x150] sm:$0xff]
  %v57 = vld [vmem:[%s0 + $0x158] sm:$0xff]
  %v58 = vld [vmem:[%s0 + $0x160] sm:$0xff]
  %v59 = vld [vmem:[%s0 + $0x168] sm:$0xff]
  %v60 = vld [vmem:[%s0 + $0x170] sm:$0xff]
  %v61 = vld [vmem:[%s0 + $0x178] sm:$0xff]
  %v62 = vld [vmem:[%s0 + $0x180] sm:$0xff]
  %v63 = vld [vmem:[%s0 + $0x188] sm:$0xff]
  %v64 = vld [vmem:[%s0 + $0x190] sm:$0xff]
  %v65 = vld [vmem:[%s0 + $0x198] sm:$0xff]
  %v66 = vld [vmem:[%s0 + $0x1a0] sm:$0xff]
  %v67 = vld [vmem:[%s0 + $0x1a8] sm:$0xff]
  %v68 = vld [vmem:[%s0 + $0x1b0] sm:$0xff]
  %v69 = vld [vmem:[%s0 + $0x1b8] sm:$0xff]
  %v70 = vld [vmem:[%s0 + $0x1c0] sm:$0xff]
  %v71 = vld [vmem:[%s0 + $0x1c8] sm:$0xff]
  %v72 = vld [vmem:[%s0 + $0x1d0] sm:$0xff]
  %v73 = vld [vmem:[%s0 + $0x1d8] sm:$0xff]
  %v74 = vld [vmem:[%s0 + $0x1e0] sm:$0xff]
  %v75 = vld [vmem:[%s0 + $0x1e8] sm:$0xff]
  %v76 = vld [vmem:[%s0 + $0x1f0] sm:$0xff]
  %v77 = vld [vmem:[%s0 + $0x1f8] sm:$0xff]
  %v78 = vld [vmem:[%s1] sm:$0x1]
  %v80 = vlaneseq
  %v81 = vshrl.u32 %v80, 7
  %v82 = vsub.s32 0, %v81
  %v83 = vrot.slane %v78, %v82
  %v85 = vmul.f32 %v14, %v83
  %v86 = vmul.f32 %v15, %v83
  %v87 = vmul.f32 %v16, %v83
  %v88 = vmul.f32 %v17, %v83
  %v89 = vmul.f32 %v18, %v83
  %v90 = vmul.f32 %v19, %v83
  %v91 = vmul.f32 %v20, %v83
  %v92 = vmul.f32 %v21, %v83
  %v93 = vmul.f32 %v22, %v83
  %v94 = vmul.f32 %v23, %v83
  %v95 = vmul.f32 %v24, %v83
  %v96 = vmul.f32 %v25, %v83
  %v97 = vmul.f32 %v26, %v83
  %v98 = vmul.f32 %v27, %v83
  %v99 = vmul.f32 %v28, %v83
  %v100 = vmul.f32 %v29, %v83
  %v101 = vmul.f32 %v30, %v83
  %v102 = vmul.f32 %v31, %v83
  %v103 = vmul.f32 %v32, %v83
  %v104 = vmul.f32 %v33, %v83
  %v105 = vmul.f32 %v34, %v83
  %v106 = vmul.f32 %v35, %v83
  %v107 = vmul.f32 %v36, %v83
  %v108 = vmul.f32 %v37, %v83
  %v109 = vmul.f32 %v38, %v83
  %v110 = vmul.f32 %v39, %v83
  %v111 = vmul.f32 %v40, %v83
  %v112 = vmul.f32 %v41, %v83
  %v113 = vmul.f32 %v42, %v83
  %v114 = vmul.f32 %v43, %v83
  %v115 = vmul.f32 %v44, %v83
  %v116 = vmul.f32 %v45, %v83
  %v117 = vmul.f32 %v46, %v83
  %v118 = vmul.f32 %v47, %v83
  %v119 = vmul.f32 %v48, %v83
  %v120 = vmul.f32 %v49, %v83
  %v121 = vmul.f32 %v50, %v83
  %v122 = vmul.f32 %v51, %v83
  %v123 = vmul.f32 %v52, %v83
  %v124 = vmul.f32 %v53, %v83
  %v125 = vmul.f32 %v54, %v83
  %v126 = vmul.f32 %v55, %v83
  %v127 = vmul.f32 %v56, %v83
  %v128 = vmul.f32 %v57, %v83
  %v129 = vmul.f32 %v58, %v83
  %v130 = vmul.f32 %v59, %v83
  %v131 = vmul.f32 %v60, %v83
  %v132 = vmul.f32 %v61, %v83
  %v133 = vmul.f32 %v62, %v83
  %v134 = vmul.f32 %v63, %v83
  %v135 = vmul.f32 %v64, %v83
  %v136 = vmul.f32 %v65, %v83
  %v137 = vmul.f32 %v66, %v83
  %v138 = vmul.f32 %v67, %v83
  %v139 = vmul.f32 %v68, %v83
  %v140 = vmul.f32 %v69, %v83
  %v141 = vmul.f32 %v70, %v83
  %v142 = vmul.f32 %v71, %v83
  %v143 = vmul.f32 %v72, %v83
  %v144 = vmul.f32 %v73, %v83
  %v145 = vmul.f32 %v74, %v83
  %v146 = vmul.f32 %v75, %v83
  %v147 = vmul.f32 %v76, %v83
  %v148 = vmul.f32 %v77, %v83
  %v149 = vld [vmem:[%s2] sm:$0x1]
  %v151 = vlaneseq
  %v152 = vshrl.u32 %v151, 7
  %v153 = vsub.s32 0, %v152
  %v154 = vrot.slane %v149, %v153
  %v156 = vadd.f32 %v85, %v154
  %v157 = vadd.f32 %v86, %v154
  %v158 = vadd.f32 %v87, %v154
  %v159 = vadd.f32 %v88, %v154
  %v160 = vadd.f32 %v89, %v154
  %v161 = vadd.f32 %v90, %v154
  %v162 = vadd.f32 %v91, %v154
  %v163 = vadd.f32 %v92, %v154
  %v164 = vadd.f32 %v93, %v154
  %v165 = vadd.f32 %v94, %v154
  %v166 = vadd.f32 %v95, %v154
  %v167 = vadd.f32 %v96, %v154
  %v168 = vadd.f32 %v97, %v154
  %v169 = vadd.f32 %v98, %v154
  %v170 = vadd.f32 %v99, %v154
  %v171 = vadd.f32 %v100, %v154
  %v172 = vadd.f32 %v101, %v154
  %v173 = vadd.f32 %v102, %v154
  %v174 = vadd.f32 %v103, %v154
  %v175 = vadd.f32 %v104, %v154
  %v176 = vadd.f32 %v105, %v154
  %v177 = vadd.f32 %v106, %v154
  %v178 = vadd.f32 %v107, %v154
  %v179 = vadd.f32 %v108, %v154
  %v180 = vadd.f32 %v109, %v154
  %v181 = vadd.f32 %v110, %v154
  %v182 = vadd.f32 %v111, %v154
  %v183 = vadd.f32 %v112, %v154
  %v184 = vadd.f32 %v113, %v154
  %v185 = vadd.f32 %v114, %v154
  %v186 = vadd.f32 %v115, %v154
  %v187 = vadd.f32 %v116, %v154
  %v188 = vadd.f32 %v117, %v154
  %v189 = vadd.f32 %v118, %v154
  %v190 = vadd.f32 %v119, %v154
  %v191 = vadd.f32 %v120, %v154
  %v192 = vadd.f32 %v121, %v154
  %v193 = vadd.f32 %v122, %v154
  %v194 = vadd.f32 %v123, %v154
  %v195 = vadd.f32 %v124, %v154
  %v196 = vadd.f32 %v125, %v154
  %v197 = vadd.f32 %v126, %v154
  %v198 = vadd.f32 %v127, %v154
  %v199 = vadd.f32 %v128, %v154
  %v200 = vadd.f32 %v129, %v154
  %v201 = vadd.f32 %v130, %v154
  %v202 = vadd.f32 %v131, %v154
  %v203 = vadd.f32 %v132, %v154
  %v204 = vadd.f32 %v133, %v154
  %v205 = vadd.f32 %v134, %v154
  %v206 = vadd.f32 %v135, %v154
  %v207 = vadd.f32 %v136, %v154
  %v208 = vadd.f32 %v137, %v154
  %v209 = vadd.f32 %v138, %v154
  %v210 = vadd.f32 %v139, %v154
  %v211 = vadd.f32 %v140, %v154
  %v212 = vadd.f32 %v141, %v154
  %v213 = vadd.f32 %v142, %v154
  %v214 = vadd.f32 %v143, %v154
  %v215 = vadd.f32 %v144, %v154
  %v216 = vadd.f32 %v145, %v154
  %v217 = vadd.f32 %v146, %v154
  %v218 = vadd.f32 %v147, %v154
  %v219 = vadd.f32 %v148, %v154
  %v220 = vmax.f32 %v156, 0.0
  %v221 = vmax.f32 %v157, 0.0
  %v222 = vmax.f32 %v158, 0.0
  %v223 = vmax.f32 %v159, 0.0
  %v224 = vmax.f32 %v160, 0.0
  %v225 = vmax.f32 %v161, 0.0
  %v226 = vmax.f32 %v162, 0.0
  %v227 = vmax.f32 %v163, 0.0
  %v228 = vmax.f32 %v164, 0.0
  %v229 = vmax.f32 %v165, 0.0
  %v230 = vmax.f32 %v166, 0.0
  %v231 = vmax.f32 %v167, 0.0
  %v232 = vmax.f32 %v168, 0.0
  %v233 = vmax.f32 %v169, 0.0
  %v234 = vmax.f32 %v170, 0.0
  %v235 = vmax.f32 %v171, 0.0
  %v236 = vmax.f32 %v172, 0.0
  %v237 = vmax.f32 %v173, 0.0
  %v238 = vmax.f32 %v174, 0.0
  %v239 = vmax.f32 %v175, 0.0
  %v240 = vmax.f32 %v176, 0.0
  %v241 = vmax.f32 %v177, 0.0
  %v242 = vmax.f32 %v178, 0.0
  %v243 = vmax.f32 %v179, 0.0
  %v244 = vmax.f32 %v180, 0.0
  %v245 = vmax.f32 %v181, 0.0
  %v246 = vmax.f32 %v182, 0.0
  %v247 = vmax.f32 %v183, 0.0
  %v248 = vmax.f32 %v184, 0.0
  %v249 = vmax.f32 %v185, 0.0
  %v250 = vmax.f32 %v186, 0.0
  %v251 = vmax.f32 %v187, 0.0
  %v252 = vmax.f32 %v188, 0.0
  %v253 = vmax.f32 %v189, 0.0
  %v254 = vmax.f32 %v190, 0.0
  %v255 = vmax.f32 %v191, 0.0
  %v256 = vmax.f32 %v192, 0.0
  %v257 = vmax.f32 %v193, 0.0
  %v258 = vmax.f32 %v194, 0.0
  %v259 = vmax.f32 %v195, 0.0
  %v260 = vmax.f32 %v196, 0.0
  %v261 = vmax.f32 %v197, 0.0
  %v262 = vmax.f32 %v198, 0.0
  %v263 = vmax.f32 %v199, 0.0
  %v264 = vmax.f32 %v200, 0.0
  %v265 = vmax.f32 %v201, 0.0
  %v266 = vmax.f32 %v202, 0.0
  %v267 = vmax.f32 %v203, 0.0
  %v268 = vmax.f32 %v204, 0.0
  %v269 = vmax.f32 %v205, 0.0
  %v270 = vmax.f32 %v206, 0.0
  %v271 = vmax.f32 %v207, 0.0
  %v272 = vmax.f32 %v208, 0.0
  %v273 = vmax.f32 %v209, 0.0
  %v274 = vmax.f32 %v210, 0.0
  %v275 = vmax.f32 %v211, 0.0
  %v276 = vmax.f32 %v212, 0.0
  %v277 = vmax.f32 %v213, 0.0
  %v278 = vmax.f32 %v214, 0.0
  %v279 = vmax.f32 %v215, 0.0
  %v280 = vmax.f32 %v216, 0.0
  %v281 = vmax.f32 %v217, 0.0
  %v282 = vmax.f32 %v218, 0.0
  %v283 = vmax.f32 %v219, 0.0
  %284 = vst [vmem:[%s3] sm:$0xff] %v220
  %285 = vst [vmem:[%s3 + $0x8] sm:$0xff] %v221
  %286 = vst [vmem:[%s3 + $0x10] sm:$0xff] %v222
  %287 = vst [vmem:[%s3 + $0x18] sm:$0xff] %v223
  %288 = vst [vmem:[%s3 + $0x20] sm:$0xff] %v224
  %289 = vst [vmem:[%s3 + $0x28] sm:$0xff] %v225
  %290 = vst [vmem:[%s3 + $0x30] sm:$0xff] %v226
  %291 = vst [vmem:[%s3 + $0x38] sm:$0xff] %v227
  %292 = vst [vmem:[%s3 + $0x40] sm:$0xff] %v228
  %293 = vst [vmem:[%s3 + $0x48] sm:$0xff] %v229
  %294 = vst [vmem:[%s3 + $0x50] sm:$0xff] %v230
  %295 = vst [vmem:[%s3 + $0x58] sm:$0xff] %v231
  %296 = vst [vmem:[%s3 + $0x60] sm:$0xff] %v232
  %297 = vst [vmem:[%s3 + $0x68] sm:$0xff] %v233
  %298 = vst [vmem:[%s3 + $0x70] sm:$0xff] %v234
  %299 = vst [vmem:[%s3 + $0x78] sm:$0xff] %v235
  %300 = vst [vmem:[%s3 + $0x80] sm:$0xff] %v236
  %301 = vst [vmem:[%s3 + $0x88] sm:$0xff] %v237
  %302 = vst [vmem:[%s3 + $0x90] sm:$0xff] %v238
  %303 = vst [vmem:[%s3 + $0x98] sm:$0xff] %v239
  %304 = vst [vmem:[%s3 + $0xa0] sm:$0xff] %v240
  %305 = vst [vmem:[%s3 + $0xa8] sm:$0xff] %v241
  %306 = vst [vmem:[%s3 + $0xb0] sm:$0xff] %v242
  %307 = vst [vmem:[%s3 + $0xb8] sm:$0xff] %v243
  %308 = vst [vmem:[%s3 + $0xc0] sm:$0xff] %v244
  %309 = vst [vmem:[%s3 + $0xc8] sm:$0xff] %v245
  %310 = vst [vmem:[%s3 + $0xd0] sm:$0xff] %v246
  %311 = vst [vmem:[%s3 + $0xd8] sm:$0xff] %v247
  %312 = vst [vmem:[%s3 + $0xe0] sm:$0xff] %v248
  %313 = vst [vmem:[%s3 + $0xe8] sm:$0xff] %v249
  %314 = vst [vmem:[%s3 + $0xf0] sm:$0xff] %v250
  %315 = vst [vmem:[%s3 + $0xf8] sm:$0xff] %v251
  %316 = vst [vmem:[%s3 + $0x100] sm:$0xff] %v252
  %317 = vst [vmem:[%s3 + $0x108] sm:$0xff] %v253
  %318 = vst [vmem:[%s3 + $0x110] sm:$0xff] %v254
  %319 = vst [vmem:[%s3 + $0x118] sm:$0xff] %v255
  %320 = vst [vmem:[%s3 + $0x120] sm:$0xff] %v256
  %321 = vst [vmem:[%s3 + $0x128] sm:$0xff] %v257
  %322 = vst [vmem:[%s3 + $0x130] sm:$0xff] %v258
  %323 = vst [vmem:[%s3 + $0x138] sm:$0xff] %v259
  %324 = vst [vmem:[%s3 + $0x140] sm:$0xff] %v260
  %325 = vst [vmem:[%s3 + $0x148] sm:$0xff] %v261
  %326 = vst [vmem:[%s3 + $0x150] sm:$0xff] %v262
  %327 = vst [vmem:[%s3 + $0x158] sm:$0xff] %v263
  %328 = vst [vmem:[%s3 + $0x160] sm:$0xff] %v264
  %329 = vst [vmem:[%s3 + $0x168] sm:$0xff] %v265
  %330 = vst [vmem:[%s3 + $0x170] sm:$0xff] %v266
  %331 = vst [vmem:[%s3 + $0x178] sm:$0xff] %v267
  %332 = vst [vmem:[%s3 + $0x180] sm:$0xff] %v268
  %333 = vst [vmem:[%s3 + $0x188] sm:$0xff] %v269
  %334 = vst [vmem:[%s3 + $0x190] sm:$0xff] %v270
  %335 = vst [vmem:[%s3 + $0x198] sm:$0xff] %v271
  %336 = vst [vmem:[%s3 + $0x1a0] sm:$0xff] %v272
  %337 = vst [vmem:[%s3 + $0x1a8] sm:$0xff] %v273
  %338 = vst [vmem:[%s3 + $0x1b0] sm:$0xff] %v274
  %339 = vst [vmem:[%s3 + $0x1b8] sm:$0xff] %v275
  %340 = vst [vmem:[%s3 + $0x1c0] sm:$0xff] %v276
  %341 = vst [vmem:[%s3 + $0x1c8] sm:$0xff] %v277
  %342 = vst [vmem:[%s3 + $0x1d0] sm:$0xff] %v278
  %343 = vst [vmem:[%s3 + $0x1d8] sm:$0xff] %v279
  %344 = vst [vmem:[%s3 + $0x1e0] sm:$0xff] %v280
  %345 = vst [vmem:[%s3 + $0x1e8] sm:$0xff] %v281
  %346 = vst [vmem:[%s3 + $0x1f0] sm:$0xff] %v282
  %347 = vst [vmem:[%s3 + $0x1f8] sm:$0xff] %v283
  // Predicated region
  $region14: #{double_conv.5} parent=0 // pred_check
    _
  $region15: #{double_conv.5} parent=0 // pred_check_branch
    %349 = sbr.rel (0) target = $region17
  $region16: #{double_conv.5} parent=0 // pred_region
    _
  $region17: #{double_conv.5} parent=0 // pred_fallthru
    _
  // Predicated region
  $region18: #{double_conv.5} parent=0 // pred_check
    _
  $region19: #{double_conv.5} parent=0 // pred_check_branch
    %351 = sbr.rel (0) target = $region21
  $region20: #{double_conv.5} parent=0 // pred_region
    _
  $region21: #{double_conv.5} parent=0 // pred_fallthru
    _

// kernel: double_conv.4
$region0: #{double_conv.4}
  #allocation0 [shape = 'u32[]', space=smem, size = 0x4, offset = 0x4, fixed_abs, tag = 'smem constant byte address 0x4 - core index']
  #allocation1 [shape = 'u32[144,128]{1,0:T(1,128)}', space=vmem, size = 0x12000, scoped, tag = 'internal scratch']
  %s0 = inlined_call_operand.vmem [shape: f32[2,18,18,128], index: 0, kind: input, shape index: {}]
  %s1 = inlined_call_operand.vmem [shape: f32[1152,128], index: 1, kind: input, shape index: {}]
  %s2 = inlined_call_operand.vmem [shape: f32[1,128], index: 2, kind: input, shape index: {}]
  %s3 = inlined_call_operand.vmem [shape: f32[1,128], index: 3, kind: input, shape index: {}]
  %s4 = inlined_call_operand.vmem [shape: f32[2,16,16,128], index: 4, kind: output, shape index: {0}]
  %s5 = inlined_call_operand.vmem [shape: f32[2,2,128], index: 5, kind: output, shape index: {1}]
  %6 = xla_tuple %s4, %s5
  %s7 = sld [smem:[#allocation0]]
  $region57: #{double_conv.4} parent=0
    _
  %s9 = ssub.s32 1, %s7
  %s10 = scalar_select 0, %s9, %s7
  loop: start=0, step=1, limit=4
  $region2: #{double_conv.4} parent=0 // loop_pre_header
    _
  $region3: #{double_conv.4} parent=0 // loop_header
    %s12 = sphi 0, %s16
    %p13 = scmp.ge.s32.totalorder %s12, 4
    %s19 = sphi 0, %s31
    %s20 = sphi 0, %s27
    %s21 = sphi 0, %s19
    %s22 = sphi 0, %s20
    %s23 = sphi 0, %s21
    %s24 = sphi 0, %s22
    %s36 = sphi 0, %s38
    %s39 = sphi 0, %s36
    %s40 = sphi 0, %s39
    %s56 = sphi 0, %s40
    %s60 = sphi 0, %s60
    %s62 = sphi 0, %s60
    %s63 = sphi 0, %s62
    %s77 = sphi 0, %s63
    %s81 = sphi 0, %s81
    %s83 = sphi 0, %s81
    %s84 = sphi 0, %s83
    %s98 = sphi 0, %s84
    %s102 = sphi 0, %s102
    %s104 = sphi 0, %s102
    %s105 = sphi 0, %s104
    %s119 = sphi 0, %s105
    %s127 = sphi 0, %s129
    %s130 = sphi 0, %s127
    %s131 = sphi 0, %s130
    %s147 = sphi 0, %s131
    %s155 = sphi 0, %s157
    %s158 = sphi 0, %s155
    %s159 = sphi 0, %s158
    %s175 = sphi 0, %s159
  $region4: #{double_conv.4} parent=0 // loop_header_branch
    %15 = sbr.rel (%p13) target = $region8
  $region5: #{double_conv.4} parent=0 // loop_body
    %s17 = ssub.s32 %s12, 1
    %s18 = ssub.s32 %s12, 2
    %s25 = sadd.s32 1, %s20
    %p26 = scmp.ge.s32.totalorder %s25, 1
    %s27 = scalar_select %p26, 0, %s25
    %s28 = sadd.s32 1, %s19
    %s29 = scalar_select %p26, %s28, %s19
    %p30 = scmp.ge.s32.totalorder %s29, 2
    %s31 = scalar_select %p30, 0, %s29
    %s32 = sadd.s32 %s19, %s20
    %s33 = sadd.s32 %s31, %s27
    %s34 = ssub.s32 %s32, %s33
    %p35 = scmp.eq.s32.totalorder %s34, 0
    %s37 = sadd.s32 %s36, 1
    %s38 = scalar_select %p35, %s36, %s37
    %p41 = pneg %p35
    %p42 = scmp.eq.s32.totalorder %s12, 1
    %p43 = por %p41, %p42
    %p44 = scmp.ne.s32.totalorder %s36, %s39
    %p45 = scmp.eq.s32.totalorder %s12, 0
    %p46 = por %p44, %p45
    %p47 = scmp.ne.s32.totalorder %s36, %s39
    %p48 = scmp.eq.s32.totalorder %s17, 1
    %p49 = por %p47, %p48
    %p50 = scmp.ne.s32.totalorder %s39, %s40
    %p51 = scmp.eq.s32.totalorder %s17, 0
    %p52 = por %p50, %p51
    %p53 = scmp.ne.s32.totalorder %s39, %s40
    %p54 = scmp.eq.s32.totalorder %s18, 1
    %p55 = por %p53, %p54
    %p57 = scmp.ne.s32.totalorder %s40, %s56
    %p58 = scmp.eq.s32.totalorder %s18, 0
    %p59 = por %p57, %p58
    %s61 = sadd.s32 %s60, 1
    %p64 = scmp.eq.s32.totalorder %s12, 1
    %p65 = scmp.ne.s32.totalorder %s60, %s62
    %p66 = scmp.eq.s32.totalorder %s12, 0
    %p67 = por %p65, %p66
    %p68 = scmp.ne.s32.totalorder %s60, %s62
    %p69 = scmp.eq.s32.totalorder %s17, 1
    %p70 = por %p68, %p69
    %p71 = scmp.ne.s32.totalorder %s62, %s63
    %p72 = scmp.eq.s32.totalorder %s17, 0
    %p73 = por %p71, %p72
    %p74 = scmp.ne.s32.totalorder %s62, %s63
    %p75 = scmp.eq.s32.totalorder %s18, 1
    %p76 = por %p74, %p75
    %p78 = scmp.ne.s32.totalorder %s63, %s77
    %p79 = scmp.eq.s32.totalorder %s18, 0
    %p80 = por %p78, %p79
    %s82 = sadd.s32 %s81, 1
    %p85 = scmp.eq.s32.totalorder %s12, 1
    %p86 = scmp.ne.s32.totalorder %s81, %s83
    %p87 = scmp.eq.s32.totalorder %s12, 0
    %p88 = por %p86, %p87
    %p89 = scmp.ne.s32.totalorder %s81, %s83
    %p90 = scmp.eq.s32.totalorder %s17, 1
    %p91 = por %p89, %p90
    %p92 = scmp.ne.s32.totalorder %s83, %s84
    %p93 = scmp.eq.s32.totalorder %s17, 0
    %p94 = por %p92, %p93
    %p95 = scmp.ne.s32.totalorder %s83, %s84
    %p96 = scmp.eq.s32.totalorder %s18, 1
    %p97 = por %p95, %p96
    %p99 = scmp.ne.s32.totalorder %s84, %s98
    %p100 = scmp.eq.s32.totalorder %s18, 0
    %p101 = por %p99, %p100
    %s103 = sadd.s32 %s102, 1
    %p106 = scmp.eq.s32.totalorder %s12, 1
    %p107 = scmp.ne.s32.totalorder %s102, %s104
    %p108 = scmp.eq.s32.totalorder %s12, 0
    %p109 = por %p107, %p108
    %p110 = scmp.ne.s32.totalorder %s102, %s104
    %p111 = scmp.eq.s32.totalorder %s17, 1
    %p112 = por %p110, %p111
    %p113 = scmp.ne.s32.totalorder %s104, %s105
    %p114 = scmp.eq.s32.totalorder %s17, 0
    %p115 = por %p113, %p114
    %p116 = scmp.ne.s32.totalorder %s104, %s105
    %p117 = scmp.eq.s32.totalorder %s18, 1
    %p118 = por %p116, %p117
    %p120 = scmp.ne.s32.totalorder %s105, %s119
    %p121 = scmp.eq.s32.totalorder %s18, 0
    %p122 = por %p120, %p121
    %s123 = ssub.s32 %s19, %s31
    %s124 = ssub.s32 %s20, %s27
    %s125 = sor.u32 %s123, %s124
    %p126 = scmp.eq.s32.totalorder %s125, 0
    %s128 = sadd.s32 %s127, 1
    %s129 = scalar_select %p126, %s127, %s128
    %p132 = pneg %p126
    %p133 = scmp.eq.s32.totalorder %s12, 1
    %p134 = por %p132, %p133
    %p135 = scmp.ne.s32.totalorder %s127, %s130
    %p136 = scmp.eq.s32.totalorder %s12, 0
    %p137 = por %p135, %p136
    %p138 = scmp.ne.s32.totalorder %s127, %s130
    %p139 = scmp.eq.s32.totalorder %s17, 1
    %p140 = por %p138, %p139
    %p141 = scmp.ne.s32.totalorder %s130, %s131
    %p142 = scmp.eq.s32.totalorder %s17, 0
    %p143 = por %p141, %p142
    %p144 = scmp.ne.s32.totalorder %s130, %s131
    %p145 = scmp.eq.s32.totalorder %s18, 1
    %p146 = por %p144, %p145
    %p148 = scmp.ne.s32.totalorder %s131, %s147
    %p149 = scmp.eq.s32.totalorder %s18, 0
    %p150 = por %p148, %p149
    %s151 = sadd.s32 %s19, %s20
    %s152 = sadd.s32 %s31, %s27
    %s153 = ssub.s32 %s151, %s152
    %p154 = scmp.eq.s32.totalorder %s153, 0
    %s156 = sadd.s32 %s155, 1
    %s157 = scalar_select %p154, %s155, %s156
    %p160 = pneg %p154
    %p161 = scmp.eq.s32.totalorder %s12, 1
    %p162 = por %p160, %p161
    %p163 = scmp.ne.s32.totalorder %s155, %s158
    %p164 = scmp.eq.s32.totalorder %s12, 0
    %p165 = por %p163, %p164
    %p166 = scmp.ne.s32.totalorder %s155, %s158
    %p167 = scmp.eq.s32.totalorder %s17, 1
    %p168 = por %p166, %p167
    %p169 = scmp.ne.s32.totalorder %s158, %s159
    %p170 = scmp.eq.s32.totalorder %s17, 0
    %p171 = por %p169, %p170
    %p172 = scmp.ne.s32.totalorder %s158, %s159
    %p173 = scmp.eq.s32.totalorder %s18, 1
    %p174 = por %p172, %p173
    %p176 = scmp.ne.s32.totalorder %s159, %s175
    %p177 = scmp.eq.s32.totalorder %s18, 0
    %p178 = por %p176, %p177
    %p179 = scmp.le.s32.totalorder 1, %s12
    %p180 = scmp.lt.s32.totalorder %s12, 3
    %p181 = pnand %p179, %p180
    %p182 = pneg %p181
    // Predicated region
    $region9: #{double_conv.4} parent=5 // pred_check
      _
    $region10: #{double_conv.4} parent=5 // pred_check_branch
      %184 = sbr.rel (%p181) target = $region12
    $region11: #{double_conv.4} parent=5 // pred_region
      %s185 = ssub.s32 %s12, 1
      // Predicated region
      $region13: #{double_conv.4} parent=11 // pred_check
        %p186 = pneg %p73
      $region14: #{double_conv.4} parent=11 // pred_check_branch
        %188 = sbr.rel (%p186) target = $region16
      $region15: #{double_conv.4} parent=11 // pred_region
        _
      $region16: #{double_conv.4} parent=11 // pred_fallthru
        _
      // Predicated region
      $region17: #{double_conv.4} parent=11 // pred_check
        %p189 = pneg %p94
      $region18: #{double_conv.4} parent=11 // pred_check_branch
        %191 = sbr.rel (%p189) target = $region20
      $region19: #{double_conv.4} parent=11 // pred_region
        _
      $region20: #{double_conv.4} parent=11 // pred_fallthru
        _
      // Predicated region
      $region21: #{double_conv.4} parent=11 // pred_check
        %p192 = pneg %p115
      $region22: #{double_conv.4} parent=11 // pred_check_branch
        %194 = sbr.rel (%p192) target = $region24
      $region23: #{double_conv.4} parent=11 // pred_region
        _
      $region24: #{double_conv.4} parent=11 // pred_fallthru
        _
    $region12: #{double_conv.4} parent=5 // pred_fallthru
      _
    %p195 = scmp.lt.s32.totalorder %s12, 2
    // Predicated region
    $region25: #{double_conv.4} parent=5 // pred_check
      %p196 = pneg %p195
    $region26: #{double_conv.4} parent=5 // pred_check_branch
      %198 = sbr.rel (%p196) target = $region28
    $region27: #{double_conv.4} parent=5 // pred_region
      // Predicated region
      $region29: #{double_conv.4} parent=27 // pred_check
        %p199 = pneg %p46
      $region30: #{double_conv.4} parent=27 // pred_check_branch
        %201 = sbr.rel (%p199) target = $region32
      $region31: #{double_conv.4} parent=27 // pred_region
        %s202 = sadd.s32 %s19, %s20
        %p203 = scmp.lt.s32.totalorder %s202, 1
        %s204 = scalar_select %p203, %s202, 1
        %s205 = smul.addr %s204, 54
        %s206 = smul.addr %s205, 8
        %s207 = scalar_lea.vmem %s0, %s206
        %s208 = sadd.s32 %s19, %s20
      $region32: #{double_conv.4} parent=27 // pred_fallthru
        _
    $region28: #{double_conv.4} parent=5 // pred_fallthru
      _
    %p209 = scmp.le.s32.totalorder 1, %s12
    %p210 = scmp.lt.s32.totalorder %s12, 3
    %p211 = pnand %p209, %p210
    %p212 = pneg %p211
    // Predicated region
    $region33: #{double_conv.4} parent=5 // pred_check
      _
    $region34: #{double_conv.4} parent=5 // pred_check_branch
      %214 = sbr.rel (%p211) target = $region36
    $region35: #{double_conv.4} parent=5 // pred_region
      %s215 = ssub.s32 %s12, 1
      %s216 = sadd.s32 %s21, %s22
      %p217 = scmp.lt.s32.totalorder %s216, 1
      %s218 = scalar_select %p217, %s216, 1
      %s219 = smul.addr %s218, 54
      %s220 = smul.addr %s219, 8
      %s221 = scalar_lea.vmem %s0, %s220
      %p222 = pneg %p52
      %p223 = pneg %p49
      %p224 = pneg %p73
      %p225 = pneg %p70
      %p226 = pneg %p94
      %p227 = pneg %p91
      %p228 = pneg %p115
      %p229 = pneg %p112
      %p230 = pneg %p143
      %p231 = pneg %p140
      %s232 = smul.u32 16, %s22
      %p233 = scmp.lt.s32.totalorder %s21, 1
      %s234 = scalar_select %p233, %s21, 1
      %p235 = scmp.lt.s32.totalorder %s232, 15
      %s236 = scalar_select %p235, %s232, 15
      %s237 = smul.addr %s236, 2
      %s238 = smul.addr %s234, 32
      %s239 = sadd.s32 %s237, %s238
      %s240 = smul.addr %s239, 8
      %s241 = scalar_lea.vmem %s4, %s240
      %p242 = pneg %p171
      %p243 = pneg %p168
      %s244 = sadd.s32 %s21, %s22
      %p245 = scmp.lt.s32.totalorder %s244, 1
      %s246 = scalar_select %p245, %s244, 1
      %s247 = smul.addr %s246, 2
      %s248 = scalar_lea.vmem %s5, %s247
      %s249 = sadd.s32 %s21, %s22
      %p250 = scmp.lt.s32.totalorder %s249, 1
      %s251 = scalar_select %p250, %s249, 1
      %s252 = smul.addr %s251, 54
      %s253 = smul.addr %s252, 8
      %s254 = scalar_lea.vmem %s0, %s253
      %s255 = sadd.s32 %s21, %s22
      %s256 = smul.u32 16, %s22
      %p257 = scmp.lt.s32.totalorder %s21, 1
      %s258 = scalar_select %p257, %s21, 1
      %p259 = scmp.lt.s32.totalorder %s256, 15
      %s260 = scalar_select %p259, %s256, 15
      %s261 = smul.addr %s260, 2
      %s262 = smul.addr %s258, 32
      %s263 = sadd.s32 %s261, %s262
      %s264 = smul.addr %s263, 8
      %s265 = scalar_lea.vmem %s4, %s264
      %s266 = smul.u32 16, %s22
      %s267 = sadd.s32 %s21, %s22
      %p268 = scmp.lt.s32.totalorder %s267, 1
      %s269 = scalar_select %p268, %s267, 1
      %s270 = smul.addr %s269, 2
      %s271 = scalar_lea.vmem %s5, %s270
      %s272 = sadd.s32 %s21, %s22
      %v273 = vld [vmem:[%s254] sm:$0xff]
      %v274 = vld [vmem:[%s254 + $0x8] sm:$0xff]
      %v275 = vld [vmem:[%s254 + $0x10] sm:$0x3]
      %v276 = vld [vmem:[%s254 + $0x18] sm:$0xff]
      %v277 = vld [vmem:[%s254 + $0x20] sm:$0xff]
      %v278 = vld [vmem:[%s254 + $0x28] sm:$0x3]
      %v279 = vld [vmem:[%s254 + $0x30] sm:$0xff]
      %v280 = vld [vmem:[%s254 + $0x38] sm:$0xff]
      %v281 = vld [vmem:[%s254 + $0x40] sm:$0x3]
      %v282 = vld [vmem:[%s254 + $0x48] sm:$0xff]
      %v283 = vld [vmem:[%s254 + $0x50] sm:$0xff]
      %v284 = vld [vmem:[%s254 + $0x58] sm:$0x3]
      %v285 = vld [vmem:[%s254 + $0x60] sm:$0xff]
      %v286 = vld [vmem:[%s254 + $0x68] sm:$0xff]
      %v287 = vld [vmem:[%s254 + $0x70] sm:$0x3]
      %v288 = vld [vmem:[%s254 + $0x78] sm:$0xff]
      %v289 = vld [vmem:[%s254 + $0x80] sm:$0xff]
      %v290 = vld [vmem:[%s254 + $0x88] sm:$0x3]
      %v291 = vld [vmem:[%s254 + $0x90] sm:$0xff]
      %v292 = vld [vmem:[%s254 + $0x98] sm:$0xff]
      %v293 = vld [vmem:[%s254 + $0xa0] sm:$0x3]
      %v294 = vld [vmem:[%s254 + $0xa8] sm:$0xff]
      %v295 = vld [vmem:[%s254 + $0xb0] sm:$0xff]
      %v296 = vld [vmem:[%s254 + $0xb8] sm:$0x3]
      %v297 = vld [vmem:[%s254 + $0xc0] sm:$0xff]
      %v298 = vld [vmem:[%s254 + $0xc8] sm:$0xff]
      %v299 = vld [vmem:[%s254 + $0xd0] sm:$0x3]
      %v300 = vld [vmem:[%s254 + $0xd8] sm:$0xff]
      %v301 = vld [vmem:[%s254 + $0xe0] sm:$0xff]
      %v302 = vld [vmem:[%s254 + $0xe8] sm:$0x3]
      %v303 = vld [vmem:[%s254 + $0xf0] sm:$0xff]
      %v304 = vld [vmem:[%s254 + $0xf8] sm:$0xff]
      %v305 = vld [vmem:[%s254 + $0x100] sm:$0x3]
      %v306 = vld [vmem:[%s254 + $0x108] sm:$0xff]
      %v307 = vld [vmem:[%s254 + $0x110] sm:$0xff]
      %v308 = vld [vmem:[%s254 + $0x118] sm:$0x3]
      %v309 = vld [vmem:[%s254 + $0x120] sm:$0xff]
      %v310 = vld [vmem:[%s254 + $0x128] sm:$0xff]
      %v311 = vld [vmem:[%s254 + $0x130] sm:$0x3]
      %v312 = vld [vmem:[%s254 + $0x138] sm:$0xff]
      %v313 = vld [vmem:[%s254 + $0x140] sm:$0xff]
      %v314 = vld [vmem:[%s254 + $0x148] sm:$0x3]
      %v315 = vld [vmem:[%s254 + $0x150] sm:$0xff]
      %v316 = vld [vmem:[%s254 + $0x158] sm:$0xff]
      %v317 = vld [vmem:[%s254 + $0x160] sm:$0x3]
      %v318 = vld [vmem:[%s254 + $0x168] sm:$0xff]
      %v319 = vld [vmem:[%s254 + $0x170] sm:$0xff]
      %v320 = vld [vmem:[%s254 + $0x178] sm:$0x3]
      %v321 = vld [vmem:[%s254 + $0x180] sm:$0xff]
      %v322 = vld [vmem:[%s254 + $0x188] sm:$0xff]
      %v323 = vld [vmem:[%s254 + $0x190] sm:$0x3]
      %v324 = vld [vmem:[%s254 + $0x198] sm:$0xff]
      %v325 = vld [vmem:[%s254 + $0x1a0] sm:$0xff]
      %v326 = vld [vmem:[%s254 + $0x1a8] sm:$0x3]
      %s327 = smul.u32 %s22, 16
      %v328 = vstv %s327
      %v329 = vadd.s32 %v328, 1
      %v330 = vadd.s32 %v328, 2
      %v331 = vadd.s32 %v328, 3
      %v332 = vadd.s32 %v328, 4
      %v333 = vadd.s32 %v328, 5
      %v334 = vadd.s32 %v328, 6
      %v335 = vadd.s32 %v328, 7
      %v336 = vadd.s32 %v328, 8
      %v337 = vadd.s32 %v328, 9
      %v338 = vadd.s32 %v328, 10
      %v339 = vadd.s32 %v328, 11
      %v340 = vadd.s32 %v328, 12
      %v341 = vadd.s32 %v328, 13
      %v342 = vadd.s32 %v328, 14
      %v343 = vadd.s32 %v328, 15
      %v344 = vadd.s32 %v328, 16
      %v345 = vadd.s32 %v328, 17
      %v346 = vlaneseq
      %v347 = vshrl.u32 %v346, 7
      %v348 = vadd.s32 %v347, 8
      %v349 = vadd.s32 %v347, 16
      %vm350 = vcmp.ge.s32.totalorder %v328, 1
      %vm351 = vcmp.ge.s32.totalorder %v329, 1
      %vm352 = vcmp.ge.s32.totalorder %v330, 1
      %vm353 = vcmp.ge.s32.totalorder %v331, 1
      %vm354 = vcmp.ge.s32.totalorder %v332, 1
      %vm355 = vcmp.ge.s32.totalorder %v333, 1
      %vm356 = vcmp.ge.s32.totalorder %v334, 1
      %vm357 = vcmp.ge.s32.totalorder %v335, 1
      %vm358 = vcmp.ge.s32.totalorder %v336, 1
      %vm359 = vcmp.ge.s32.totalorder %v337, 1
      %vm360 = vcmp.ge.s32.totalorder %v338, 1
      %vm361 = vcmp.ge.s32.totalorder %v339, 1
      %vm362 = vcmp.ge.s32.totalorder %v340, 1
      %vm363 = vcmp.ge.s32.totalorder %v341, 1
      %vm364 = vcmp.ge.s32.totalorder %v342, 1
      %vm365 = vcmp.ge.s32.totalorder %v343, 1
      %vm366 = vcmp.ge.s32.totalorder %v344, 1
      %vm367 = vcmp.ge.s32.totalorder %v345, 1
      %vm368 = vcmp.le.s32.totalorder %v328, 16
      %vm369 = vcmp.le.s32.totalorder %v329, 16
      %vm370 = vcmp.le.s32.totalorder %v330, 16
      %vm371 = vcmp.le.s32.totalorder %v331, 16
      %vm372 = vcmp.le.s32.totalorder %v332, 16
      %vm373 = vcmp.le.s32.totalorder %v333, 16
      %vm374 = vcmp.le.s32.totalorder %v334, 16
      %vm375 = vcmp.le.s32.totalorder %v335, 16
      %vm376 = vcmp.le.s32.totalorder %v336, 16
      %vm377 = vcmp.le.s32.totalorder %v337, 16
      %vm378 = vcmp.le.s32.totalorder %v338, 16
      %vm379 = vcmp.le.s32.totalorder %v339, 16
      %vm380 = vcmp.le.s32.totalorder %v340, 16
      %vm381 = vcmp.le.s32.totalorder %v341, 16
      %vm382 = vcmp.le.s32.totalorder %v342, 16
      %vm383 = vcmp.le.s32.totalorder %v343, 16
      %vm384 = vcmp.le.s32.totalorder %v344, 16
      %vm385 = vcmp.le.s32.totalorder %v345, 16
      %vm386 = vmand %vm350, %vm368
      %vm387 = vmand %vm351, %vm369
      %vm388 = vmand %vm352, %vm370
      %vm389 = vmand %vm353, %vm371
      %vm390 = vmand %vm354, %vm372
      %vm391 = vmand %vm355, %vm373
      %vm392 = vmand %vm356, %vm374
      %vm393 = vmand %vm357, %vm375
      %vm394 = vmand %vm358, %vm376
      %vm395 = vmand %vm359, %vm377
      %vm396 = vmand %vm360, %vm378
      %vm397 = vmand %vm361, %vm379
      %vm398 = vmand %vm362, %vm380
      %vm399 = vmand %vm363, %vm381
      %vm400 = vmand %vm364, %vm382
      %vm401 = vmand %vm365, %vm383
      %vm402 = vmand %vm366, %vm384
      %vm403 = vmand %vm367, %vm385
      %vm404 = vcmp.ge.s32.totalorder %v347, 1
      %vm405 = vcmp.ge.s32.totalorder %v348, 1
      %vm406 = vcmp.ge.s32.totalorder %v349, 1
      %vm407 = vmand %vm386, %vm404
      %vm408 = vmand %vm386, %vm405
      %vm409 = vmand %vm386, %vm406
      %vm410 = vmand %vm387, %vm404
      %vm411 = vmand %vm387, %vm405
      %vm412 = vmand %vm387, %vm406
      %vm413 = vmand %vm388, %vm404
      %vm414 = vmand %vm388, %vm405
      %vm415 = vmand %vm388, %vm406
      %vm416 = vmand %vm389, %vm404
      %vm417 = vmand %vm389, %vm405
      %vm418 = vmand %vm389, %vm406
      %vm419 = vmand %vm390, %vm404
      %vm420 = vmand %vm390, %vm405
      %vm421 = vmand %vm390, %vm406
      %vm422 = vmand %vm391, %vm404
      %vm423 = vmand %vm391, %vm405
      %vm424 = vmand %vm391, %vm406
      %vm425 = vmand %vm392, %vm404
      %vm426 = vmand %vm392, %vm405
      %vm427 = vmand %vm392, %vm406
      %vm428 = vmand %vm393, %vm404
      %vm429 = vmand %vm393, %vm405
      %vm430 = vmand %vm393, %vm406
      %vm431 = vmand %vm394, %vm404
      %vm432 = vmand %vm394, %vm405
      %vm433 = vmand %vm394, %vm406
      %vm434 = vmand %vm395, %vm404
      %vm435 = vmand %vm395, %vm405
      %vm436 = vmand %vm395, %vm406
      %vm437 = vmand %vm396, %vm404
      %vm438 = vmand %vm396, %vm405
      %vm439 = vmand %vm396, %vm406
      %vm440 = vmand %vm397, %vm404
      %vm441 = vmand %vm397, %vm405
      %vm442 = vmand %vm397, %vm406
      %vm443 = vmand %vm398, %vm404
      %vm444 = vmand %vm398, %vm405
      %vm445 = vmand %vm398, %vm406
      %vm446 = vmand %vm399, %vm404
      %vm447 = vmand %vm399, %vm405
      %vm448 = vmand %vm399, %vm406
      %vm449 = vmand %vm400, %vm404
      %vm450 = vmand %vm400, %vm405
      %vm451 = vmand %vm400, %vm406
      %vm452 = vmand %vm401, %vm404
      %vm453 = vmand %vm401, %vm405
      %vm454 = vmand %vm401, %vm406
      %vm455 = vmand %vm402, %vm404
      %vm456 = vmand %vm402, %vm405
      %vm457 = vmand %vm402, %vm406
      %vm458 = vmand %vm403, %vm404
      %vm459 = vmand %vm403, %vm405
      %vm460 = vmand %vm403, %vm406
      %vm461 = vcmp.le.s32.totalorder %v347, 16
      %vm462 = vcmp.le.s32.totalorder %v348, 16
      %vm463 = vcmp.le.s32.totalorder %v349, 16
      %vm464 = vmand %vm407, %vm461
      %vm465 = vmand %vm408, %vm462
      %vm466 = vmand %vm409, %vm463
      %vm467 = vmand %vm410, %vm461
      %vm468 = vmand %vm411, %vm462
      %vm469 = vmand %vm412, %vm463
      %vm470 = vmand %vm413, %vm461
      %vm471 = vmand %vm414, %vm462
      %vm472 = vmand %vm415, %vm463
      %vm473 = vmand %vm416, %vm461
      %vm474 = vmand %vm417, %vm462
      %vm475 = vmand %vm418, %vm463
      %vm476 = vmand %vm419, %vm461
      %vm477 = vmand %vm420, %vm462
      %vm478 = vmand %vm421, %vm463
      %vm479 = vmand %vm422, %vm461
      %vm480 = vmand %vm423, %vm462
      %vm481 = vmand %vm424, %vm463
      %vm482 = vmand %vm425, %vm461
      %vm483 = vmand %vm426, %vm462
      %vm484 = vmand %vm427, %vm463
      %vm485 = vmand %vm428, %vm461
      %vm486 = vmand %vm429, %vm462
      %vm487 = vmand %vm430, %vm463
      %vm488 = vmand %vm431, %vm461
      %vm489 = vmand %vm432, %vm462
      %vm490 = vmand %vm433, %vm463
      %vm491 = vmand %vm434, %vm461
      %vm492 = vmand %vm435, %vm462
      %vm493 = vmand %vm436, %vm463
      %vm494 = vmand %vm437, %vm461
      %vm495 = vmand %vm438, %vm462
      %vm496 = vmand %vm439, %vm463
      %vm497 = vmand %vm440, %vm461
      %vm498 = vmand %vm441, %vm462
      %vm499 = vmand %vm442, %vm463
      %vm500 = vmand %vm443, %vm461
      %vm501 = vmand %vm444, %vm462
      %vm502 = vmand %vm445, %vm463
      %vm503 = vmand %vm446, %vm461
      %vm504 = vmand %vm447, %vm462
      %vm505 = vmand %vm448, %vm463
      %vm506 = vmand %vm449, %vm461
      %vm507 = vmand %vm450, %vm462
      %vm508 = vmand %vm451, %vm463
      %vm509 = vmand %vm452, %vm461
      %vm510 = vmand %vm453, %vm462
      %vm511 = vmand %vm454, %vm463
      %vm512 = vmand %vm455, %vm461
      %vm513 = vmand %vm456, %vm462
      %vm514 = vmand %vm457, %vm463
      %vm515 = vmand %vm458, %vm461
      %vm516 = vmand %vm459, %vm462
      %vm517 = vmand %vm460, %vm463
      %v518 = vld [vmem:[%s2] sm:$0x1]
      %v520 = vlaneseq
      %v521 = vshrl.u32 %v520, 7
      %v522 = vsub.s32 0, %v521
      %v523 = vrot.slane %v518, %v522
      %v525 = vmul.f32 %v273, %v523
      %v526 = vmul.f32 %v274, %v523
      %v527 = vmul.f32 %v275, %v523
      %v528 = vmul.f32 %v276, %v523
      %v529 = vmul.f32 %v277, %v523
      %v530 = vmul.f32 %v278, %v523
      %v531 = vmul.f32 %v279, %v523
      %v532 = vmul.f32 %v280, %v523
      %v533 = vmul.f32 %v281, %v523
      %v534 = vmul.f32 %v282, %v523
      %v535 = vmul.f32 %v283, %v523
      %v536 = vmul.f32 %v284, %v523
      %v537 = vmul.f32 %v285, %v523
      %v538 = vmul.f32 %v286, %v523
      %v539 = vmul.f32 %v287, %v523
      %v540 = vmul.f32 %v288, %v523
      %v541 = vmul.f32 %v289, %v523
      %v542 = vmul.f32 %v290, %v523
      %v543 = vmul.f32 %v291, %v523
      %v544 = vmul.f32 %v292, %v523
      %v545 = vmul.f32 %v293, %v523
      %v546 = vmul.f32 %v294, %v523
      %v547 = vmul.f32 %v295, %v523
      %v548 = vmul.f32 %v296, %v523
      %v549 = vmul.f32 %v297, %v523
      %v550 = vmul.f32 %v298, %v523
      %v551 = vmul.f32 %v299, %v523
      %v552 = vmul.f32 %v300, %v523
      %v553 = vmul.f32 %v301, %v523
      %v554 = vmul.f32 %v302, %v523
      %v555 = vmul.f32 %v303, %v523
      %v556 = vmul.f32 %v304, %v523
      %v557 = vmul.f32 %v305, %v523
      %v558 = vmul.f32 %v306, %v523
      %v559 = vmul.f32 %v307, %v523
      %v560 = vmul.f32 %v308, %v523
      %v561 = vmul.f32 %v309, %v523
      %v562 = vmul.f32 %v310, %v523
      %v563 = vmul.f32 %v311, %v523
      %v564 = vmul.f32 %v312, %v523
      %v565 = vmul.f32 %v313, %v523
      %v566 = vmul.f32 %v314, %v523
      %v567 = vmul.f32 %v315, %v523
      %v568 = vmul.f32 %v316, %v523
      %v569 = vmul.f32 %v317, %v523
      %v570 = vmul.f32 %v318, %v523
      %v571 = vmul.f32 %v319, %v523
      %v572 = vmul.f32 %v320, %v523
      %v573 = vmul.f32 %v321, %v523
      %v574 = vmul.f32 %v322, %v523
      %v575 = vmul.f32 %v323, %v523
      %v576 = vmul.f32 %v324, %v523
      %v577 = vmul.f32 %v325, %v523
      %v578 = vmul.f32 %v326, %v523
      %v579 = vld [vmem:[%s3] sm:$0x1]
      %v581 = vlaneseq
      %v582 = vshrl.u32 %v581, 7
      %v583 = vsub.s32 0, %v582
      %v584 = vrot.slane %v579, %v583
      %v586 = vadd.f32 %v525, %v584
      %v587 = vadd.f32 %v526, %v584
      %v588 = vadd.f32 %v527, %v584
      %v589 = vadd.f32 %v528, %v584
      %v590 = vadd.f32 %v529, %v584
      %v591 = vadd.f32 %v530, %v584
      %v592 = vadd.f32 %v531, %v584
      %v593 = vadd.f32 %v532, %v584
      %v594 = vadd.f32 %v533, %v584
      %v595 = vadd.f32 %v534, %v584
      %v596 = vadd.f32 %v535, %v584
      %v597 = vadd.f32 %v536, %v584
      %v598 = vadd.f32 %v537, %v584
      %v599 = vadd.f32 %v538, %v584
      %v600 = vadd.f32 %v539, %v584
      %v601 = vadd.f32 %v540, %v584
      %v602 = vadd.f32 %v541, %v584
      %v603 = vadd.f32 %v542, %v584
      %v604 = vadd.f32 %v543, %v584
      %v605 = vadd.f32 %v544, %v584
      %v606 = vadd.f32 %v545, %v584
      %v607 = vadd.f32 %v546, %v584
      %v608 = vadd.f32 %v547, %v584
      %v609 = vadd.f32 %v548, %v584
      %v610 = vadd.f32 %v549, %v584
      %v611 = vadd.f32 %v550, %v584
      %v612 = vadd.f32 %v551, %v584
      %v613 = vadd.f32 %v552, %v584
      %v614 = vadd.f32 %v553, %v584
      %v615 = vadd.f32 %v554, %v584
      %v616 = vadd.f32 %v555, %v584
      %v617 = vadd.f32 %v556, %v584
      %v618 = vadd.f32 %v557, %v584
      %v619 = vadd.f32 %v558, %v584
      %v620 = vadd.f32 %v559, %v584
      %v621 = vadd.f32 %v560, %v584
      %v622 = vadd.f32 %v561, %v584
      %v623 = vadd.f32 %v562, %v584
      %v624 = vadd.f32 %v563, %v584
      %v625 = vadd.f32 %v564, %v584
      %v626 = vadd.f32 %v565, %v584
      %v627 = vadd.f32 %v566, %v584
      %v628 = vadd.f32 %v567, %v584
      %v629 = vadd.f32 %v568, %v584
      %v630 = vadd.f32 %v569, %v584
      %v631 = vadd.f32 %v570, %v584
      %v632 = vadd.f32 %v571, %v584
      %v633 = vadd.f32 %v572, %v584
      %v634 = vadd.f32 %v573, %v584
      %v635 = vadd.f32 %v574, %v584
      %v636 = vadd.f32 %v575, %v584
      %v637 = vadd.f32 %v576, %v584
      %v638 = vadd.f32 %v577, %v584
      %v639 = vadd.f32 %v578, %v584
      %v640 = vmax.f32 %v586, 0.0
      %v641 = vmax.f32 %v587, 0.0
      %v642 = vmax.f32 %v588, 0.0
      %v643 = vmax.f32 %v589, 0.0
      %v644 = vmax.f32 %v590, 0.0
      %v645 = vmax.f32 %v591, 0.0
      %v646 = vmax.f32 %v592, 0.0
      %v647 = vmax.f32 %v593, 0.0
      %v648 = vmax.f32 %v594, 0.0
      %v649 = vmax.f32 %v595, 0.0
      %v650 = vmax.f32 %v596, 0.0
      %v651 = vmax.f32 %v597, 0.0
      %v652 = vmax.f32 %v598, 0.0
      %v653 = vmax.f32 %v599, 0.0
      %v654 = vmax.f32 %v600, 0.0
      %v655 = vmax.f32 %v601, 0.0
      %v656 = vmax.f32 %v602, 0.0
      %v657 = vmax.f32 %v603, 0.0
      %v658 = vmax.f32 %v604, 0.0
      %v659 = vmax.f32 %v605, 0.0
      %v660 = vmax.f32 %v606, 0.0
      %v661 = vmax.f32 %v607, 0.0
      %v662 = vmax.f32 %v608, 0.0
      %v663 = vmax.f32 %v609, 0.0
      %v664 = vmax.f32 %v610, 0.0
      %v665 = vmax.f32 %v611, 0.0
      %v666 = vmax.f32 %v612, 0.0
      %v667 = vmax.f32 %v613, 0.0
      %v668 = vmax.f32 %v614, 0.0
      %v669 = vmax.f32 %v615, 0.0
      %v670 = vmax.f32 %v616, 0.0
      %v671 = vmax.f32 %v617, 0.0
      %v672 = vmax.f32 %v618, 0.0
      %v673 = vmax.f32 %v619, 0.0
      %v674 = vmax.f32 %v620, 0.0
      %v675 = vmax.f32 %v621, 0.0
      %v676 = vmax.f32 %v622, 0.0
      %v677 = vmax.f32 %v623, 0.0
      %v678 = vmax.f32 %v624, 0.0
      %v679 = vmax.f32 %v625, 0.0
      %v680 = vmax.f32 %v626, 0.0
      %v681 = vmax.f32 %v627, 0.0
      %v682 = vmax.f32 %v628, 0.0
      %v683 = vmax.f32 %v629, 0.0
      %v684 = vmax.f32 %v630, 0.0
      %v685 = vmax.f32 %v631, 0.0
      %v686 = vmax.f32 %v632, 0.0
      %v687 = vmax.f32 %v633, 0.0
      %v688 = vmax.f32 %v634, 0.0
      %v689 = vmax.f32 %v635, 0.0
      %v690 = vmax.f32 %v636, 0.0
      %v691 = vmax.f32 %v637, 0.0
      %v692 = vmax.f32 %v638, 0.0
      %v693 = vmax.f32 %v639, 0.0
      %v694 = vsel %vm464, %v640, 0.0
      %v695 = vsel %vm465, %v641, 0.0
      %v696 = vsel %vm466, %v642, 0.0
      %v697 = vsel %vm467, %v643, 0.0
      %v698 = vsel %vm468, %v644, 0.0
      %v699 = vsel %vm469, %v645, 0.0
      %v700 = vsel %vm470, %v646, 0.0
      %v701 = vsel %vm471, %v647, 0.0
      %v702 = vsel %vm472, %v648, 0.0
      %v703 = vsel %vm473, %v649, 0.0
      %v704 = vsel %vm474, %v650, 0.0
      %v705 = vsel %vm475, %v651, 0.0
      %v706 = vsel %vm476, %v652, 0.0
      %v707 = vsel %vm477, %v653, 0.0
      %v708 = vsel %vm478, %v654, 0.0
      %v709 = vsel %vm479, %v655, 0.0
      %v710 = vsel %vm480, %v656, 0.0
      %v711 = vsel %vm481, %v657, 0.0
      %v712 = vsel %vm482, %v658, 0.0
      %v713 = vsel %vm483, %v659, 0.0
      %v714 = vsel %vm484, %v660, 0.0
      %v715 = vsel %vm485, %v661, 0.0
      %v716 = vsel %vm486, %v662, 0.0
      %v717 = vsel %vm487, %v663, 0.0
      %v718 = vsel %vm488, %v664, 0.0
      %v719 = vsel %vm489, %v665, 0.0
      %v720 = vsel %vm490, %v666, 0.0
      %v721 = vsel %vm491, %v667, 0.0
      %v722 = vsel %vm492, %v668, 0.0
      %v723 = vsel %vm493, %v669, 0.0
      %v724 = vsel %vm494, %v670, 0.0
      %v725 = vsel %vm495, %v671, 0.0
      %v726 = vsel %vm496, %v672, 0.0
      %v727 = vsel %vm497, %v673, 0.0
      %v728 = vsel %vm498, %v674, 0.0
      %v729 = vsel %vm499, %v675, 0.0
      %v730 = vsel %vm500, %v676, 0.0
      %v731 = vsel %vm501, %v677, 0.0
      %v732 = vsel %vm502, %v678, 0.0
      %v733 = vsel %vm503, %v679, 0.0
      %v734 = vsel %vm504, %v680, 0.0
      %v735 = vsel %vm505, %v681, 0.0
      %v736 = vsel %vm506, %v682, 0.0
      %v737 = vsel %vm507, %v683, 0.0
      %v738 = vsel %vm508, %v684, 0.0
      %v739 = vsel %vm509, %v685, 0.0
      %v740 = vsel %vm510, %v686, 0.0
      %v741 = vsel %vm511, %v687, 0.0
      %v742 = vsel %vm512, %v688, 0.0
      %v743 = vsel %vm513, %v689, 0.0
      %v744 = vsel %vm514, %v690, 0.0
      %v745 = vsel %vm515, %v691, 0.0
      %v746 = vsel %vm516, %v692, 0.0
      %v747 = vsel %vm517, %v693, 0.0
      %vm796 = vcmask 1046528
      %v797 = vrot.slane %v694, 1
      %v798 = vrot.slane %v695, 1
      %v799 = vsel %vm796, %v797, %v798
      %v800 = vrot.slane %v696, 1
      %v801 = vsel %vm796, %v798, %v800
      %v802 = vrot.slane %v697, 1
      %v803 = vrot.slane %v698, 1
      %v804 = vsel %vm796, %v802, %v803
      %v805 = vrot.slane %v699, 1
      %v806 = vsel %vm796, %v803, %v805
      %v807 = vrot.slane %v700, 1
      %v808 = vrot.slane %v701, 1
      %v809 = vsel %vm796, %v807, %v808
      %v810 = vrot.slane %v702, 1
      %v811 = vsel %vm796, %v808, %v810
      %v812 = vrot.slane %v703, 1
      %v813 = vrot.slane %v704, 1
      %v814 = vsel %vm796, %v812, %v813
      %v815 = vrot.slane %v705, 1
      %v816 = vsel %vm796, %v813, %v815
      %v817 = vrot.slane %v706, 1
      %v818 = vrot.slane %v707, 1
      %v819 = vsel %vm796, %v817, %v818
      %v820 = vrot.slane %v708, 1
      %v821 = vsel %vm796, %v818, %v820
      %v822 = vrot.slane %v709, 1
      %v823 = vrot.slane %v710, 1
      %v824 = vsel %vm796, %v822, %v823
      %v825 = vrot.slane %v711, 1
      %v826 = vsel %vm796, %v823, %v825
      %v827 = vrot.slane %v712, 1
      %v828 = vrot.slane %v713, 1
      %v829 = vsel %vm796, %v827, %v828
      %v830 = vrot.slane %v714, 1
      %v831 = vsel %vm796, %v828, %v830
      %v832 = vrot.slane %v715, 1
      %v833 = vrot.slane %v716, 1
      %v834 = vsel %vm796, %v832, %v833
      %v835 = vrot.slane %v717, 1
      %v836 = vsel %vm796, %v833, %v835
      %v837 = vrot.slane %v718, 1
      %v838 = vrot.slane %v719, 1
      %v839 = vsel %vm796, %v837, %v838
      %v840 = vrot.slane %v720, 1
      %v841 = vsel %vm796, %v838, %v840
      %v842 = vrot.slane %v721, 1
      %v843 = vrot.slane %v722, 1
      %v844 = vsel %vm796, %v842, %v843
      %v845 = vrot.slane %v723, 1
      %v846 = vsel %vm796, %v843, %v845
      %v847 = vrot.slane %v724, 1
      %v848 = vrot.slane %v725, 1
      %v849 = vsel %vm796, %v847, %v848
      %v850 = vrot.slane %v726, 1
      %v851 = vsel %vm796, %v848, %v850
      %v852 = vrot.slane %v727, 1
      %v853 = vrot.slane %v728, 1
      %v854 = vsel %vm796, %v852, %v853
      %v855 = vrot.slane %v729, 1
      %v856 = vsel %vm796, %v853, %v855
      %v857 = vrot.slane %v730, 1
      %v858 = vrot.slane %v731, 1
      %v859 = vsel %vm796, %v857, %v858
      %v860 = vrot.slane %v732, 1
      %v861 = vsel %vm796, %v858, %v860
      %v862 = vrot.slane %v733, 1
      %v863 = vrot.slane %v734, 1
      %v864 = vsel %vm796, %v862, %v863
      %v865 = vrot.slane %v735, 1
      %v866 = vsel %vm796, %v863, %v865
      %v867 = vrot.slane %v736, 1
      %v868 = vrot.slane %v737, 1
      %v869 = vsel %vm796, %v867, %v868
      %v870 = vrot.slane %v738, 1
      %v871 = vsel %vm796, %v868, %v870
      %v872 = vrot.slane %v739, 1
      %v873 = vrot.slane %v740, 1
      %v874 = vsel %vm796, %v872, %v873
      %v875 = vrot.slane %v741, 1
      %v876 = vsel %vm796, %v873, %v875
      %vm909 = vcmask 1045504
      %v910 = vrot.slane %v694, 2
      %v911 = vrot.slane %v695, 2
      %v912 = vsel %vm909, %v910, %v911
      %v913 = vrot.slane %v696, 2
      %v914 = vsel %vm909, %v911, %v913
      %v915 = vrot.slane %v697, 2
      %v916 = vrot.slane %v698, 2
      %v917 = vsel %vm909, %v915, %v916
      %v918 = vrot.slane %v699, 2
      %v919 = vsel %vm909, %v916, %v918
      %v920 = vrot.slane %v700, 2
      %v921 = vrot.slane %v701, 2
      %v922 = vsel %vm909, %v920, %v921
      %v923 = vrot.slane %v702, 2
      %v924 = vsel %vm909, %v921, %v923
      %v925 = vrot.slane %v703, 2
      %v926 = vrot.slane %v704, 2
      %v927 = vsel %vm909, %v925, %v926
      %v928 = vrot.slane %v705, 2
      %v929 = vsel %vm909, %v926, %v928
      %v930 = vrot.slane %v706, 2
      %v931 = vrot.slane %v707, 2
      %v932 = vsel %vm909, %v930, %v931
      %v933 = vrot.slane %v708, 2
      %v934 = vsel %vm909, %v931, %v933
      %v935 = vrot.slane %v709, 2
      %v936 = vrot.slane %v710, 2
      %v937 = vsel %vm909, %v935, %v936
      %v938 = vrot.slane %v711, 2
      %v939 = vsel %vm909, %v936, %v938
      %v940 = vrot.slane %v712, 2
      %v941 = vrot.slane %v713, 2
      %v942 = vsel %vm909, %v940, %v941
      %v943 = vrot.slane %v714, 2
      %v944 = vsel %vm909, %v941, %v943
      %v945 = vrot.slane %v715, 2
      %v946 = vrot.slane %v716, 2
      %v947 = vsel %vm909, %v945, %v946
      %v948 = vrot.slane %v717, 2
      %v949 = vsel %vm909, %v946, %v948
      %v950 = vrot.slane %v718, 2
      %v951 = vrot.slane %v719, 2
      %v952 = vsel %vm909, %v950, %v951
      %v953 = vrot.slane %v720, 2
      %v954 = vsel %vm909, %v951, %v953
      %v955 = vrot.slane %v721, 2
      %v956 = vrot.slane %v722, 2
      %v957 = vsel %vm909, %v955, %v956
      %v958 = vrot.slane %v723, 2
      %v959 = vsel %vm909, %v956, %v958
      %v960 = vrot.slane %v724, 2
      %v961 = vrot.slane %v725, 2
      %v962 = vsel %vm909, %v960, %v961
      %v963 = vrot.slane %v726, 2
      %v964 = vsel %vm909, %v961, %v963
      %v965 = vrot.slane %v727, 2
      %v966 = vrot.slane %v728, 2
      %v967 = vsel %vm909, %v965, %v966
      %v968 = vrot.slane %v729, 2
      %v969 = vsel %vm909, %v966, %v968
      %v970 = vrot.slane %v730, 2
      %v971 = vrot.slane %v731, 2
      %v972 = vsel %vm909, %v970, %v971
      %v973 = vrot.slane %v732, 2
      %v974 = vsel %vm909, %v971, %v973
      %v975 = vrot.slane %v733, 2
      %v976 = vrot.slane %v734, 2
      %v977 = vsel %vm909, %v975, %v976
      %v978 = vrot.slane %v735, 2
      %v979 = vsel %vm909, %v976, %v978
      %v980 = vrot.slane %v736, 2
      %v981 = vrot.slane %v737, 2
      %v982 = vsel %vm909, %v980, %v981
      %v983 = vrot.slane %v738, 2
      %v984 = vsel %vm909, %v981, %v983
      %v985 = vrot.slane %v739, 2
      %v986 = vrot.slane %v740, 2
      %v987 = vsel %vm909, %v985, %v986
      %v988 = vrot.slane %v741, 2
      %v989 = vsel %vm909, %v986, %v988
      %v1025 = vrot.slane %v742, 1
      %v1026 = vrot.slane %v743, 1
      %v1027 = vsel %vm796, %v1025, %v1026
      %v1028 = vrot.slane %v744, 1
      %v1029 = vsel %vm796, %v1026, %v1028
      %v1032 = vrot.slane %v742, 2
      %v1033 = vrot.slane %v743, 2
      %v1034 = vsel %vm909, %v1032, %v1033
      %v1035 = vrot.slane %v744, 2
      %v1036 = vsel %vm909, %v1033, %v1035
      %v1042 = vrot.slane %v745, 1
      %v1043 = vrot.slane %v746, 1
      %v1044 = vsel %vm796, %v1042, %v1043
      %v1045 = vrot.slane %v747, 1
      %v1046 = vsel %vm796, %v1043, %v1045
      %v1049 = vrot.slane %v745, 2
      %v1050 = vrot.slane %v746, 2
      %v1051 = vsel %vm909, %v1049, %v1050
      %v1052 = vrot.slane %v747, 2
      %v1053 = vsel %vm909, %v1050, %v1052
      %v1056 = vld [vmem:[%s1] sm:$0xff]
      %v1057 = vld [vmem:[%s1 + $0x8] sm:$0xff]
      %v1058 = vld [vmem:[%s1 + $0x10] sm:$0xff]
      %v1059 = vld [vmem:[%s1 + $0x18] sm:$0xff]
      %v1060 = vld [vmem:[%s1 + $0x20] sm:$0xff]
      %v1061 = vld [vmem:[%s1 + $0x28] sm:$0xff]
      %v1062 = vld [vmem:[%s1 + $0x30] sm:$0xff]
      %v1063 = vld [vmem:[%s1 + $0x38] sm:$0xff]
      %v1064 = vld [vmem:[%s1 + $0x40] sm:$0xff]
      %v1065 = vld [vmem:[%s1 + $0x48] sm:$0xff]
      %v1066 = vld [vmem:[%s1 + $0x50] sm:$0xff]
      %v1067 = vld [vmem:[%s1 + $0x58] sm:$0xff]
      %v1068 = vld [vmem:[%s1 + $0x60] sm:$0xff]
      %v1069 = vld [vmem:[%s1 + $0x68] sm:$0xff]
      %v1070 = vld [vmem:[%s1 + $0x70] sm:$0xff]
      %v1071 = vld [vmem:[%s1 + $0x78] sm:$0xff]
      %v1072 = vld [vmem:[%s1 + $0x80] sm:$0xff]
      %v1073 = vld [vmem:[%s1 + $0x88] sm:$0xff]
      %v1074 = vld [vmem:[%s1 + $0x90] sm:$0xff]
      %v1075 = vld [vmem:[%s1 + $0x98] sm:$0xff]
      %v1076 = vld [vmem:[%s1 + $0xa0] sm:$0xff]
      %v1077 = vld [vmem:[%s1 + $0xa8] sm:$0xff]
      %v1078 = vld [vmem:[%s1 + $0xb0] sm:$0xff]
      %v1079 = vld [vmem:[%s1 + $0xb8] sm:$0xff]
      %v1080 = vld [vmem:[%s1 + $0xc0] sm:$0xff]
      %v1081 = vld [vmem:[%s1 + $0xc8] sm:$0xff]
      %v1082 = vld [vmem:[%s1 + $0xd0] sm:$0xff]
      %v1083 = vld [vmem:[%s1 + $0xd8] sm:$0xff]
      %v1084 = vld [vmem:[%s1 + $0xe0] sm:$0xff]
      %v1085 = vld [vmem:[%s1 + $0xe8] sm:$0xff]
      %v1086 = vld [vmem:[%s1 + $0xf0] sm:$0xff]
      %v1087 = vld [vmem:[%s1 + $0xf8] sm:$0xff]
      %v1088 = vld [vmem:[%s1 + $0x100] sm:$0xff]
      %v1089 = vld [vmem:[%s1 + $0x108] sm:$0xff]
      %v1090 = vld [vmem:[%s1 + $0x110] sm:$0xff]
      %v1091 = vld [vmem:[%s1 + $0x118] sm:$0xff]
      %v1092 = vld [vmem:[%s1 + $0x120] sm:$0xff]
      %v1093 = vld [vmem:[%s1 + $0x128] sm:$0xff]
      %v1094 = vld [vmem:[%s1 + $0x130] sm:$0xff]
      %v1095 = vld [vmem:[%s1 + $0x138] sm:$0xff]
      %v1096 = vld [vmem:[%s1 + $0x140] sm:$0xff]
      %v1097 = vld [vmem:[%s1 + $0x148] sm:$0xff]
      %v1098 = vld [vmem:[%s1 + $0x150] sm:$0xff]
      %v1099 = vld [vmem:[%s1 + $0x158] sm:$0xff]
      %v1100 = vld [vmem:[%s1 + $0x160] sm:$0xff]
      %v1101 = vld [vmem:[%s1 + $0x168] sm:$0xff]
      %v1102 = vld [vmem:[%s1 + $0x170] sm:$0xff]
      %v1103 = vld [vmem:[%s1 + $0x178] sm:$0xff]
      %v1104 = vld [vmem:[%s1 + $0x180] sm:$0xff]
      %v1105 = vld [vmem:[%s1 + $0x188] sm:$0xff]
      %v1106 = vld [vmem:[%s1 + $0x190] sm:$0xff]
      %v1107 = vld [vmem:[%s1 + $0x198] sm:$0xff]
      %v1108 = vld [vmem:[%s1 + $0x1a0] sm:$0xff]
      %v1109 = vld [vmem:[%s1 + $0x1a8] sm:$0xff]
      %v1110 = vld [vmem:[%s1 + $0x1b0] sm:$0xff]
      %v1111 = vld [vmem:[%s1 + $0x1b8] sm:$0xff]
      %v1112 = vld [vmem:[%s1 + $0x1c0] sm:$0xff]
      %v1113 = vld [vmem:[%s1 + $0x1c8] sm:$0xff]
      %v1114 = vld [vmem:[%s1 + $0x1d0] sm:$0xff]
      %v1115 = vld [vmem:[%s1 + $0x1d8] sm:$0xff]
      %v1116 = vld [vmem:[%s1 + $0x1e0] sm:$0xff]
      %v1117 = vld [vmem:[%s1 + $0x1e8] sm:$0xff]
      %v1118 = vld [vmem:[%s1 + $0x1f0] sm:$0xff]
      %v1119 = vld [vmem:[%s1 + $0x1f8] sm:$0xff]
      %v1120 = vld [vmem:[%s1 + $0x200] sm:$0xff]
      %v1121 = vld [vmem:[%s1 + $0x208] sm:$0xff]
      %v1122 = vld [vmem:[%s1 + $0x210] sm:$0xff]
      %v1123 = vld [vmem:[%s1 + $0x218] sm:$0xff]
      %v1124 = vld [vmem:[%s1 + $0x220] sm:$0xff]
      %v1125 = vld [vmem:[%s1 + $0x228] sm:$0xff]
      %v1126 = vld [vmem:[%s1 + $0x230] sm:$0xff]
      %v1127 = vld [vmem:[%s1 + $0x238] sm:$0xff]
      %v1128 = vld [vmem:[%s1 + $0x240] sm:$0xff]
      %v1129 = vld [vmem:[%s1 + $0x248] sm:$0xff]
      %v1130 = vld [vmem:[%s1 + $0x250] sm:$0xff]
      %v1131 = vld [vmem:[%s1 + $0x258] sm:$0xff]
      %v1132 = vld [vmem:[%s1 + $0x260] sm:$0xff]
      %v1133 = vld [vmem:[%s1 + $0x268] sm:$0xff]
      %v1134 = vld [vmem:[%s1 + $0x270] sm:$0xff]
      %v1135 = vld [vmem:[%s1 + $0x278] sm:$0xff]
      %v1136 = vld [vmem:[%s1 + $0x280] sm:$0xff]
      %v1137 = vld [vmem:[%s1 + $0x288] sm:$0xff]
      %v1138 = vld [vmem:[%s1 + $0x290] sm:$0xff]
      %v1139 = vld [vmem:[%s1 + $0x298] sm:$0xff]
      %v1140 = vld [vmem:[%s1 + $0x2a0] sm:$0xff]
      %v1141 = vld [vmem:[%s1 + $0x2a8] sm:$0xff]
      %v1142 = vld [vmem:[%s1 + $0x2b0] sm:$0xff]
      %v1143 = vld [vmem:[%s1 + $0x2b8] sm:$0xff]
      %v1144 = vld [vmem:[%s1 + $0x2c0] sm:$0xff]
      %v1145 = vld [vmem:[%s1 + $0x2c8] sm:$0xff]
      %v1146 = vld [vmem:[%s1 + $0x2d0] sm:$0xff]
      %v1147 = vld [vmem:[%s1 + $0x2d8] sm:$0xff]
      %v1148 = vld [vmem:[%s1 + $0x2e0] sm:$0xff]
      %v1149 = vld [vmem:[%s1 + $0x2e8] sm:$0xff]
      %v1150 = vld [vmem:[%s1 + $0x2f0] sm:$0xff]
      %v1151 = vld [vmem:[%s1 + $0x2f8] sm:$0xff]
      %v1152 = vld [vmem:[%s1 + $0x300] sm:$0xff]
      %v1153 = vld [vmem:[%s1 + $0x308] sm:$0xff]
      %v1154 = vld [vmem:[%s1 + $0x310] sm:$0xff]
      %v1155 = vld [vmem:[%s1 + $0x318] sm:$0xff]
      %v1156 = vld [vmem:[%s1 + $0x320] sm:$0xff]
      %v1157 = vld [vmem:[%s1 + $0x328] sm:$0xff]
      %v1158 = vld [vmem:[%s1 + $0x330] sm:$0xff]
      %v1159 = vld [vmem:[%s1 + $0x338] sm:$0xff]
      %v1160 = vld [vmem:[%s1 + $0x340] sm:$0xff]
      %v1161 = vld [vmem:[%s1 + $0x348] sm:$0xff]
      %v1162 = vld [vmem:[%s1 + $0x350] sm:$0xff]
      %v1163 = vld [vmem:[%s1 + $0x358] sm:$0xff]
      %v1164 = vld [vmem:[%s1 + $0x360] sm:$0xff]
      %v1165 = vld [vmem:[%s1 + $0x368] sm:$0xff]
      %v1166 = vld [vmem:[%s1 + $0x370] sm:$0xff]
      %v1167 = vld [vmem:[%s1 + $0x378] sm:$0xff]
      %v1168 = vld [vmem:[%s1 + $0x380] sm:$0xff]
      %v1169 = vld [vmem:[%s1 + $0x388] sm:$0xff]
      %v1170 = vld [vmem:[%s1 + $0x390] sm:$0xff]
      %v1171 = vld [vmem:[%s1 + $0x398] sm:$0xff]
      %v1172 = vld [vmem:[%s1 + $0x3a0] sm:$0xff]
      %v1173 = vld [vmem:[%s1 + $0x3a8] sm:$0xff]
      %v1174 = vld [vmem:[%s1 + $0x3b0] sm:$0xff]
      %v1175 = vld [vmem:[%s1 + $0x3b8] sm:$0xff]
      %v1176 = vld [vmem:[%s1 + $0x3c0] sm:$0xff]
      %v1177 = vld [vmem:[%s1 + $0x3c8] sm:$0xff]
      %v1178 = vld [vmem:[%s1 + $0x3d0] sm:$0xff]
      %v1179 = vld [vmem:[%s1 + $0x3d8] sm:$0xff]
      %v1180 = vld [vmem:[%s1 + $0x3e0] sm:$0xff]
      %v1181 = vld [vmem:[%s1 + $0x3e8] sm:$0xff]
      %v1182 = vld [vmem:[%s1 + $0x3f0] sm:$0xff]
      %v1183 = vld [vmem:[%s1 + $0x3f8] sm:$0xff]
      %v1184 = vld [vmem:[%s1 + $0x400] sm:$0xff]
      %v1185 = vld [vmem:[%s1 + $0x408] sm:$0xff]
      %v1186 = vld [vmem:[%s1 + $0x410] sm:$0xff]
      %v1187 = vld [vmem:[%s1 + $0x418] sm:$0xff]
      %v1188 = vld [vmem:[%s1 + $0x420] sm:$0xff]
      %v1189 = vld [vmem:[%s1 + $0x428] sm:$0xff]
      %v1190 = vld [vmem:[%s1 + $0x430] sm:$0xff]
      %v1191 = vld [vmem:[%s1 + $0x438] sm:$0xff]
      %v1192 = vld [vmem:[%s1 + $0x440] sm:$0xff]
      %v1193 = vld [vmem:[%s1 + $0x448] sm:$0xff]
      %v1194 = vld [vmem:[%s1 + $0x450] sm:$0xff]
      %v1195 = vld [vmem:[%s1 + $0x458] sm:$0xff]
      %v1196 = vld [vmem:[%s1 + $0x460] sm:$0xff]
      %v1197 = vld [vmem:[%s1 + $0x468] sm:$0xff]
      %v1198 = vld [vmem:[%s1 + $0x470] sm:$0xff]
      %v1199 = vld [vmem:[%s1 + $0x478] sm:$0xff]
      %1200 = vmatprep.subr.mxu0 0.0
      %1201 = vmatpush1.msra.mxu0 %v1056
      %1202 = vmatprep.subr.mxu0 0.0
      %1203 = vmatpush1.msra.mxu0 %v1057
      %1204 = vmatprep.subr.mxu0 0.0
      %1205 = vmatpush1.msra.mxu0 %v1058
      %1206 = vmatprep.subr.mxu0 0.0
      %1207 = vmatpush1.msra.mxu0 %v1059
      %1208 = vmatprep.subr.mxu0 0.0
      %1209 = vmatpush1.msra.mxu0 %v1060
      %1210 = vmatprep.subr.mxu0 0.0
      %1211 = vmatpush1.msra.mxu0 %v1061
      %1212 = vmatprep.subr.mxu0 0.0
      %1213 = vmatpush1.msra.mxu0 %v1062
      %1214 = vmatprep.subr.mxu0 0.0
      %1215 = vmatpush1.msra.mxu0 %v1063
      %1216 = vmatprep.subr.mxu0 0.0
      %1217 = vmatpush1.msra.mxu0 %v1064
      %1218 = vmatprep.subr.mxu0 0.0
      %1219 = vmatpush1.msra.mxu0 %v1065
      %1220 = vmatprep.subr.mxu0 0.0
      %1221 = vmatpush1.msra.mxu0 %v1066
      %1222 = vmatprep.subr.mxu0 0.0
      %1223 = vmatpush1.msra.mxu0 %v1067
      %1224 = vmatprep.subr.mxu0 0.0
      %1225 = vmatpush1.msra.mxu0 %v1068
      %1226 = vmatprep.subr.mxu0 0.0
      %1227 = vmatpush1.msra.mxu0 %v1069
      %1228 = vmatprep.subr.mxu0 0.0
      %1229 = vmatpush1.msra.mxu0 %v1070
      %1230 = vmatprep.subr.mxu0 0.0
      %1231 = vmatpush1.msra.mxu0 %v1071
      %1232 = vmatprep.subr.mxu0 0.0
      %1233 = vmatpush1.msra.mxu0 %v1072
      %1234 = vmatprep.subr.mxu0 0.0
      %1235 = vmatpush1.msra.mxu0 %v1073
      %1236 = vmatprep.subr.mxu0 0.0
      %1237 = vmatpush1.msra.mxu0 %v1074
      %1238 = vmatprep.subr.mxu0 0.0
      %1239 = vmatpush1.msra.mxu0 %v1075
      %1240 = vmatprep.subr.mxu0 0.0
      %1241 = vmatpush1.msra.mxu0 %v1076
      %1242 = vmatprep.subr.mxu0 0.0
      %1243 = vmatpush1.msra.mxu0 %v1077
      %1244 = vmatprep.subr.mxu0 0.0
      %1245 = vmatpush1.msra.mxu0 %v1078
      %1246 = vmatprep.subr.mxu0 0.0
      %1247 = vmatpush1.msra.mxu0 %v1079
      %1248 = vmatprep.subr.mxu0 0.0
      %1249 = vmatpush1.msra.mxu0 %v1080
      %1250 = vmatprep.subr.mxu0 0.0
      %1251 = vmatpush1.msra.mxu0 %v1081
      %1252 = vmatprep.subr.mxu0 0.0
      %1253 = vmatpush1.msra.mxu0 %v1082
      %1254 = vmatprep.subr.mxu0 0.0
      %1255 = vmatpush1.msra.mxu0 %v1083
      %1256 = vmatprep.subr.mxu0 0.0
      %1257 = vmatpush1.msra.mxu0 %v1084
      %1258 = vmatprep.subr.mxu0 0.0
      %1259 = vmatpush1.msra.mxu0 %v1085
      %1260 = vmatprep.subr.mxu0 0.0
      %1261 = vmatpush1.msra.mxu0 %v1086
      %1262 = vmatprep.subr.mxu0 0.0
      %1263 = vmatpush1.msra.mxu0 %v1087
      %1264 = vmatprep.mubr.f32.mxu0 %v799
      %1265 = vmatmul.mubr.f32.gmra.mrb[0].mxu0 %v694
      %v1266 = vpop.f32.mrb[0].mxu0
      %v1267 = vadd.f32 0.0, %v1266
      %v1268 = vpop.f32.mrb[0].mxu0
      %1269 = vmatprep.mubr.f32.mxu0 %v801
      %1270 = vmatmul.mubr.f32.gmra.mrb[0].mxu0 %v695
      %v1271 = vpop.f32.mrb[0].mxu0
      %v1272 = vadd.f32 0.0, %v1271
      %v1273 = vpop.f32.mrb[0].mxu0
      %1274 = vmatprep.mubr.f32.mxu0 %v804
      %1275 = vmatmul.mubr.f32.gmra.mrb[0].mxu0 %v697
      %v1276 = vpop.f32.mrb[0].mxu0
      %v1277 = vadd.f32 0.0, %v1276
      %v1278 = vpop.f32.mrb[0].mxu0
      %1279 = vmatprep.mubr.f32.mxu0 %v806
      %1280 = vmatmul.mubr.f32.gmra.mrb[0].mxu0 %v698
      %v1281 = vpop.f32.mrb[0].mxu0
      %v1282 = vadd.f32 0.0, %v1281
      %v1283 = vpop.f32.mrb[0].mxu0
      %1284 = vmatprep.mubr.f32.mxu0 %v809
      %1285 = vmatmul.mubr.f32.gmra.mrb[0].mxu0 %v700
      %v1286 = vpop.f32.mrb[0].mxu0
      %v1287 = vadd.f32 0.0, %v1286
      %v1288 = vpop.f32.mrb[0].mxu0
      %1289 = vmatprep.mubr.f32.mxu0 %v811
      %1290 = vmatmul.mubr.f32.gmra.mrb[0].mxu0 %v701
      %v1291 = vpop.f32.mrb[0].mxu0
      %v1292 = vadd.f32 0.0, %v1291
      %v1293 = vpop.f32.mrb[0].mxu0
      %1294 = vmatprep.mubr.f32.mxu0 %v814
      %1295 = vmatmul.mubr.f32.gmra.mrb[0].mxu0 %v703
      %v1296 = vpop.f32.mrb[0].mxu0
      %v1297 = vadd.f32 0.0, %v1296
      %v1298 = vpop.f32.mrb[0].mxu0
      %1299 = vmatprep.mubr.f32.mxu0 %v816
      %1300 = vmatmul.mubr.f32.gmra.mrb[0].mxu0 %v704
      %v1301 = vpop.f32.mrb[0].mxu0
      %v1302 = vadd.f32 0.0, %v1301
      %v1303 = vpop.f32.mrb[0].mxu0
      %1304 = vmatprep.mubr.f32.mxu0 %v819
      %1305 = vmatmul.mubr.f32.gmra.mrb[0].mxu0 %v706
      %v1306 = vpop.f32.mrb[0].mxu0
      %v1307 = vadd.f32 0.0, %v1306
      %v1308 = vpop.f32.mrb[0].mxu0
      %1309 = vmatprep.mubr.f32.mxu0 %v821
      %1310 = vmatmul.mubr.f32.gmra.mrb[0].mxu0 %v707
      %v1311 = vpop.f32.mrb[0].mxu0
      %v1312 = vadd.f32 0.0, %v1311
      %v1313 = vpop.f32.mrb[0].mxu0
      %1314 = vmatprep.mubr.f32.mxu0 %v824
      %1315 = vmatmul.mubr.f32.gmra.mrb[0].mxu0 %v709
      %v1316 = vpop.f32.mrb[0].mxu0
      %v1317 = vadd.f32 0.0, %v1316
      %v1318 = vpop.f32.mrb[0].mxu0
      %1319 = vmatprep.mubr.f32.mxu0 %v826
      %1320 = vmatmul.mubr.f32.gmra.mrb[0].mxu0 %v710
      %v1321 = vpop.f32.mrb[0].mxu0
      %v1322 = vadd.f32 0.0, %v1321
      %v1323 = vpop.f32.mrb[0].mxu0
      %1324 = vmatprep.mubr.f32.mxu0 %v829
      %1325 = vmatmul.mubr.f32.gmra.mrb[0].mxu0 %v712
      %v1326 = vpop.f32.mrb[0].mxu0
      %v1327 = vadd.f32 0.0, %v1326
      %v1328 = vpop.f32.mrb[0].mxu0
      %1329 = vmatprep.mubr.f32.mxu0 %v831
      %1330 = vmatmul.mubr.f32.gmra.mrb[0].mxu0 %v713
      %v1331 = vpop.f32.mrb[0].mxu0
      %v1332 = vadd.f32 0.0, %v1331
      %v1333 = vpop.f32.mrb[0].mxu0
      %1334 = vmatprep.mubr.f32.mxu0 %v834
      %1335 = vmatmul.mubr.f32.gmra.mrb[0].mxu0 %v715
      %v1336 = vpop.f32.mrb[0].mxu0
      %v1337 = vadd.f32 0.0, %v1336
      %v1338 = vpop.f32.mrb[0].mxu0
      %1339 = vmatprep.mubr.f32.mxu0 %v836
      %1340 = vmatmul.mubr.f32.gmra.mrb[0].mxu0 %v716
      %v1341 = vpop.f32.mrb[0].mxu0
      %v1342 = vadd.f32 0.0, %v1341
      %v1343 = vpop.f32.mrb[0].mxu0
      %1344 = vmatprep.mubr.f32.mxu0 %v839
      %1345 = vmatmul.mubr.f32.gmra.mrb[0].mxu0 %v718
      %v1346 = vpop.f32.mrb[0].mxu0
      %v1347 = vadd.f32 0.0, %v1346
      %v1348 = vpop.f32.mrb[0].mxu0
      %1349 = vmatprep.mubr.f32.mxu0 %v841
      %1350 = vmatmul.mubr.f32.gmra.mrb[0].mxu0 %v719
      %v1351 = vpop.f32.mrb[0].mxu0
      %v1352 = vadd.f32 0.0, %v1351
      %v1353 = vpop.f32.mrb[0].mxu0
      %1354 = vmatprep.mubr.f32.mxu0 %v844
      %1355 = vmatmul.mubr.f32.gmra.mrb[0].mxu0 %v721
      %v1356 = vpop.f32.mrb[0].mxu0
      %v1357 = vadd.f32 0.0, %v1356
      %v1358 = vpop.f32.mrb[0].mxu0
      %1359 = vmatprep.mubr.f32.mxu0 %v846
      %1360 = vmatmul.mubr.f32.gmra.mrb[0].mxu0 %v722
      %v1361 = vpop.f32.mrb[0].mxu0
      %v1362 = vadd.f32 0.0, %v1361
      %v1363 = vpop.f32.mrb[0].mxu0
      %1364 = vmatprep.mubr.f32.mxu0 %v849
      %1365 = vmatmul.mubr.f32.gmra.mrb[0].mxu0 %v724
      %v1366 = vpop.f32.mrb[0].mxu0
      %v1367 = vadd.f32 0.0, %v1366
      %v1368 = vpop.f32.mrb[0].mxu0
      %1369 = vmatprep.mubr.f32.mxu0 %v851
      %1370 = vmatmul.mubr.f32.gmra.mrb[0].mxu0 %v725
      %v1371 = vpop.f32.mrb[0].mxu0
      %v1372 = vadd.f32 0.0, %v1371
      %v1373 = vpop.f32.mrb[0].mxu0
      %1374 = vmatprep.mubr.f32.mxu0 %v854
      %1375 = vmatmul.mubr.f32.gmra.mrb[0].mxu0 %v727
      %v1376 = vpop.f32.mrb[0].mxu0
      %v1377 = vadd.f32 0.0, %v1376
      %v1378 = vpop.f32.mrb[0].mxu0
      %1379 = vmatprep.mubr.f32.mxu0 %v856
      %1380 = vmatmul.mubr.f32.gmra.mrb[0].mxu0 %v728
      %v1381 = vpop.f32.mrb[0].mxu0
      %v1382 = vadd.f32 0.0, %v1381
      %v1383 = vpop.f32.mrb[0].mxu0
      %1384 = vmatprep.mubr.f32.mxu0 %v859
      %1385 = vmatmul.mubr.f32.gmra.mrb[0].mxu0 %v730
      %v1386 = vpop.f32.mrb[0].mxu0
      %v1387 = vadd.f32 0.0, %v1386
      %v1388 = vpop.f32.mrb[0].mxu0
      %1389 = vmatprep.mubr.f32.mxu0 %v861
      %1390 = vmatmul.mubr.f32.gmra.mrb[0].mxu0 %v731
      %v1391 = vpop.f32.mrb[0].mxu0
      %v1392 = vadd.f32 0.0, %v1391
      %v1393 = vpop.f32.mrb[0].mxu0
      %1394 = vmatprep.mubr.f32.mxu0 %v864
      %1395 = vmatmul.mubr.f32.gmra.mrb[0].mxu0 %v733
      %v1396 = vpop.f32.mrb[0].mxu0
      %v1397 = vadd.f32 0.0, %v1396
      %v1398 = vpop.f32.mrb[0].mxu0
      %1399 = vmatprep.mubr.f32.mxu0 %v866
      %1400 = vmatmul.mubr.f32.gmra.mrb[0].mxu0 %v734
      %v1401 = vpop.f32.mrb[0].mxu0
      %v1402 = vadd.f32 0.0, %v1401
      %v1403 = vpop.f32.mrb[0].mxu0
      %1404 = vmatprep.mubr.f32.mxu0 %v869
      %1405 = vmatmul.mubr.f32.gmra.mrb[0].mxu0 %v736
      %v1406 = vpop.f32.mrb[0].mxu0
      %v1407 = vadd.f32 0.0, %v1406
      %v1408 = vpop.f32.mrb[0].mxu0
      %1409 = vmatprep.mubr.f32.mxu0 %v871
      %1410 = vmatmul.mubr.f32.gmra.mrb[0].mxu0 %v737
      %v1411 = vpop.f32.mrb[0].mxu0
      %v1412 = vadd.f32 0.0, %v1411
      %v1413 = vpop.f32.mrb[0].mxu0
      %1414 = vmatprep.mubr.f32.mxu0 %v874
      %1415 = vmatmul.mubr.f32.gmra.mrb[0].mxu0 %v739
      %v1416 = vpop.f32.mrb[0].mxu0
      %v1417 = vadd.f32 0.0, %v1416
      %v1418 = vpop.f32.mrb[0].mxu0
      %1419 = vmatprep.mubr.f32.mxu0 %v876
      %1420 = vmatmul.mubr.f32.gmra.mrb[0].mxu0 %v740
      %v1421 = vpop.f32.mrb[0].mxu0
      %v1422 = vadd.f32 0.0, %v1421
      %v1423 = vpop.f32.mrb[0].mxu0
      %1424 = vdwg.mxu0
      %1425 = vmatprep.subr.mxu0 0.0
      %1426 = vmatpush1.msra.mxu0 %v1088
      %1427 = vmatprep.subr.mxu0 0.0
      %1428 = vmatpush1.msra.mxu0 %v1089
      %1429 = vmatprep.subr.mxu0 0.0
      %1430 = vmatpush1.msra.mxu0 %v1090
      %1431 = vmatprep.subr.mxu0 0.0
      %1432 = vmatpush1.msra.mxu0 %v1091
      %1433 = vmatprep.subr.mxu0 0.0
      %1434 = vmatpush1.msra.mxu0 %v1092
      %1435 = vmatprep.subr.mxu0 0.0
      %1436 = vmatpush1.msra.mxu0 %v1093
      %1437 = vmatprep.subr.mxu0 0.0
      %1438 = vmatpush1.msra.mxu0 %v1094
      %1439 = vmatprep.subr.mxu0 0.0
      %1440 = vmatpush1.msra.mxu0 %v1095
      %1441 = vmatprep.subr.mxu0 0.0
      %1442 = vmatpush1.msra.mxu0 %v1096
      %1443 = vmatprep.subr.mxu0 0.0
      %1444 = vmatpush1.msra.mxu0 %v1097
      %1445 = vmatprep.subr.mxu0 0.0
      %1446 = vmatpush1.msra.mxu0 %v1098
      %1447 = vmatprep.subr.mxu0 0.0
      %1448 = vmatpush1.msra.mxu0 %v1099
      %1449 = vmatprep.subr.mxu0 0.0
      %1450 = vmatpush1.msra.mxu0 %v1100
      %1451 = vmatprep.subr.mxu0 0.0
      %1452 = vmatpush1.msra.mxu0 %v1101
      %1453 = vmatprep.subr.mxu0 0.0
      %1454 = vmatpush1.msra.mxu0 %v1102
      %1455 = vmatprep.subr.mxu0 0.0
      %1456 = vmatpush1.msra.mxu0 %v1103
      %1457 = vmatprep.subr.mxu0 0.0
      %1458 = vmatpush1.msra.mxu0 %v1104
      %1459 = vmatprep.subr.mxu0 0.0
      %1460 = vmatpush1.msra.mxu0 %v1105
      %1461 = vmatprep.subr.mxu0 0.0
      %1462 = vmatpush1.msra.mxu0 %v1106
      %1463 = vmatprep.subr.mxu0 0.0
      %1464 = vmatpush1.msra.mxu0 %v1107
      %1465 = vmatprep.subr.mxu0 0.0
      %1466 = vmatpush1.msra.mxu0 %v1108
      %1467 = vmatprep.subr.mxu0 0.0
      %1468 = vmatpush1.msra.mxu0 %v1109
      %1469 = vmatprep.subr.mxu0 0.0
      %1470 = vmatpush1.msra.mxu0 %v1110
      %1471 = vmatprep.subr.mxu0 0.0
      %1472 = vmatpush1.msra.mxu0 %v1111
      %1473 = vmatprep.subr.mxu0 0.0
      %1474 = vmatpush1.msra.mxu0 %v1112
      %1475 = vmatprep.subr.mxu0 0.0
      %1476 = vmatpush1.msra.mxu0 %v1113
      %1477 = vmatprep.subr.mxu0 0.0
      %1478 = vmatpush1.msra.mxu0 %v1114
      %1479 = vmatprep.subr.mxu0 0.0
      %1480 = vmatpush1.msra.mxu0 %v1115
      %1481 = vmatprep.subr.mxu0 0.0
      %1482 = vmatpush1.msra.mxu0 %v1116
      %1483 = vmatprep.subr.mxu0 0.0
      %1484 = vmatpush1.msra.mxu0 %v1117
      %1485 = vmatprep.subr.mxu0 0.0
      %1486 = vmatpush1.msra.mxu0 %v1118
      %1487 = vmatprep.subr.mxu0 0.0
      %1488 = vmatpush1.msra.mxu0 %v1119
      %1489 = vmatprep.mubr.f32.mxu0 %v697
      %1490 = vmatmul.mubr.f32.gmra.mrb[0].mxu0 %v912
      %v1491 = vpop.f32.mrb[0].mxu0
      %v1492 = vadd.f32 %v1267, %v1491
      %v1493 = vpop.f32.mrb[0].mxu0
      %1494 = vmatprep.mubr.f32.mxu0 %v698
      %1495 = vmatmul.mubr.f32.gmra.mrb[0].mxu0 %v914
      %v1496 = vpop.f32.mrb[0].mxu0
      %v1497 = vadd.f32 %v1272, %v1496
      %v1498 = vpop.f32.mrb[0].mxu0
      %1499 = vmatprep.mubr.f32.mxu0 %v700
      %1500 = vmatmul.mubr.f32.gmra.mrb[0].mxu0 %v917
      %v1501 = vpop.f32.mrb[0].mxu0
      %v1502 = vadd.f32 %v1277, %v1501
      %v1503 = vpop.f32.mrb[0].mxu0
      %1504 = vmatprep.mubr.f32.mxu0 %v701
      %1505 = vmatmul.mubr.f32.gmra.mrb[0].mxu0 %v919
      %v1506 = vpop.f32.mrb[0].mxu0
      %v1507 = vadd.f32 %v1282, %v1506
      %v1508 = vpop.f32.mrb[0].mxu0
      %1509 = vmatprep.mubr.f32.mxu0 %v703
      %1510 = vmatmul.mubr.f32.gmra.mrb[0].mxu0 %v922
      %v1511 = vpop.f32.mrb[0].mxu0
      %v1512 = vadd.f32 %v1287, %v1511
      %v1513 = vpop.f32.mrb[0].mxu0
      %1514 = vmatprep.mubr.f32.mxu0 %v704
      %1515 = vmatmul.mubr.f32.gmra.mrb[0].mxu0 %v924
      %v1516 = vpop.f32.mrb[0].mxu0
      %v1517 = vadd.f32 %v1292, %v1516
      %v1518 = vpop.f32.mrb[0].mxu0
      %1519 = vmatprep.mubr.f32.mxu0 %v706
      %1520 = vmatmul.mubr.f32.gmra.mrb[0].mxu0 %v927
      %v1521 = vpop.f32.mrb[0].mxu0
      %v1522 = vadd.f32 %v1297, %v1521
      %v1523 = vpop.f32.mrb[0].mxu0
      %1524 = vmatprep.mubr.f32.mxu0 %v707
      %1525 = vmatmul.mubr.f32.gmra.mrb[0].mxu0 %v929
      %v1526 = vpop.f32.mrb[0].mxu0
      %v1527 = vadd.f32 %v1302, %v1526
      %v1528 = vpop.f32.mrb[0].mxu0
      %1529 = vmatprep.mubr.f32.mxu0 %v709
      %1530 = vmatmul.mubr.f32.gmra.mrb[0].mxu0 %v932
      %v1531 = vpop.f32.mrb[0].mxu0
      %v1532 = vadd.f32 %v1307, %v1531
      %v1533 = vpop.f32.mrb[0].mxu0
      %1534 = vmatprep.mubr.f32.mxu0 %v710
      %1535 = vmatmul.mubr.f32.gmra.mrb[0].mxu0 %v934
      %v1536 = vpop.f32.mrb[0].mxu0
      %v1537 = vadd.f32 %v1312, %v1536
      %v1538 = vpop.f32.mrb[0].mxu0
      %1539 = vmatprep.mubr.f32.mxu0 %v712
      %1540 = vmatmul.mubr.f32.gmra.mrb[0].mxu0 %v937
      %v1541 = vpop.f32.mrb[0].mxu0
      %v1542 = vadd.f32 %v1317, %v1541
      %v1543 = vpop.f32.mrb[0].mxu0
      %1544 = vmatprep.mubr.f32.mxu0 %v713
      %1545 = vmatmul.mubr.f32.gmra.mrb[0].mxu0 %v939
      %v1546 = vpop.f32.mrb[0].mxu0
      %v1547 = vadd.f32 %v1322, %v1546
      %v1548 = vpop.f32.mrb[0].mxu0
      %1549 = vmatprep.mubr.f32.mxu0 %v715
      %1550 = vmatmul.mubr.f32.gmra.mrb[0].mxu0 %v942
      %v1551 = vpop.f32.mrb[0].mxu0
      %v1552 = vadd.f32 %v1327, %v1551
      %v1553 = vpop.f32.mrb[0].mxu0
      %1554 = vmatprep.mubr.f32.mxu0 %v716
      %1555 = vmatmul.mubr.f32.gmra.mrb[0].mxu0 %v944
      %v1556 = vpop.f32.mrb[0].mxu0
      %v1557 = vadd.f32 %v1332, %v1556
      %v1558 = vpop.f32.mrb[0].mxu0
      %1559 = vmatprep.mubr.f32.mxu0 %v718
      %1560 = vmatmul.mubr.f32.gmra.mrb[0].mxu0 %v947
      %v1561 = vpop.f32.mrb[0].mxu0
      %v1562 = vadd.f32 %v1337, %v1561
      %v1563 = vpop.f32.mrb[0].mxu0
      %1564 = vmatprep.mubr.f32.mxu0 %v719
      %1565 = vmatmul.mubr.f32.gmra.mrb[0].mxu0 %v949
      %v1566 = vpop.f32.mrb[0].mxu0
      %v1567 = vadd.f32 %v1342, %v1566
      %v1568 = vpop.f32.mrb[0].mxu0
      %1569 = vmatprep.mubr.f32.mxu0 %v721
      %1570 = vmatmul.mubr.f32.gmra.mrb[0].mxu0 %v952
      %v1571 = vpop.f32.mrb[0].mxu0
      %v1572 = vadd.f32 %v1347, %v1571
      %v1573 = vpop.f32.mrb[0].mxu0
      %1574 = vmatprep.mubr.f32.mxu0 %v722
      %1575 = vmatmul.mubr.f32.gmra.mrb[0].mxu0 %v954
      %v1576 = vpop.f32.mrb[0].mxu0
      %v1577 = vadd.f32 %v1352, %v1576
      %v1578 = vpop.f32.mrb[0].mxu0
      %1579 = vmatprep.mubr.f32.mxu0 %v724
      %1580 = vmatmul.mubr.f32.gmra.mrb[0].mxu0 %v957
      %v1581 = vpop.f32.mrb[0].mxu0
      %v1582 = vadd.f32 %v1357, %v1581
      %v1583 = vpop.f32.mrb[0].mxu0
      %1584 = vmatprep.mubr.f32.mxu0 %v725
      %1585 = vmatmul.mubr.f32.gmra.mrb[0].mxu0 %v959
      %v1586 = vpop.f32.mrb[0].mxu0
      %v1587 = vadd.f32 %v1362, %v1586
      %v1588 = vpop.f32.mrb[0].mxu0
      %1589 = vmatprep.mubr.f32.mxu0 %v727
      %1590 = vmatmul.mubr.f32.gmra.mrb[0].mxu0 %v962
      %v1591 = vpop.f32.mrb[0].mxu0
      %v1592 = vadd.f32 %v1367, %v1591
      %v1593 = vpop.f32.mrb[0].mxu0
      %1594 = vmatprep.mubr.f32.mxu0 %v728
      %1595 = vmatmul.mubr.f32.gmra.mrb[0].mxu0 %v964
      %v1596 = vpop.f32.mrb[0].mxu0
      %v1597 = vadd.f32 %v1372, %v1596
      %v1598 = vpop.f32.mrb[0].mxu0
      %1599 = vmatprep.mubr.f32.mxu0 %v730
      %1600 = vmatmul.mubr.f32.gmra.mrb[0].mxu0 %v967
      %v1601 = vpop.f32.mrb[0].mxu0
      %v1602 = vadd.f32 %v1377, %v1601
      %v1603 = vpop.f32.mrb[0].mxu0
      %1604 = vmatprep.mubr.f32.mxu0 %v731
      %1605 = vmatmul.mubr.f32.gmra.mrb[0].mxu0 %v969
      %v1606 = vpop.f32.mrb[0].mxu0
      %v1607 = vadd.f32 %v1382, %v1606
      %v1608 = vpop.f32.mrb[0].mxu0
      %1609 = vmatprep.mubr.f32.mxu0 %v733
      %1610 = vmatmul.mubr.f32.gmra.mrb[0].mxu0 %v972
      %v1611 = vpop.f32.mrb[0].mxu0
      %v1612 = vadd.f32 %v1387, %v1611
      %v1613 = vpop.f32.mrb[0].mxu0
      %1614 = vmatprep.mubr.f32.mxu0 %v734
      %1615 = vmatmul.mubr.f32.gmra.mrb[0].mxu0 %v974
      %v1616 = vpop.f32.mrb[0].mxu0
      %v1617 = vadd.f32 %v1392, %v1616
      %v1618 = vpop.f32.mrb[0].mxu0
      %1619 = vmatprep.mubr.f32.mxu0 %v736
      %1620 = vmatmul.mubr.f32.gmra.mrb[0].mxu0 %v977
      %v1621 = vpop.f32.mrb[0].mxu0
      %v1622 = vadd.f32 %v1397, %v1621
      %v1623 = vpop.f32.mrb[0].mxu0
      %1624 = vmatprep.mubr.f32.mxu0 %v737
      %1625 = vmatmul.mubr.f32.gmra.mrb[0].mxu0 %v979
      %v1626 = vpop.f32.mrb[0].mxu0
      %v1627 = vadd.f32 %v1402, %v1626
      %v1628 = vpop.f32.mrb[0].mxu0
      %1629 = vmatprep.mubr.f32.mxu0 %v739
      %1630 = vmatmul.mubr.f32.gmra.mrb[0].mxu0 %v982
      %v1631 = vpop.f32.mrb[0].mxu0
      %v1632 = vadd.f32 %v1407, %v1631
      %v1633 = vpop.f32.mrb[0].mxu0
      %1634 = vmatprep.mubr.f32.mxu0 %v740
      %1635 = vmatmul.mubr.f32.gmra.mrb[0].mxu0 %v984
      %v1636 = vpop.f32.mrb[0].mxu0
      %v1637 = vadd.f32 %v1412, %v1636
      %v1638 = vpop.f32.mrb[0].mxu0
      %1639 = vmatprep.mubr.f32.mxu0 %v742
      %1640 = vmatmul.mubr.f32.gmra.mrb[0].mxu0 %v987
      %v1641 = vpop.f32.mrb[0].mxu0
      %v1642 = vadd.f32 %v1417, %v1641
      %v1643 = vpop.f32.mrb[0].mxu0
      %1644 = vmatprep.mubr.f32.mxu0 %v743
      %1645 = vmatmul.mubr.f32.gmra.mrb[0].mxu0 %v989
      %v1646 = vpop.f32.mrb[0].mxu0
      %v1647 = vadd.f32 %v1422, %v1646
      %v1648 = vpop.f32.mrb[0].mxu0
      %1649 = vdwg.mxu0
      %1650 = vmatprep.subr.mxu0 0.0
      %1651 = vmatpush1.msra.mxu0 %v1120
      %1652 = vmatprep.subr.mxu0 0.0
      %1653 = vmatpush1.msra.mxu0 %v1121
      %1654 = vmatprep.subr.mxu0 0.0
      %1655 = vmatpush1.msra.mxu0 %v1122
      %1656 = vmatprep.subr.mxu0 0.0
      %1657 = vmatpush1.msra.mxu0 %v1123
      %1658 = vmatprep.subr.mxu0 0.0
      %1659 = vmatpush1.msra.mxu0 %v1124
      %1660 = vmatprep.subr.mxu0 0.0
      %1661 = vmatpush1.msra.mxu0 %v1125
      %1662 = vmatprep.subr.mxu0 0.0
      %1663 = vmatpush1.msra.mxu0 %v1126
      %1664 = vmatprep.subr.mxu0 0.0
      %1665 = vmatpush1.msra.mxu0 %v1127
      %1666 = vmatprep.subr.mxu0 0.0
      %1667 = vmatpush1.msra.mxu0 %v1128
      %1668 = vmatprep.subr.mxu0 0.0
      %1669 = vmatpush1.msra.mxu0 %v1129
      %1670 = vmatprep.subr.mxu0 0.0
      %1671 = vmatpush1.msra.mxu0 %v1130
      %1672 = vmatprep.subr.mxu0 0.0
      %1673 = vmatpush1.msra.mxu0 %v1131
      %1674 = vmatprep.subr.mxu0 0.0
      %1675 = vmatpush1.msra.mxu0 %v1132
      %1676 = vmatprep.subr.mxu0 0.0
      %1677 = vmatpush1.msra.mxu0 %v1133
      %1678 = vmatprep.subr.mxu0 0.0
      %1679 = vmatpush1.msra.mxu0 %v1134
      %1680 = vmatprep.subr.mxu0 0.0
      %1681 = vmatpush1.msra.mxu0 %v1135
      %1682 = vmatprep.subr.mxu0 0.0
      %1683 = vmatpush1.msra.mxu0 %v1136
      %1684 = vmatprep.subr.mxu0 0.0
      %1685 = vmatpush1.msra.mxu0 %v1137
      %1686 = vmatprep.subr.mxu0 0.0
      %1687 = vmatpush1.msra.mxu0 %v1138
      %1688 = vmatprep.subr.mxu0 0.0
      %1689 = vmatpush1.msra.mxu0 %v1139
      %1690 = vmatprep.subr.mxu0 0.0
      %1691 = vmatpush1.msra.mxu0 %v1140
      %1692 = vmatprep.subr.mxu0 0.0
      %1693 = vmatpush1.msra.mxu0 %v1141
      %1694 = vmatprep.subr.mxu0 0.0
      %1695 = vmatpush1.msra.mxu0 %v1142
      %1696 = vmatprep.subr.mxu0 0.0
      %1697 = vmatpush1.msra.mxu0 %v1143
      %1698 = vmatprep.subr.mxu0 0.0
      %1699 = vmatpush1.msra.mxu0 %v1144
      %1700 = vmatprep.subr.mxu0 0.0
      %1701 = vmatpush1.msra.mxu0 %v1145
      %1702 = vmatprep.subr.mxu0 0.0
      %1703 = vmatpush1.msra.mxu0 %v1146
      %1704 = vmatprep.subr.mxu0 0.0
      %1705 = vmatpush1.msra.mxu0 %v1147
      %1706 = vmatprep.subr.mxu0 0.0
      %1707 = vmatpush1.msra.mxu0 %v1148
      %1708 = vmatprep.subr.mxu0 0.0
      %1709 = vmatpush1.msra.mxu0 %v1149
      %1710 = vmatprep.subr.mxu0 0.0
      %1711 = vmatpush1.msra.mxu0 %v1150
      %1712 = vmatprep.subr.mxu0 0.0
      %1713 = vmatpush1.msra.mxu0 %v1151
      %1714 = vmatprep.mubr.f32.mxu0 %v917
      %1715 = vmatmul.mubr.f32.gmra.mrb[0].mxu0 %v804
      %v1716 = vpop.f32.mrb[0].mxu0
      %v1717 = vadd.f32 %v1492, %v1716
      %v1718 = vpop.f32.mrb[0].mxu0
      %1719 = vmatprep.mubr.f32.mxu0 %v919
      %1720 = vmatmul.mubr.f32.gmra.mrb[0].mxu0 %v806
      %v1721 = vpop.f32.mrb[0].mxu0
      %v1722 = vadd.f32 %v1497, %v1721
      %v1723 = vpop.f32.mrb[0].mxu0
      %1724 = vmatprep.mubr.f32.mxu0 %v922
      %1725 = vmatmul.mubr.f32.gmra.mrb[0].mxu0 %v809
      %v1726 = vpop.f32.mrb[0].mxu0
      %v1727 = vadd.f32 %v1502, %v1726
      %v1728 = vpop.f32.mrb[0].mxu0
      %1729 = vmatprep.mubr.f32.mxu0 %v924
      %1730 = vmatmul.mubr.f32.gmra.mrb[0].mxu0 %v811
      %v1731 = vpop.f32.mrb[0].mxu0
      %v1732 = vadd.f32 %v1507, %v1731
      %v1733 = vpop.f32.mrb[0].mxu0
      %1734 = vmatprep.mubr.f32.mxu0 %v927
      %1735 = vmatmul.mubr.f32.gmra.mrb[0].mxu0 %v814
      %v1736 = vpop.f32.mrb[0].mxu0
      %v1737 = vadd.f32 %v1512, %v1736
      %v1738 = vpop.f32.mrb[0].mxu0
      %1739 = vmatprep.mubr.f32.mxu0 %v929
      %1740 = vmatmul.mubr.f32.gmra.mrb[0].mxu0 %v816
      %v1741 = vpop.f32.mrb[0].mxu0
      %v1742 = vadd.f32 %v1517, %v1741
      %v1743 = vpop.f32.mrb[0].mxu0
      %1744 = vmatprep.mubr.f32.mxu0 %v932
      %1745 = vmatmul.mubr.f32.gmra.mrb[0].mxu0 %v819
      %v1746 = vpop.f32.mrb[0].mxu0
      %v1747 = vadd.f32 %v1522, %v1746
      %v1748 = vpop.f32.mrb[0].mxu0
      %1749 = vmatprep.mubr.f32.mxu0 %v934
      %1750 = vmatmul.mubr.f32.gmra.mrb[0].mxu0 %v821
      %v1751 = vpop.f32.mrb[0].mxu0
      %v1752 = vadd.f32 %v1527, %v1751
      %v1753 = vpop.f32.mrb[0].mxu0
      %1754 = vmatprep.mubr.f32.mxu0 %v937
      %1755 = vmatmul.mubr.f32.gmra.mrb[0].mxu0 %v824
      %v1756 = vpop.f32.mrb[0].mxu0
      %v1757 = vadd.f32 %v1532, %v1756
      %v1758 = vpop.f32.mrb[0].mxu0
      %1759 = vmatprep.mubr.f32.mxu0 %v939
      %1760 = vmatmul.mubr.f32.gmra.mrb[0].mxu0 %v826
      %v1761 = vpop.f32.mrb[0].mxu0
      %v1762 = vadd.f32 %v1537, %v1761
      %v1763 = vpop.f32.mrb[0].mxu0
      %1764 = vmatprep.mubr.f32.mxu0 %v942
      %1765 = vmatmul.mubr.f32.gmra.mrb[0].mxu0 %v829
      %v1766 = vpop.f32.mrb[0].mxu0
      %v1767 = vadd.f32 %v1542, %v1766
      %v1768 = vpop.f32.mrb[0].mxu0
      %1769 = vmatprep.mubr.f32.mxu0 %v944
      %1770 = vmatmul.mubr.f32.gmra.mrb[0].mxu0 %v831
      %v1771 = vpop.f32.mrb[0].mxu0
      %v1772 = vadd.f32 %v1547, %v1771
      %v1773 = vpop.f32.mrb[0].mxu0
      %1774 = vmatprep.mubr.f32.mxu0 %v947
      %1775 = vmatmul.mubr.f32.gmra.mrb[0].mxu0 %v834
      %v1776 = vpop.f32.mrb[0].mxu0
      %v1777 = vadd.f32 %v1552, %v1776
      %v1778 = vpop.f32.mrb[0].mxu0
      %1779 = vmatprep.mubr.f32.mxu0 %v949
      %1780 = vmatmul.mubr.f32.gmra.mrb[0].mxu0 %v836
      %v1781 = vpop.f32.mrb[0].mxu0
      %v1782 = vadd.f32 %v1557, %v1781
      %v1783 = vpop.f32.mrb[0].mxu0
      %1784 = vmatprep.mubr.f32.mxu0 %v952
      %1785 = vmatmul.mubr.f32.gmra.mrb[0].mxu0 %v839
      %v1786 = vpop.f32.mrb[0].mxu0
      %v1787 = vadd.f32 %v1562, %v1786
      %v1788 = vpop.f32.mrb[0].mxu0
      %1789 = vmatprep.mubr.f32.mxu0 %v954
      %1790 = vmatmul.mubr.f32.gmra.mrb[0].mxu0 %v841
      %v1791 = vpop.f32.mrb[0].mxu0
      %v1792 = vadd.f32 %v1567, %v1791
      %v1793 = vpop.f32.mrb[0].mxu0
      %1794 = vmatprep.mubr.f32.mxu0 %v957
      %1795 = vmatmul.mubr.f32.gmra.mrb[0].mxu0 %v844
      %v1796 = vpop.f32.mrb[0].mxu0
      %v1797 = vadd.f32 %v1572, %v1796
      %v1798 = vpop.f32.mrb[0].mxu0
      %1799 = vmatprep.mubr.f32.mxu0 %v959
      %1800 = vmatmul.mubr.f32.gmra.mrb[0].mxu0 %v846
      %v1801 = vpop.f32.mrb[0].mxu0
      %v1802 = vadd.f32 %v1577, %v1801
      %v1803 = vpop.f32.mrb[0].mxu0
      %1804 = vmatprep.mubr.f32.mxu0 %v962
      %1805 = vmatmul.mubr.f32.gmra.mrb[0].mxu0 %v849
      %v1806 = vpop.f32.mrb[0].mxu0
      %v1807 = vadd.f32 %v1582, %v1806
      %v1808 = vpop.f32.mrb[0].mxu0
      %1809 = vmatprep.mubr.f32.mxu0 %v964
      %1810 = vmatmul.mubr.f32.gmra.mrb[0].mxu0 %v851
      %v1811 = vpop.f32.mrb[0].mxu0
      %v1812 = vadd.f32 %v1587, %v1811
      %v1813 = vpop.f32.mrb[0].mxu0
      %1814 = vmatprep.mubr.f32.mxu0 %v967
      %1815 = vmatmul.mubr.f32.gmra.mrb[0].mxu0 %v854
      %v1816 = vpop.f32.mrb[0].mxu0
      %v1817 = vadd.f32 %v1592, %v1816
      %v1818 = vpop.f32.mrb[0].mxu0
      %1819 = vmatprep.mubr.f32.mxu0 %v969
      %1820 = vmatmul.mubr.f32.gmra.mrb[0].mxu0 %v856
      %v1821 = vpop.f32.mrb[0].mxu0
      %v1822 = vadd.f32 %v1597, %v1821
      %v1823 = vpop.f32.mrb[0].mxu0
      %1824 = vmatprep.mubr.f32.mxu0 %v972
      %1825 = vmatmul.mubr.f32.gmra.mrb[0].mxu0 %v859
      %v1826 = vpop.f32.mrb[0].mxu0
      %v1827 = vadd.f32 %v1602, %v1826
      %v1828 = vpop.f32.mrb[0].mxu0
      %1829 = vmatprep.mubr.f32.mxu0 %v974
      %1830 = vmatmul.mubr.f32.gmra.mrb[0].mxu0 %v861
      %v1831 = vpop.f32.mrb[0].mxu0
      %v1832 = vadd.f32 %v1607, %v1831
      %v1833 = vpop.f32.mrb[0].mxu0
      %1834 = vmatprep.mubr.f32.mxu0 %v977
      %1835 = vmatmul.mubr.f32.gmra.mrb[0].mxu0 %v864
      %v1836 = vpop.f32.mrb[0].mxu0
      %v1837 = vadd.f32 %v1612, %v1836
      %v1838 = vpop.f32.mrb[0].mxu0
      %1839 = vmatprep.mubr.f32.mxu0 %v979
      %1840 = vmatmul.mubr.f32.gmra.mrb[0].mxu0 %v866
      %v1841 = vpop.f32.mrb[0].mxu0
      %v1842 = vadd.f32 %v1617, %v1841
      %v1843 = vpop.f32.mrb[0].mxu0
      %1844 = vmatprep.mubr.f32.mxu0 %v982
      %1845 = vmatmul.mubr.f32.gmra.mrb[0].mxu0 %v869
      %v1846 = vpop.f32.mrb[0].mxu0
      %v1847 = vadd.f32 %v1622, %v1846
      %v1848 = vpop.f32.mrb[0].mxu0
      %1849 = vmatprep.mubr.f32.mxu0 %v984
      %1850 = vmatmul.mubr.f32.gmra.mrb[0].mxu0 %v871
      %v1851 = vpop.f32.mrb[0].mxu0
      %v1852 = vadd.f32 %v1627, %v1851
      %v1853 = vpop.f32.mrb[0].mxu0
      %1854 = vmatprep.mubr.f32.mxu0 %v987
      %1855 = vmatmul.mubr.f32.gmra.mrb[0].mxu0 %v874
      %v1856 = vpop.f32.mrb[0].mxu0
      %v1857 = vadd.f32 %v1632, %v1856
      %v1858 = vpop.f32.mrb[0].mxu0
      %1859 = vmatprep.mubr.f32.mxu0 %v989
      %1860 = vmatmul.mubr.f32.gmra.mrb[0].mxu0 %v876
      %v1861 = vpop.f32.mrb[0].mxu0
      %v1862 = vadd.f32 %v1637, %v1861
      %v1863 = vpop.f32.mrb[0].mxu0
      %1864 = vmatprep.mubr.f32.mxu0 %v1034
      %1865 = vmatmul.mubr.f32.gmra.mrb[0].mxu0 %v1027
      %v1866 = vpop.f32.mrb[0].mxu0
      %v1867 = vadd.f32 %v1642, %v1866
      %v1868 = vpop.f32.mrb[0].mxu0
      %1869 = vmatprep.mubr.f32.mxu0 %v1036
      %1870 = vmatmul.mubr.f32.gmra.mrb[0].mxu0 %v1029
      %v1871 = vpop.f32.mrb[0].mxu0
      %v1872 = vadd.f32 %v1647, %v1871
      %v1873 = vpop.f32.mrb[0].mxu0
      %1874 = vdwg.mxu0
      %1875 = vmatprep.subr.mxu0 0.0
      %1876 = vmatpush1.msra.mxu0 %v1152
      %1877 = vmatprep.subr.mxu0 0.0
      %1878 = vmatpush1.msra.mxu0 %v1153
      %1879 = vmatprep.subr.mxu0 0.0
      %1880 = vmatpush1.msra.mxu0 %v1154
      %1881 = vmatprep.subr.mxu0 0.0
      %1882 = vmatpush1.msra.mxu0 %v1155
      %1883 = vmatprep.subr.mxu0 0.0
      %1884 = vmatpush1.msra.mxu0 %v1156
      %1885 = vmatprep.subr.mxu0 0.0
      %1886 = vmatpush1.msra.mxu0 %v1157
      %1887 = vmatprep.subr.mxu0 0.0
      %1888 = vmatpush1.msra.mxu0 %v1158
      %1889 = vmatprep.subr.mxu0 0.0
      %1890 = vmatpush1.msra.mxu0 %v1159
      %1891 = vmatprep.subr.mxu0 0.0
      %1892 = vmatpush1.msra.mxu0 %v1160
      %1893 = vmatprep.subr.mxu0 0.0
      %1894 = vmatpush1.msra.mxu0 %v1161
      %1895 = vmatprep.subr.mxu0 0.0
      %1896 = vmatpush1.msra.mxu0 %v1162
      %1897 = vmatprep.subr.mxu0 0.0
      %1898 = vmatpush1.msra.mxu0 %v1163
      %1899 = vmatprep.subr.mxu0 0.0
      %1900 = vmatpush1.msra.mxu0 %v1164
      %1901 = vmatprep.subr.mxu0 0.0
      %1902 = vmatpush1.msra.mxu0 %v1165
      %1903 = vmatprep.subr.mxu0 0.0
      %1904 = vmatpush1.msra.mxu0 %v1166
      %1905 = vmatprep.subr.mxu0 0.0
      %1906 = vmatpush1.msra.mxu0 %v1167
      %1907 = vmatprep.subr.mxu0 0.0
      %1908 = vmatpush1.msra.mxu0 %v1168
      %1909 = vmatprep.subr.mxu0 0.0
      %1910 = vmatpush1.msra.mxu0 %v1169
      %1911 = vmatprep.subr.mxu0 0.0
      %1912 = vmatpush1.msra.mxu0 %v1170
      %1913 = vmatprep.subr.mxu0 0.0
      %1914 = vmatpush1.msra.mxu0 %v1171
      %1915 = vmatprep.subr.mxu0 0.0
      %1916 = vmatpush1.msra.mxu0 %v1172
      %1917 = vmatprep.subr.mxu0 0.0
      %1918 = vmatpush1.msra.mxu0 %v1173
      %1919 = vmatprep.subr.mxu0 0.0
      %1920 = vmatpush1.msra.mxu0 %v1174
      %1921 = vmatprep.subr.mxu0 0.0
      %1922 = vmatpush1.msra.mxu0 %v1175
      %1923 = vmatprep.subr.mxu0 0.0
      %1924 = vmatpush1.msra.mxu0 %v1176
      %1925 = vmatprep.subr.mxu0 0.0
      %1926 = vmatpush1.msra.mxu0 %v1177
      %1927 = vmatprep.subr.mxu0 0.0
      %1928 = vmatpush1.msra.mxu0 %v1178
      %1929 = vmatprep.subr.mxu0 0.0
      %1930 = vmatpush1.msra.mxu0 %v1179
      %1931 = vmatprep.subr.mxu0 0.0
      %1932 = vmatpush1.msra.mxu0 %v1180
      %1933 = vmatprep.subr.mxu0 0.0
      %1934 = vmatpush1.msra.mxu0 %v1181
      %1935 = vmatprep.subr.mxu0 0.0
      %1936 = vmatpush1.msra.mxu0 %v1182
      %1937 = vmatprep.subr.mxu0 0.0
      %1938 = vmatpush1.msra.mxu0 %v1183
      %1939 = vmatprep.mubr.f32.mxu0 %v809
      %1940 = vmatmul.mubr.f32.gmra.mrb[0].mxu0 %v700
      %v1941 = vpop.f32.mrb[0].mxu0
      %v1942 = vadd.f32 %v1717, %v1941
      %v1943 = vpop.f32.mrb[0].mxu0
      %1944 = vmatprep.mubr.f32.mxu0 %v811
      %1945 = vmatmul.mubr.f32.gmra.mrb[0].mxu0 %v701
      %v1946 = vpop.f32.mrb[0].mxu0
      %v1947 = vadd.f32 %v1722, %v1946
      %v1948 = vpop.f32.mrb[0].mxu0
      %1949 = vmatprep.mubr.f32.mxu0 %v814
      %1950 = vmatmul.mubr.f32.gmra.mrb[0].mxu0 %v703
      %v1951 = vpop.f32.mrb[0].mxu0
      %v1952 = vadd.f32 %v1727, %v1951
      %v1953 = vpop.f32.mrb[0].mxu0
      %1954 = vmatprep.mubr.f32.mxu0 %v816
      %1955 = vmatmul.mubr.f32.gmra.mrb[0].mxu0 %v704
      %v1956 = vpop.f32.mrb[0].mxu0
      %v1957 = vadd.f32 %v1732, %v1956
      %v1958 = vpop.f32.mrb[0].mxu0
      %1959 = vmatprep.mubr.f32.mxu0 %v819
      %1960 = vmatmul.mubr.f32.gmra.mrb[0].mxu0 %v706
      %v1961 = vpop.f32.mrb[0].mxu0
      %v1962 = vadd.f32 %v1737, %v1961
      %v1963 = vpop.f32.mrb[0].mxu0
      %1964 = vmatprep.mubr.f32.mxu0 %v821
      %1965 = vmatmul.mubr.f32.gmra.mrb[0].mxu0 %v707
      %v1966 = vpop.f32.mrb[0].mxu0
      %v1967 = vadd.f32 %v1742, %v1966
      %v1968 = vpop.f32.mrb[0].mxu0
      %1969 = vmatprep.mubr.f32.mxu0 %v824
      %1970 = vmatmul.mubr.f32.gmra.mrb[0].mxu0 %v709
      %v1971 = vpop.f32.mrb[0].mxu0
      %v1972 = vadd.f32 %v1747, %v1971
      %v1973 = vpop.f32.mrb[0].mxu0
      %1974 = vmatprep.mubr.f32.mxu0 %v826
      %1975 = vmatmul.mubr.f32.gmra.mrb[0].mxu0 %v710
      %v1976 = vpop.f32.mrb[0].mxu0
      %v1977 = vadd.f32 %v1752, %v1976
      %v1978 = vpop.f32.mrb[0].mxu0
      %1979 = vmatprep.mubr.f32.mxu0 %v829
      %1980 = vmatmul.mubr.f32.gmra.mrb[0].mxu0 %v712
      %v1981 = vpop.f32.mrb[0].mxu0
      %v1982 = vadd.f32 %v1757, %v1981
      %v1983 = vpop.f32.mrb[0].mxu0
      %1984 = vmatprep.mubr.f32.mxu0 %v831
      %1985 = vmatmul.mubr.f32.gmra.mrb[0].mxu0 %v713
      %v1986 = vpop.f32.mrb[0].mxu0
      %v1987 = vadd.f32 %v1762, %v1986
      %v1988 = vpop.f32.mrb[0].mxu0
      %1989 = vmatprep.mubr.f32.mxu0 %v834
      %1990 = vmatmul.mubr.f32.gmra.mrb[0].mxu0 %v715
      %v1991 = vpop.f32.mrb[0].mxu0
      %v1992 = vadd.f32 %v1767, %v1991
      %v1993 = vpop.f32.mrb[0].mxu0
      %1994 = vmatprep.mubr.f32.mxu0 %v836
      %1995 = vmatmul.mubr.f32.gmra.mrb[0].mxu0 %v716
      %v1996 = vpop.f32.mrb[0].mxu0
      %v1997 = vadd.f32 %v1772, %v1996
      %v1998 = vpop.f32.mrb[0].mxu0
      %1999 = vmatprep.mubr.f32.mxu0 %v839
      %2000 = vmatmul.mubr.f32.gmra.mrb[0].mxu0 %v718
      %v2001 = vpop.f32.mrb[0].mxu0
      %v2002 = vadd.f32 %v1777, %v2001
      %v2003 = vpop.f32.mrb[0].mxu0
      %2004 = vmatprep.mubr.f32.mxu0 %v841
      %2005 = vmatmul.mubr.f32.gmra.mrb[0].mxu0 %v719
      %v2006 = vpop.f32.mrb[0].mxu0
      %v2007 = vadd.f32 %v1782, %v2006
      %v2008 = vpop.f32.mrb[0].mxu0
      %2009 = vmatprep.mubr.f32.mxu0 %v844
      %2010 = vmatmul.mubr.f32.gmra.mrb[0].mxu0 %v721
      %v2011 = vpop.f32.mrb[0].mxu0
      %v2012 = vadd.f32 %v1787, %v2011
      %v2013 = vpop.f32.mrb[0].mxu0
      %2014 = vmatprep.mubr.f32.mxu0 %v846
      %2015 = vmatmul.mubr.f32.gmra.mrb[0].mxu0 %v722
      %v2016 = vpop.f32.mrb[0].mxu0
      %v2017 = vadd.f32 %v1792, %v2016
      %v2018 = vpop.f32.mrb[0].mxu0
      %2019 = vmatprep.mubr.f32.mxu0 %v849
      %2020 = vmatmul.mubr.f32.gmra.mrb[0].mxu0 %v724
      %v2021 = vpop.f32.mrb[0].mxu0
      %v2022 = vadd.f32 %v1797, %v2021
      %v2023 = vpop.f32.mrb[0].mxu0
      %2024 = vmatprep.mubr.f32.mxu0 %v851
      %2025 = vmatmul.mubr.f32.gmra.mrb[0].mxu0 %v725
      %v2026 = vpop.f32.mrb[0].mxu0
      %v2027 = vadd.f32 %v1802, %v2026
      %v2028 = vpop.f32.mrb[0].mxu0
      %2029 = vmatprep.mubr.f32.mxu0 %v854
      %2030 = vmatmul.mubr.f32.gmra.mrb[0].mxu0 %v727
      %v2031 = vpop.f32.mrb[0].mxu0
      %v2032 = vadd.f32 %v1807, %v2031
      %v2033 = vpop.f32.mrb[0].mxu0
      %2034 = vmatprep.mubr.f32.mxu0 %v856
      %2035 = vmatmul.mubr.f32.gmra.mrb[0].mxu0 %v728
      %v2036 = vpop.f32.mrb[0].mxu0
      %v2037 = vadd.f32 %v1812, %v2036
      %v2038 = vpop.f32.mrb[0].mxu0
      %2039 = vmatprep.mubr.f32.mxu0 %v859
      %2040 = vmatmul.mubr.f32.gmra.mrb[0].mxu0 %v730
      %v2041 = vpop.f32.mrb[0].mxu0
      %v2042 = vadd.f32 %v1817, %v2041
      %v2043 = vpop.f32.mrb[0].mxu0
      %2044 = vmatprep.mubr.f32.mxu0 %v861
      %2045 = vmatmul.mubr.f32.gmra.mrb[0].mxu0 %v731
      %v2046 = vpop.f32.mrb[0].mxu0
      %v2047 = vadd.f32 %v1822, %v2046
      %v2048 = vpop.f32.mrb[0].mxu0
      %2049 = vmatprep.mubr.f32.mxu0 %v864
      %2050 = vmatmul.mubr.f32.gmra.mrb[0].mxu0 %v733
      %v2051 = vpop.f32.mrb[0].mxu0
      %v2052 = vadd.f32 %v1827, %v2051
      %v2053 = vpop.f32.mrb[0].mxu0
      %2054 = vmatprep.mubr.f32.mxu0 %v866
      %2055 = vmatmul.mubr.f32.gmra.mrb[0].mxu0 %v734
      %v2056 = vpop.f32.mrb[0].mxu0
      %v2057 = vadd.f32 %v1832, %v2056
      %v2058 = vpop.f32.mrb[0].mxu0
      %2059 = vmatprep.mubr.f32.mxu0 %v869
      %2060 = vmatmul.mubr.f32.gmra.mrb[0].mxu0 %v736
      %v2061 = vpop.f32.mrb[0].mxu0
      %v2062 = vadd.f32 %v1837, %v2061
      %v2063 = vpop.f32.mrb[0].mxu0
      %2064 = vmatprep.mubr.f32.mxu0 %v871
      %2065 = vmatmul.mubr.f32.gmra.mrb[0].mxu0 %v737
      %v2066 = vpop.f32.mrb[0].mxu0
      %v2067 = vadd.f32 %v1842, %v2066
      %v2068 = vpop.f32.mrb[0].mxu0
      %2069 = vmatprep.mubr.f32.mxu0 %v874
      %2070 = vmatmul.mubr.f32.gmra.mrb[0].mxu0 %v739
      %v2071 = vpop.f32.mrb[0].mxu0
      %v2072 = vadd.f32 %v1847, %v2071
      %v2073 = vpop.f32.mrb[0].mxu0
      %2074 = vmatprep.mubr.f32.mxu0 %v876
      %2075 = vmatmul.mubr.f32.gmra.mrb[0].mxu0 %v740
      %v2076 = vpop.f32.mrb[0].mxu0
      %v2077 = vadd.f32 %v1852, %v2076
      %v2078 = vpop.f32.mrb[0].mxu0
      %2079 = vmatprep.mubr.f32.mxu0 %v1027
      %2080 = vmatmul.mubr.f32.gmra.mrb[0].mxu0 %v742
      %v2081 = vpop.f32.mrb[0].mxu0
      %v2082 = vadd.f32 %v1857, %v2081
      %v2083 = vpop.f32.mrb[0].mxu0
      %2084 = vmatprep.mubr.f32.mxu0 %v1029
      %2085 = vmatmul.mubr.f32.gmra.mrb[0].mxu0 %v743
      %v2086 = vpop.f32.mrb[0].mxu0
      %v2087 = vadd.f32 %v1862, %v2086
      %v2088 = vpop.f32.mrb[0].mxu0
      %2089 = vmatprep.mubr.f32.mxu0 %v1044
      %2090 = vmatmul.mubr.f32.gmra.mrb[0].mxu0 %v745
      %v2091 = vpop.f32.mrb[0].mxu0
      %v2092 = vadd.f32 %v1867, %v2091
      %v2093 = vpop.f32.mrb[0].mxu0
      %2094 = vmatprep.mubr.f32.mxu0 %v1046
      %2095 = vmatmul.mubr.f32.gmra.mrb[0].mxu0 %v746
      %v2096 = vpop.f32.mrb[0].mxu0
      %v2097 = vadd.f32 %v1872, %v2096
      %v2098 = vpop.f32.mrb[0].mxu0
      %2099 = vdwg.mxu0
      %2100 = vmatprep.subr.mxu0 0.0
      %2101 = vmatpush1.msra.mxu0 %v1184
      %2102 = vmatprep.subr.mxu0 0.0
      %2103 = vmatpush1.msra.mxu0 %v1185
      %2104 = vmatprep.subr.mxu0 0.0
      %2105 = vmatpush1.msra.mxu0 %v1186
      %2106 = vmatprep.subr.mxu0 0.0
      %2107 = vmatpush1.msra.mxu0 %v1187
      %2108 = vmatprep.subr.mxu0 0.0
      %2109 = vmatpush1.msra.mxu0 %v1188
      %2110 = vmatprep.subr.mxu0 0.0
      %2111 = vmatpush1.msra.mxu0 %v1189
      %2112 = vmatprep.subr.mxu0 0.0
      %2113 = vmatpush1.msra.mxu0 %v1190
      %2114 = vmatprep.subr.mxu0 0.0
      %2115 = vmatpush1.msra.mxu0 %v1191
      %2116 = vmatprep.subr.mxu0 0.0
      %2117 = vmatpush1.msra.mxu0 %v1192
      %2118 = vmatprep.subr.mxu0 0.0
      %2119 = vmatpush1.msra.mxu0 %v1193
      %2120 = vmatprep.subr.mxu0 0.0
      %2121 = vmatpush1.msra.mxu0 %v1194
      %2122 = vmatprep.subr.mxu0 0.0
      %2123 = vmatpush1.msra.mxu0 %v1195
      %2124 = vmatprep.subr.mxu0 0.0
      %2125 = vmatpush1.msra.mxu0 %v1196
      %2126 = vmatprep.subr.mxu0 0.0
      %2127 = vmatpush1.msra.mxu0 %v1197
      %2128 = vmatprep.subr.mxu0 0.0
      %2129 = vmatpush1.msra.mxu0 %v1198
      %2130 = vmatprep.subr.mxu0 0.0
      %2131 = vmatpush1.msra.mxu0 %v1199
      %2132 = vmatprep.subr.mxu0 0.0
      %2133 = vmatpush1.msra.mxu0 0.0
      %2134 = vmatprep.subr.mxu0 0.0
      %2135 = vmatpush1.msra.mxu0 0.0
      %2136 = vmatprep.subr.mxu0 0.0
      %2137 = vmatpush1.msra.mxu0 0.0
      %2138 = vmatprep.subr.mxu0 0.0
      %2139 = vmatpush1.msra.mxu0 0.0
      %2140 = vmatprep.subr.mxu0 0.0
      %2141 = vmatpush1.msra.mxu0 0.0
      %2142 = vmatprep.subr.mxu0 0.0
      %2143 = vmatpush1.msra.mxu0 0.0
      %2144 = vmatprep.subr.mxu0 0.0
      %2145 = vmatpush1.msra.mxu0 0.0
      %2146 = vmatprep.subr.mxu0 0.0
      %2147 = vmatpush1.msra.mxu0 0.0
      %2148 = vmatprep.subr.mxu0 0.0
      %2149 = vmatpush1.msra.mxu0 0.0
      %2150 = vmatprep.subr.mxu0 0.0
      %2151 = vmatpush1.msra.mxu0 0.0
      %2152 = vmatprep.subr.mxu0 0.0
      %2153 = vmatpush1.msra.mxu0 0.0
      %2154 = vmatprep.subr.mxu0 0.0
      %2155 = vmatpush1.msra.mxu0 0.0
      %2156 = vmatprep.subr.mxu0 0.0
      %2157 = vmatpush1.msra.mxu0 0.0
      %2158 = vmatprep.subr.mxu0 0.0
      %2159 = vmatpush1.msra.mxu0 0.0
      %2160 = vmatprep.subr.mxu0 0.0
      %2161 = vmatpush1.msra.mxu0 0.0
      %2162 = vmatprep.subr.mxu0 0.0
      %2163 = vmatpush1.msra.mxu0 0.0
      %2164 = vmatprep.mubr.f32.mxu0 0.0
      %2165 = vmatmul.mubr.f32.gmra.mrb[0].mxu0 %v922
      %v2166 = vpop.f32.mrb[0].mxu0
      %v2167 = vadd.f32 %v1942, %v2166
      %v2168 = vpop.f32.mrb[0].mxu0
      %2169 = vmatprep.mubr.f32.mxu0 0.0
      %2170 = vmatmul.mubr.f32.gmra.mrb[0].mxu0 %v924
      %v2171 = vpop.f32.mrb[0].mxu0
      %v2172 = vadd.f32 %v1947, %v2171
      %v2173 = vpop.f32.mrb[0].mxu0
      %2174 = vmatprep.mubr.f32.mxu0 0.0
      %2175 = vmatmul.mubr.f32.gmra.mrb[0].mxu0 %v927
      %v2176 = vpop.f32.mrb[0].mxu0
      %v2177 = vadd.f32 %v1952, %v2176
      %v2178 = vpop.f32.mrb[0].mxu0
      %2179 = vmatprep.mubr.f32.mxu0 0.0
      %2180 = vmatmul.mubr.f32.gmra.mrb[0].mxu0 %v929
      %v2181 = vpop.f32.mrb[0].mxu0
      %v2182 = vadd.f32 %v1957, %v2181
      %v2183 = vpop.f32.mrb[0].mxu0
      %2184 = vmatprep.mubr.f32.mxu0 0.0
      %2185 = vmatmul.mubr.f32.gmra.mrb[0].mxu0 %v932
      %v2186 = vpop.f32.mrb[0].mxu0
      %v2187 = vadd.f32 %v1962, %v2186
      %v2188 = vpop.f32.mrb[0].mxu0
      %2189 = vmatprep.mubr.f32.mxu0 0.0
      %2190 = vmatmul.mubr.f32.gmra.mrb[0].mxu0 %v934
      %v2191 = vpop.f32.mrb[0].mxu0
      %v2192 = vadd.f32 %v1967, %v2191
      %v2193 = vpop.f32.mrb[0].mxu0
      %2194 = vmatprep.mubr.f32.mxu0 0.0
      %2195 = vmatmul.mubr.f32.gmra.mrb[0].mxu0 %v937
      %v2196 = vpop.f32.mrb[0].mxu0
      %v2197 = vadd.f32 %v1972, %v2196
      %v2198 = vpop.f32.mrb[0].mxu0
      %2199 = vmatprep.mubr.f32.mxu0 0.0
      %2200 = vmatmul.mubr.f32.gmra.mrb[0].mxu0 %v939
      %v2201 = vpop.f32.mrb[0].mxu0
      %v2202 = vadd.f32 %v1977, %v2201
      %v2203 = vpop.f32.mrb[0].mxu0
      %2204 = vmatprep.mubr.f32.mxu0 0.0
      %2205 = vmatmul.mubr.f32.gmra.mrb[0].mxu0 %v942
      %v2206 = vpop.f32.mrb[0].mxu0
      %v2207 = vadd.f32 %v1982, %v2206
      %v2208 = vpop.f32.mrb[0].mxu0
      %2209 = vmatprep.mubr.f32.mxu0 0.0
      %2210 = vmatmul.mubr.f32.gmra.mrb[0].mxu0 %v944
      %v2211 = vpop.f32.mrb[0].mxu0
      %v2212 = vadd.f32 %v1987, %v2211
      %v2213 = vpop.f32.mrb[0].mxu0
      %2214 = vmatprep.mubr.f32.mxu0 0.0
      %2215 = vmatmul.mubr.f32.gmra.mrb[0].mxu0 %v947
      %v2216 = vpop.f32.mrb[0].mxu0
      %v2217 = vadd.f32 %v1992, %v2216
      %v2218 = vpop.f32.mrb[0].mxu0
      %2219 = vmatprep.mubr.f32.mxu0 0.0
      %2220 = vmatmul.mubr.f32.gmra.mrb[0].mxu0 %v949
      %v2221 = vpop.f32.mrb[0].mxu0
      %v2222 = vadd.f32 %v1997, %v2221
      %v2223 = vpop.f32.mrb[0].mxu0
      %2224 = vmatprep.mubr.f32.mxu0 0.0
      %2225 = vmatmul.mubr.f32.gmra.mrb[0].mxu0 %v952
      %v2226 = vpop.f32.mrb[0].mxu0
      %v2227 = vadd.f32 %v2002, %v2226
      %v2228 = vpop.f32.mrb[0].mxu0
      %2229 = vmatprep.mubr.f32.mxu0 0.0
      %2230 = vmatmul.mubr.f32.gmra.mrb[0].mxu0 %v954
      %v2231 = vpop.f32.mrb[0].mxu0
      %v2232 = vadd.f32 %v2007, %v2231
      %v2233 = vpop.f32.mrb[0].mxu0
      %2234 = vmatprep.mubr.f32.mxu0 0.0
      %2235 = vmatmul.mubr.f32.gmra.mrb[0].mxu0 %v957
      %v2236 = vpop.f32.mrb[0].mxu0
      %v2237 = vadd.f32 %v2012, %v2236
      %v2238 = vpop.f32.mrb[0].mxu0
      %2239 = vmatprep.mubr.f32.mxu0 0.0
      %2240 = vmatmul.mubr.f32.gmra.mrb[0].mxu0 %v959
      %v2241 = vpop.f32.mrb[0].mxu0
      %v2242 = vadd.f32 %v2017, %v2241
      %v2243 = vpop.f32.mrb[0].mxu0
      %2244 = vmatprep.mubr.f32.mxu0 0.0
      %2245 = vmatmul.mubr.f32.gmra.mrb[0].mxu0 %v962
      %v2246 = vpop.f32.mrb[0].mxu0
      %v2247 = vadd.f32 %v2022, %v2246
      %v2248 = vpop.f32.mrb[0].mxu0
      %2249 = vmatprep.mubr.f32.mxu0 0.0
      %2250 = vmatmul.mubr.f32.gmra.mrb[0].mxu0 %v964
      %v2251 = vpop.f32.mrb[0].mxu0
      %v2252 = vadd.f32 %v2027, %v2251
      %v2253 = vpop.f32.mrb[0].mxu0
      %2254 = vmatprep.mubr.f32.mxu0 0.0
      %2255 = vmatmul.mubr.f32.gmra.mrb[0].mxu0 %v967
      %v2256 = vpop.f32.mrb[0].mxu0
      %v2257 = vadd.f32 %v2032, %v2256
      %v2258 = vpop.f32.mrb[0].mxu0
      %2259 = vmatprep.mubr.f32.mxu0 0.0
      %2260 = vmatmul.mubr.f32.gmra.mrb[0].mxu0 %v969
      %v2261 = vpop.f32.mrb[0].mxu0
      %v2262 = vadd.f32 %v2037, %v2261
      %v2263 = vpop.f32.mrb[0].mxu0
      %2264 = vmatprep.mubr.f32.mxu0 0.0
      %2265 = vmatmul.mubr.f32.gmra.mrb[0].mxu0 %v972
      %v2266 = vpop.f32.mrb[0].mxu0
      %v2267 = vadd.f32 %v2042, %v2266
      %v2268 = vpop.f32.mrb[0].mxu0
      %2269 = vmatprep.mubr.f32.mxu0 0.0
      %2270 = vmatmul.mubr.f32.gmra.mrb[0].mxu0 %v974
      %v2271 = vpop.f32.mrb[0].mxu0
      %v2272 = vadd.f32 %v2047, %v2271
      %v2273 = vpop.f32.mrb[0].mxu0
      %2274 = vmatprep.mubr.f32.mxu0 0.0
      %2275 = vmatmul.mubr.f32.gmra.mrb[0].mxu0 %v977
      %v2276 = vpop.f32.mrb[0].mxu0
      %v2277 = vadd.f32 %v2052, %v2276
      %v2278 = vpop.f32.mrb[0].mxu0
      %2279 = vmatprep.mubr.f32.mxu0 0.0
      %2280 = vmatmul.mubr.f32.gmra.mrb[0].mxu0 %v979
      %v2281 = vpop.f32.mrb[0].mxu0
      %v2282 = vadd.f32 %v2057, %v2281
      %v2283 = vpop.f32.mrb[0].mxu0
      %2284 = vmatprep.mubr.f32.mxu0 0.0
      %2285 = vmatmul.mubr.f32.gmra.mrb[0].mxu0 %v982
      %v2286 = vpop.f32.mrb[0].mxu0
      %v2287 = vadd.f32 %v2062, %v2286
      %v2288 = vpop.f32.mrb[0].mxu0
      %2289 = vmatprep.mubr.f32.mxu0 0.0
      %2290 = vmatmul.mubr.f32.gmra.mrb[0].mxu0 %v984
      %v2291 = vpop.f32.mrb[0].mxu0
      %v2292 = vadd.f32 %v2067, %v2291
      %v2293 = vpop.f32.mrb[0].mxu0
      %2294 = vmatprep.mubr.f32.mxu0 0.0
      %2295 = vmatmul.mubr.f32.gmra.mrb[0].mxu0 %v987
      %v2296 = vpop.f32.mrb[0].mxu0
      %v2297 = vadd.f32 %v2072, %v2296
      %v2298 = vpop.f32.mrb[0].mxu0
      %2299 = vmatprep.mubr.f32.mxu0 0.0
      %2300 = vmatmul.mubr.f32.gmra.mrb[0].mxu0 %v989
      %v2301 = vpop.f32.mrb[0].mxu0
      %v2302 = vadd.f32 %v2077, %v2301
      %v2303 = vpop.f32.mrb[0].mxu0
      %2304 = vmatprep.mubr.f32.mxu0 0.0
      %2305 = vmatmul.mubr.f32.gmra.mrb[0].mxu0 %v1034
      %v2306 = vpop.f32.mrb[0].mxu0
      %v2307 = vadd.f32 %v2082, %v2306
      %v2308 = vpop.f32.mrb[0].mxu0
      %2309 = vmatprep.mubr.f32.mxu0 0.0
      %2310 = vmatmul.mubr.f32.gmra.mrb[0].mxu0 %v1036
      %v2311 = vpop.f32.mrb[0].mxu0
      %v2312 = vadd.f32 %v2087, %v2311
      %v2313 = vpop.f32.mrb[0].mxu0
      %2314 = vmatprep.mubr.f32.mxu0 0.0
      %2315 = vmatmul.mubr.f32.gmra.mrb[0].mxu0 %v1051
      %v2316 = vpop.f32.mrb[0].mxu0
      %v2317 = vadd.f32 %v2092, %v2316
      %v2318 = vpop.f32.mrb[0].mxu0
      %2319 = vmatprep.mubr.f32.mxu0 0.0
      %2320 = vmatmul.mubr.f32.gmra.mrb[0].mxu0 %v1053
      %v2321 = vpop.f32.mrb[0].mxu0
      %v2322 = vadd.f32 %v2097, %v2321
      %v2323 = vpop.f32.mrb[0].mxu0
      %2324 = vdwg.mxu0
      %2325 = vst [vmem:[%s265] sm:$0xff] %v2167
      %2326 = vst [vmem:[%s265 + $0x8] sm:$0xff] %v2172
      %2327 = vst [vmem:[%s265 + $0x10] sm:$0xff] %v2177
      %2328 = vst [vmem:[%s265 + $0x18] sm:$0xff] %v2182
      %2329 = vst [vmem:[%s265 + $0x20] sm:$0xff] %v2187
      %2330 = vst [vmem:[%s265 + $0x28] sm:$0xff] %v2192
      %2331 = vst [vmem:[%s265 + $0x30] sm:$0xff] %v2197
      %2332 = vst [vmem:[%s265 + $0x38] sm:$0xff] %v2202
      %2333 = vst [vmem:[%s265 + $0x40] sm:$0xff] %v2207
      %2334 = vst [vmem:[%s265 + $0x48] sm:$0xff] %v2212
      %2335 = vst [vmem:[%s265 + $0x50] sm:$0xff] %v2217
      %2336 = vst [vmem:[%s265 + $0x58] sm:$0xff] %v2222
      %2337 = vst [vmem:[%s265 + $0x60] sm:$0xff] %v2227
      %2338 = vst [vmem:[%s265 + $0x68] sm:$0xff] %v2232
      %2339 = vst [vmem:[%s265 + $0x70] sm:$0xff] %v2237
      %2340 = vst [vmem:[%s265 + $0x78] sm:$0xff] %v2242
      %2341 = vst [vmem:[%s265 + $0x80] sm:$0xff] %v2247
      %2342 = vst [vmem:[%s265 + $0x88] sm:$0xff] %v2252
      %2343 = vst [vmem:[%s265 + $0x90] sm:$0xff] %v2257
      %2344 = vst [vmem:[%s265 + $0x98] sm:$0xff] %v2262
      %2345 = vst [vmem:[%s265 + $0xa0] sm:$0xff] %v2267
      %2346 = vst [vmem:[%s265 + $0xa8] sm:$0xff] %v2272
      %2347 = vst [vmem:[%s265 + $0xb0] sm:$0xff] %v2277
      %2348 = vst [vmem:[%s265 + $0xb8] sm:$0xff] %v2282
      %2349 = vst [vmem:[%s265 + $0xc0] sm:$0xff] %v2287
      %2350 = vst [vmem:[%s265 + $0xc8] sm:$0xff] %v2292
      %2351 = vst [vmem:[%s265 + $0xd0] sm:$0xff] %v2297
      %2352 = vst [vmem:[%s265 + $0xd8] sm:$0xff] %v2302
      %2353 = vst [vmem:[%s265 + $0xe0] sm:$0xff] %v2307
      %2354 = vst [vmem:[%s265 + $0xe8] sm:$0xff] %v2312
      %2355 = vst [vmem:[%s265 + $0xf0] sm:$0xff] %v2317
      %2356 = vst [vmem:[%s265 + $0xf8] sm:$0xff] %v2322
      %v2357 = vadd.f32 %v2167, %v2172
      %v2358 = vadd.f32 %v2357, %v2177
      %v2359 = vadd.f32 %v2358, %v2182
      %v2360 = vadd.f32 %v2359, %v2187
      %v2361 = vadd.f32 %v2360, %v2192
      %v2362 = vadd.f32 %v2361, %v2197
      %v2363 = vadd.f32 %v2362, %v2202
      %v2364 = vadd.f32 %v2363, %v2207
      %v2365 = vadd.f32 %v2364, %v2212
      %v2366 = vadd.f32 %v2365, %v2217
      %v2367 = vadd.f32 %v2366, %v2222
      %v2368 = vadd.f32 %v2367, %v2227
      %v2369 = vadd.f32 %v2368, %v2232
      %v2370 = vadd.f32 %v2369, %v2237
      %v2371 = vadd.f32 %v2370, %v2242
      %v2372 = vadd.f32 %v2371, %v2247
      %v2373 = vadd.f32 %v2372, %v2252
      %v2374 = vadd.f32 %v2373, %v2257
      %v2375 = vadd.f32 %v2374, %v2262
      %v2376 = vadd.f32 %v2375, %v2267
      %v2377 = vadd.f32 %v2376, %v2272
      %v2378 = vadd.f32 %v2377, %v2277
      %v2379 = vadd.f32 %v2378, %v2282
      %v2380 = vadd.f32 %v2379, %v2287
      %v2381 = vadd.f32 %v2380, %v2292
      %v2382 = vadd.f32 %v2381, %v2297
      %v2383 = vadd.f32 %v2382, %v2302
      %v2384 = vadd.f32 %v2383, %v2307
      %v2385 = vadd.f32 %v2384, %v2312
      %v2386 = vadd.f32 %v2385, %v2317
      %v2387 = vadd.f32 %v2386, %v2322
      %v2388 = vrot.slane %v2387, 4
      %v2389 = vadd.f32 %v2387, %v2388
      %v2390 = vrot.slane %v2389, 2
      %v2391 = vadd.f32 %v2389, %v2390
      %v2392 = vrot.slane %v2391, 1
      %v2393 = vadd.f32 %v2391, %v2392
      %v2394 = vmul.f32 %v2393, 0.00390625
      %v2395 = vsub.f32 %v2167, %v2394
      %v2396 = vsub.f32 %v2172, %v2394
      %v2397 = vsub.f32 %v2177, %v2394
      %v2398 = vsub.f32 %v2182, %v2394
      %v2399 = vsub.f32 %v2187, %v2394
      %v2400 = vsub.f32 %v2192, %v2394
      %v2401 = vsub.f32 %v2197, %v2394
      %v2402 = vsub.f32 %v2202, %v2394
      %v2403 = vsub.f32 %v2207, %v2394
      %v2404 = vsub.f32 %v2212, %v2394
      %v2405 = vsub.f32 %v2217, %v2394
      %v2406 = vsub.f32 %v2222, %v2394
      %v2407 = vsub.f32 %v2227, %v2394
      %v2408 = vsub.f32 %v2232, %v2394
      %v2409 = vsub.f32 %v2237, %v2394
      %v2410 = vsub.f32 %v2242, %v2394
      %v2411 = vsub.f32 %v2247, %v2394
      %v2412 = vsub.f32 %v2252, %v2394
      %v2413 = vsub.f32 %v2257, %v2394
      %v2414 = vsub.f32 %v2262, %v2394
      %v2415 = vsub.f32 %v2267, %v2394
      %v2416 = vsub.f32 %v2272, %v2394
      %v2417 = vsub.f32 %v2277, %v2394
      %v2418 = vsub.f32 %v2282, %v2394
      %v2419 = vsub.f32 %v2287, %v2394
      %v2420 = vsub.f32 %v2292, %v2394
      %v2421 = vsub.f32 %v2297, %v2394
      %v2422 = vsub.f32 %v2302, %v2394
      %v2423 = vsub.f32 %v2307, %v2394
      %v2424 = vsub.f32 %v2312, %v2394
      %v2425 = vsub.f32 %v2317, %v2394
      %v2426 = vsub.f32 %v2322, %v2394
      %v2427 = vmul.f32 %v2395, %v2395
      %v2428 = vmul.f32 %v2396, %v2396
      %v2429 = vmul.f32 %v2397, %v2397
      %v2430 = vmul.f32 %v2398, %v2398
      %v2431 = vmul.f32 %v2399, %v2399
      %v2432 = vmul.f32 %v2400, %v2400
      %v2433 = vmul.f32 %v2401, %v2401
      %v2434 = vmul.f32 %v2402, %v2402
      %v2435 = vmul.f32 %v2403, %v2403
      %v2436 = vmul.f32 %v2404, %v2404
      %v2437 = vmul.f32 %v2405, %v2405
      %v2438 = vmul.f32 %v2406, %v2406
      %v2439 = vmul.f32 %v2407, %v2407
      %v2440 = vmul.f32 %v2408, %v2408
      %v2441 = vmul.f32 %v2409, %v2409
      %v2442 = vmul.f32 %v2410, %v2410
      %v2443 = vmul.f32 %v2411, %v2411
      %v2444 = vmul.f32 %v2412, %v2412
      %v2445 = vmul.f32 %v2413, %v2413
      %v2446 = vmul.f32 %v2414, %v2414
      %v2447 = vmul.f32 %v2415, %v2415
      %v2448 = vmul.f32 %v2416, %v2416
      %v2449 = vmul.f32 %v2417, %v2417
      %v2450 = vmul.f32 %v2418, %v2418
      %v2451 = vmul.f32 %v2419, %v2419
      %v2452 = vmul.f32 %v2420, %v2420
      %v2453 = vmul.f32 %v2421, %v2421
      %v2454 = vmul.f32 %v2422, %v2422
      %v2455 = vmul.f32 %v2423, %v2423
      %v2456 = vmul.f32 %v2424, %v2424
      %v2457 = vmul.f32 %v2425, %v2425
      %v2458 = vmul.f32 %v2426, %v2426
      %v2459 = vadd.f32 %v2427, %v2428
      %v2460 = vadd.f32 %v2459, %v2429
      %v2461 = vadd.f32 %v2460, %v2430
      %v2462 = vadd.f32 %v2461, %v2431
      %v2463 = vadd.f32 %v2462, %v2432
      %v2464 = vadd.f32 %v2463, %v2433
      %v2465 = vadd.f32 %v2464, %v2434
      %v2466 = vadd.f32 %v2465, %v2435
      %v2467 = vadd.f32 %v2466, %v2436
      %v2468 = vadd.f32 %v2467, %v2437
      %v2469 = vadd.f32 %v2468, %v2438
      %v2470 = vadd.f32 %v2469, %v2439
      %v2471 = vadd.f32 %v2470, %v2440
      %v2472 = vadd.f32 %v2471, %v2441
      %v2473 = vadd.f32 %v2472, %v2442
      %v2474 = vadd.f32 %v2473, %v2443
      %v2475 = vadd.f32 %v2474, %v2444
      %v2476 = vadd.f32 %v2475, %v2445
      %v2477 = vadd.f32 %v2476, %v2446
      %v2478 = vadd.f32 %v2477, %v2447
      %v2479 = vadd.f32 %v2478, %v2448
      %v2480 = vadd.f32 %v2479, %v2449
      %v2481 = vadd.f32 %v2480, %v2450
      %v2482 = vadd.f32 %v2481, %v2451
      %v2483 = vadd.f32 %v2482, %v2452
      %v2484 = vadd.f32 %v2483, %v2453
      %v2485 = vadd.f32 %v2484, %v2454
      %v2486 = vadd.f32 %v2485, %v2455
      %v2487 = vadd.f32 %v2486, %v2456
      %v2488 = vadd.f32 %v2487, %v2457
      %v2489 = vadd.f32 %v2488, %v2458
      %v2490 = vrot.slane %v2489, 4
      %v2491 = vadd.f32 %v2489, %v2490
      %v2492 = vrot.slane %v2491, 2
      %v2493 = vadd.f32 %v2491, %v2492
      %v2494 = vrot.slane %v2493, 1
      %v2495 = vadd.f32 %v2493, %v2494
      %vm2496 = vcmask 1040384
      %v2497 = vsel %vm2496, %v2393, %v2495
      %2498 = vst [vmem:[%s271] sm:$0x3] %v2497
      %s2499 = smul.u32 16, %s22
      %p2500 = scmp.lt.s32.totalorder %s21, 1
      %s2501 = scalar_select %p2500, %s21, 1
      %p2502 = scmp.lt.s32.totalorder %s2499, 15
      %s2503 = scalar_select %p2502, %s2499, 15
      %s2504 = smul.addr %s2503, 2
      %s2505 = smul.addr %s2501, 32
      %s2506 = sadd.s32 %s2504, %s2505
      %s2507 = smul.addr %s2506, 8
      %s2508 = scalar_lea.vmem %s4, %s2507
      %s2509 = sadd.s32 %s21, %s22
      %p2510 = scmp.lt.s32.totalorder %s2509, 1
      %s2511 = scalar_select %p2510, %s2509, 1
      %s2512 = smul.addr %s2511, 2
      %s2513 = scalar_lea.vmem %s5, %s2512
      // Predicated region
      $region37: #{double_conv.4} parent=35 // pred_check
        %p2514 = pneg %p140
      $region38: #{double_conv.4} parent=35 // pred_check_branch
        %2516 = sbr.rel (%p2514) target = $region40
      $region39: #{double_conv.4} parent=35 // pred_region
        %s2517 = smul.u32 16, %s22
      $region40: #{double_conv.4} parent=35 // pred_fallthru
        _
      // Predicated region
      $region41: #{double_conv.4} parent=35 // pred_check
        %p2518 = pneg %p168
      $region42: #{double_conv.4} parent=35 // pred_check_branch
        %2520 = sbr.rel (%p2518) target = $region44
      $region43: #{double_conv.4} parent=35 // pred_region
        %s2521 = sadd.s32 %s21, %s22
      $region44: #{double_conv.4} parent=35 // pred_fallthru
        _
    $region36: #{double_conv.4} parent=5 // pred_fallthru
      _
    %p2522 = scmp.le.s32.totalorder 2, %s12
    // Predicated region
    $region45: #{double_conv.4} parent=5 // pred_check
      %p2523 = pneg %p2522
    $region46: #{double_conv.4} parent=5 // pred_check_branch
      %2525 = sbr.rel (%p2523) target = $region48
    $region47: #{double_conv.4} parent=5 // pred_region
      %s2526 = ssub.s32 %s12, 2
      // Predicated region
      $region49: #{double_conv.4} parent=47 // pred_check
        %p2527 = pneg %p146
      $region50: #{double_conv.4} parent=47 // pred_check_branch
        %2529 = sbr.rel (%p2527) target = $region52
      $region51: #{double_conv.4} parent=47 // pred_region
        %s2530 = smul.u32 16, %s24
        %p2531 = scmp.lt.s32.totalorder %s23, 1
        %s2532 = scalar_select %p2531, %s23, 1
        %p2533 = scmp.lt.s32.totalorder %s2530, 15
        %s2534 = scalar_select %p2533, %s2530, 15
        %s2535 = smul.addr %s2534, 2
        %s2536 = smul.addr %s2532, 32
        %s2537 = sadd.s32 %s2535, %s2536
        %s2538 = smul.addr %s2537, 8
        %s2539 = scalar_lea.vmem %s4, %s2538
      $region52: #{double_conv.4} parent=47 // pred_fallthru
        _
      // Predicated region
      $region53: #{double_conv.4} parent=47 // pred_check
        %p2540 = pneg %p174
      $region54: #{double_conv.4} parent=47 // pred_check_branch
        %2542 = sbr.rel (%p2540) target = $region56
      $region55: #{double_conv.4} parent=47 // pred_region
        %s2543 = sadd.s32 %s23, %s24
        %p2544 = scmp.lt.s32.totalorder %s2543, 1
        %s2545 = scalar_select %p2544, %s2543, 1
        %s2546 = smul.addr %s2545, 2
        %s2547 = scalar_lea.vmem %s5, %s2546
      $region56: #{double_conv.4} parent=47 // pred_fallthru
        _
    $region48: #{double_conv.4} parent=5 // pred_fallthru
      _
  $region6: #{double_conv.4} parent=0 // loop_footer
    %s16 = sadd.s32 1, %s12
  $region7: #{double_conv.4} parent=0 // loop_footer_branch
    %11 = sbr.rel target = $region3
  $region8: #{double_conv.4} parent=0 // loop_exit
    _

// kernel: double_conv.3
$region0: #{double_conv.3}
  #allocation0 [shape = 'u32[]', space=smem, size = 0x4, offset = 0x4, fixed_abs, tag = 'smem constant byte address 0x4 - core index']
  #allocation1 [shape = 'u32[144,128]{1,0:T(1,128)}', space=vmem, size = 0x12000, scoped, tag = 'internal scratch']
  %s0 = inlined_call_operand.vmem [shape: f32[2,18,18,128], index: 0, kind: input, shape index: {}]
  %s1 = inlined_call_operand.vmem [shape: f32[1152,128], index: 1, kind: input, shape index: {}]
  %s2 = inlined_call_operand.vmem [shape: f32[2,16,16,128], index: 2, kind: output, shape index: {0}]
  %s3 = inlined_call_operand.vmem [shape: f32[2,2,128], index: 3, kind: output, shape index: {1}]
  %4 = xla_tuple %s2, %s3
  %s5 = sld [smem:[#allocation0]]
  $region49: #{double_conv.3} parent=0
    _
  %s7 = ssub.s32 1, %s5
  %s8 = scalar_select 0, %s7, %s5
  loop: start=0, step=1, limit=4
  $region2: #{double_conv.3} parent=0 // loop_pre_header
    _
  $region3: #{double_conv.3} parent=0 // loop_header
    %s10 = sphi 0, %s14
    %p11 = scmp.ge.s32.totalorder %s10, 4
    %s17 = sphi 0, %s29
    %s18 = sphi 0, %s25
    %s19 = sphi 0, %s17
    %s20 = sphi 0, %s18
    %s21 = sphi 0, %s19
    %s22 = sphi 0, %s20
    %s34 = sphi 0, %s36
    %s37 = sphi 0, %s34
    %s38 = sphi 0, %s37
    %s54 = sphi 0, %s38
    %s58 = sphi 0, %s58
    %s60 = sphi 0, %s58
    %s61 = sphi 0, %s60
    %s75 = sphi 0, %s61
    %s83 = sphi 0, %s85
    %s86 = sphi 0, %s83
    %s87 = sphi 0, %s86
    %s103 = sphi 0, %s87
    %s111 = sphi 0, %s113
    %s114 = sphi 0, %s111
    %s115 = sphi 0, %s114
    %s131 = sphi 0, %s115
  $region4: #{double_conv.3} parent=0 // loop_header_branch
    %13 = sbr.rel (%p11) target = $region8
  $region5: #{double_conv.3} parent=0 // loop_body
    %s15 = ssub.s32 %s10, 1
    %s16 = ssub.s32 %s10, 2
    %s23 = sadd.s32 1, %s18
    %p24 = scmp.ge.s32.totalorder %s23, 1
    %s25 = scalar_select %p24, 0, %s23
    %s26 = sadd.s32 1, %s17
    %s27 = scalar_select %p24, %s26, %s17
    %p28 = scmp.ge.s32.totalorder %s27, 2
    %s29 = scalar_select %p28, 0, %s27
    %s30 = sadd.s32 %s17, %s18
    %s31 = sadd.s32 %s29, %s25
    %s32 = ssub.s32 %s30, %s31
    %p33 = scmp.eq.s32.totalorder %s32, 0
    %s35 = sadd.s32 %s34, 1
    %s36 = scalar_select %p33, %s34, %s35
    %p39 = pneg %p33
    %p40 = scmp.eq.s32.totalorder %s10, 1
    %p41 = por %p39, %p40
    %p42 = scmp.ne.s32.totalorder %s34, %s37
    %p43 = scmp.eq.s32.totalorder %s10, 0
    %p44 = por %p42, %p43
    %p45 = scmp.ne.s32.totalorder %s34, %s37
    %p46 = scmp.eq.s32.totalorder %s15, 1
    %p47 = por %p45, %p46
    %p48 = scmp.ne.s32.totalorder %s37, %s38
    %p49 = scmp.eq.s32.totalorder %s15, 0
    %p50 = por %p48, %p49
    %p51 = scmp.ne.s32.totalorder %s37, %s38
    %p52 = scmp.eq.s32.totalorder %s16, 1
    %p53 = por %p51, %p52
    %p55 = scmp.ne.s32.totalorder %s38, %s54
    %p56 = scmp.eq.s32.totalorder %s16, 0
    %p57 = por %p55, %p56
    %s59 = sadd.s32 %s58, 1
    %p62 = scmp.eq.s32.totalorder %s10, 1
    %p63 = scmp.ne.s32.totalorder %s58, %s60
    %p64 = scmp.eq.s32.totalorder %s10, 0
    %p65 = por %p63, %p64
    %p66 = scmp.ne.s32.totalorder %s58, %s60
    %p67 = scmp.eq.s32.totalorder %s15, 1
    %p68 = por %p66, %p67
    %p69 = scmp.ne.s32.totalorder %s60, %s61
    %p70 = scmp.eq.s32.totalorder %s15, 0
    %p71 = por %p69, %p70
    %p72 = scmp.ne.s32.totalorder %s60, %s61
    %p73 = scmp.eq.s32.totalorder %s16, 1
    %p74 = por %p72, %p73
    %p76 = scmp.ne.s32.totalorder %s61, %s75
    %p77 = scmp.eq.s32.totalorder %s16, 0
    %p78 = por %p76, %p77
    %s79 = ssub.s32 %s17, %s29
    %s80 = ssub.s32 %s18, %s25
    %s81 = sor.u32 %s79, %s80
    %p82 = scmp.eq.s32.totalorder %s81, 0
    %s84 = sadd.s32 %s83, 1
    %s85 = scalar_select %p82, %s83, %s84
    %p88 = pneg %p82
    %p89 = scmp.eq.s32.totalorder %s10, 1
    %p90 = por %p88, %p89
    %p91 = scmp.ne.s32.totalorder %s83, %s86
    %p92 = scmp.eq.s32.totalorder %s10, 0
    %p93 = por %p91, %p92
    %p94 = scmp.ne.s32.totalorder %s83, %s86
    %p95 = scmp.eq.s32.totalorder %s15, 1
    %p96 = por %p94, %p95
    %p97 = scmp.ne.s32.totalorder %s86, %s87
    %p98 = scmp.eq.s32.totalorder %s15, 0
    %p99 = por %p97, %p98
    %p100 = scmp.ne.s32.totalorder %s86, %s87
    %p101 = scmp.eq.s32.totalorder %s16, 1
    %p102 = por %p100, %p101
    %p104 = scmp.ne.s32.totalorder %s87, %s103
    %p105 = scmp.eq.s32.totalorder %s16, 0
    %p106 = por %p104, %p105
    %s107 = sadd.s32 %s17, %s18
    %s108 = sadd.s32 %s29, %s25
    %s109 = ssub.s32 %s107, %s108
    %p110 = scmp.eq.s32.totalorder %s109, 0
    %s112 = sadd.s32 %s111, 1
    %s113 = scalar_select %p110, %s111, %s112
    %p116 = pneg %p110
    %p117 = scmp.eq.s32.totalorder %s10, 1
    %p118 = por %p116, %p117
    %p119 = scmp.ne.s32.totalorder %s111, %s114
    %p120 = scmp.eq.s32.totalorder %s10, 0
    %p121 = por %p119, %p120
    %p122 = scmp.ne.s32.totalorder %s111, %s114
    %p123 = scmp.eq.s32.totalorder %s15, 1
    %p124 = por %p122, %p123
    %p125 = scmp.ne.s32.totalorder %s114, %s115
    %p126 = scmp.eq.s32.totalorder %s15, 0
    %p127 = por %p125, %p126
    %p128 = scmp.ne.s32.totalorder %s114, %s115
    %p129 = scmp.eq.s32.totalorder %s16, 1
    %p130 = por %p128, %p129
    %p132 = scmp.ne.s32.totalorder %s115, %s131
    %p133 = scmp.eq.s32.totalorder %s16, 0
    %p134 = por %p132, %p133
    %p135 = scmp.le.s32.totalorder 1, %s10
    %p136 = scmp.lt.s32.totalorder %s10, 3
    %p137 = pnand %p135, %p136
    %p138 = pneg %p137
    // Predicated region
    $region9: #{double_conv.3} parent=5 // pred_check
      _
    $region10: #{double_conv.3} parent=5 // pred_check_branch
      %140 = sbr.rel (%p137) target = $region12
    $region11: #{double_conv.3} parent=5 // pred_region
      %s141 = ssub.s32 %s10, 1
      // Predicated region
      $region13: #{double_conv.3} parent=11 // pred_check
        %p142 = pneg %p71
      $region14: #{double_conv.3} parent=11 // pred_check_branch
        %144 = sbr.rel (%p142) target = $region16
      $region15: #{double_conv.3} parent=11 // pred_region
        _
      $region16: #{double_conv.3} parent=11 // pred_fallthru
        _
    $region12: #{double_conv.3} parent=5 // pred_fallthru
      _
    %p145 = scmp.lt.s32.totalorder %s10, 2
    // Predicated region
    $region17: #{double_conv.3} parent=5 // pred_check
      %p146 = pneg %p145
    $region18: #{double_conv.3} parent=5 // pred_check_branch
      %148 = sbr.rel (%p146) target = $region20
    $region19: #{double_conv.3} parent=5 // pred_region
      // Predicated region
      $region21: #{double_conv.3} parent=19 // pred_check
        %p149 = pneg %p44
      $region22: #{double_conv.3} parent=19 // pred_check_branch
        %151 = sbr.rel (%p149) target = $region24
      $region23: #{double_conv.3} parent=19 // pred_region
        %s152 = sadd.s32 %s17, %s18
        %p153 = scmp.lt.s32.totalorder %s152, 1
        %s154 = scalar_select %p153, %s152, 1
        %s155 = smul.addr %s154, 54
        %s156 = smul.addr %s155, 8
        %s157 = scalar_lea.vmem %s0, %s156
        %s158 = sadd.s32 %s17, %s18
      $region24: #{double_conv.3} parent=19 // pred_fallthru
        _
    $region20: #{double_conv.3} parent=5 // pred_fallthru
      _
    %p159 = scmp.le.s32.totalorder 1, %s10
    %p160 = scmp.lt.s32.totalorder %s10, 3
    %p161 = pnand %p159, %p160
    %p162 = pneg %p161
    // Predicated region
    $region25: #{double_conv.3} parent=5 // pred_check
      _
    $region26: #{double_conv.3} parent=5 // pred_check_branch
      %164 = sbr.rel (%p161) target = $region28
    $region27: #{double_conv.3} parent=5 // pred_region
      %s165 = ssub.s32 %s10, 1
      %s166 = sadd.s32 %s19, %s20
      %p167 = scmp.lt.s32.totalorder %s166, 1
      %s168 = scalar_select %p167, %s166, 1
      %s169 = smul.addr %s168, 54
      %s170 = smul.addr %s169, 8
      %s171 = scalar_lea.vmem %s0, %s170
      %p172 = pneg %p50
      %p173 = pneg %p47
      %p174 = pneg %p71
      %p175 = pneg %p68
      %p176 = pneg %p99
      %p177 = pneg %p96
      %s178 = smul.u32 16, %s20
      %p179 = scmp.lt.s32.totalorder %s19, 1
      %s180 = scalar_select %p179, %s19, 1
      %p181 = scmp.lt.s32.totalorder %s178, 15
      %s182 = scalar_select %p181, %s178, 15
      %s183 = smul.addr %s182, 2
      %s184 = smul.addr %s180, 32
      %s185 = sadd.s32 %s183, %s184
      %s186 = smul.addr %s185, 8
      %s187 = scalar_lea.vmem %s2, %s186
      %p188 = pneg %p127
      %p189 = pneg %p124
      %s190 = sadd.s32 %s19, %s20
      %p191 = scmp.lt.s32.totalorder %s190, 1
      %s192 = scalar_select %p191, %s190, 1
      %s193 = smul.addr %s192, 2
      %s194 = scalar_lea.vmem %s3, %s193
      %s195 = sadd.s32 %s19, %s20
      %p196 = scmp.lt.s32.totalorder %s195, 1
      %s197 = scalar_select %p196, %s195, 1
      %s198 = smul.addr %s197, 54
      %s199 = smul.addr %s198, 8
      %s200 = scalar_lea.vmem %s0, %s199
      %s201 = sadd.s32 %s19, %s20
      %s202 = smul.u32 16, %s20
      %p203 = scmp.lt.s32.totalorder %s19, 1
      %s204 = scalar_select %p203, %s19, 1
      %p205 = scmp.lt.s32.totalorder %s202, 15
      %s206 = scalar_select %p205, %s202, 15
      %s207 = smul.addr %s206, 2
      %s208 = smul.addr %s204, 32
      %s209 = sadd.s32 %s207, %s208
      %s210 = smul.addr %s209, 8
      %s211 = scalar_lea.vmem %s2, %s210
      %s212 = smul.u32 16, %s20
      %s213 = sadd.s32 %s19, %s20
      %p214 = scmp.lt.s32.totalorder %s213, 1
      %s215 = scalar_select %p214, %s213, 1
      %s216 = smul.addr %s215, 2
      %s217 = scalar_lea.vmem %s3, %s216
      %s218 = sadd.s32 %s19, %s20
      %v219 = vld [vmem:[%s200] sm:$0xff]
      %v220 = vld [vmem:[%s200 + $0x8] sm:$0xff]
      %v221 = vld [vmem:[%s200 + $0x10] sm:$0x3]
      %v222 = vld [vmem:[%s200 + $0x18] sm:$0xff]
      %v223 = vld [vmem:[%s200 + $0x20] sm:$0xff]
      %v224 = vld [vmem:[%s200 + $0x28] sm:$0x3]
      %v225 = vld [vmem:[%s200 + $0x30] sm:$0xff]
      %v226 = vld [vmem:[%s200 + $0x38] sm:$0xff]
      %v227 = vld [vmem:[%s200 + $0x40] sm:$0x3]
      %v228 = vld [vmem:[%s200 + $0x48] sm:$0xff]
      %v229 = vld [vmem:[%s200 + $0x50] sm:$0xff]
      %v230 = vld [vmem:[%s200 + $0x58] sm:$0x3]
      %v231 = vld [vmem:[%s200 + $0x60] sm:$0xff]
      %v232 = vld [vmem:[%s200 + $0x68] sm:$0xff]
      %v233 = vld [vmem:[%s200 + $0x70] sm:$0x3]
      %v234 = vld [vmem:[%s200 + $0x78] sm:$0xff]
      %v235 = vld [vmem:[%s200 + $0x80] sm:$0xff]
      %v236 = vld [vmem:[%s200 + $0x88] sm:$0x3]
      %v237 = vld [vmem:[%s200 + $0x90] sm:$0xff]
      %v238 = vld [vmem:[%s200 + $0x98] sm:$0xff]
      %v239 = vld [vmem:[%s200 + $0xa0] sm:$0x3]
      %v240 = vld [vmem:[%s200 + $0xa8] sm:$0xff]
      %v241 = vld [vmem:[%s200 + $0xb0] sm:$0xff]
      %v242 = vld [vmem:[%s200 + $0xb8] sm:$0x3]
      %v243 = vld [vmem:[%s200 + $0xc0] sm:$0xff]
      %v244 = vld [vmem:[%s200 + $0xc8] sm:$0xff]
      %v245 = vld [vmem:[%s200 + $0xd0] sm:$0x3]
      %v246 = vld [vmem:[%s200 + $0xd8] sm:$0xff]
      %v247 = vld [vmem:[%s200 + $0xe0] sm:$0xff]
      %v248 = vld [vmem:[%s200 + $0xe8] sm:$0x3]
      %v249 = vld [vmem:[%s200 + $0xf0] sm:$0xff]
      %v250 = vld [vmem:[%s200 + $0xf8] sm:$0xff]
      %v251 = vld [vmem:[%s200 + $0x100] sm:$0x3]
      %v252 = vld [vmem:[%s200 + $0x108] sm:$0xff]
      %v253 = vld [vmem:[%s200 + $0x110] sm:$0xff]
      %v254 = vld [vmem:[%s200 + $0x118] sm:$0x3]
      %v255 = vld [vmem:[%s200 + $0x120] sm:$0xff]
      %v256 = vld [vmem:[%s200 + $0x128] sm:$0xff]
      %v257 = vld [vmem:[%s200 + $0x130] sm:$0x3]
      %v258 = vld [vmem:[%s200 + $0x138] sm:$0xff]
      %v259 = vld [vmem:[%s200 + $0x140] sm:$0xff]
      %v260 = vld [vmem:[%s200 + $0x148] sm:$0x3]
      %v261 = vld [vmem:[%s200 + $0x150] sm:$0xff]
      %v262 = vld [vmem:[%s200 + $0x158] sm:$0xff]
      %v263 = vld [vmem:[%s200 + $0x160] sm:$0x3]
      %v264 = vld [vmem:[%s200 + $0x168] sm:$0xff]
      %v265 = vld [vmem:[%s200 + $0x170] sm:$0xff]
      %v266 = vld [vmem:[%s200 + $0x178] sm:$0x3]
      %v267 = vld [vmem:[%s200 + $0x180] sm:$0xff]
      %v268 = vld [vmem:[%s200 + $0x188] sm:$0xff]
      %v269 = vld [vmem:[%s200 + $0x190] sm:$0x3]
      %v270 = vld [vmem:[%s200 + $0x198] sm:$0xff]
      %v271 = vld [vmem:[%s200 + $0x1a0] sm:$0xff]
      %v272 = vld [vmem:[%s200 + $0x1a8] sm:$0x3]
      %vm321 = vcmask 1046528
      %v322 = vrot.slane %v219, 1
      %v323 = vrot.slane %v220, 1
      %v324 = vsel %vm321, %v322, %v323
      %v325 = vrot.slane %v221, 1
      %v326 = vsel %vm321, %v323, %v325
      %v327 = vrot.slane %v222, 1
      %v328 = vrot.slane %v223, 1
      %v329 = vsel %vm321, %v327, %v328
      %v330 = vrot.slane %v224, 1
      %v331 = vsel %vm321, %v328, %v330
      %v332 = vrot.slane %v225, 1
      %v333 = vrot.slane %v226, 1
      %v334 = vsel %vm321, %v332, %v333
      %v335 = vrot.slane %v227, 1
      %v336 = vsel %vm321, %v333, %v335
      %v337 = vrot.slane %v228, 1
      %v338 = vrot.slane %v229, 1
      %v339 = vsel %vm321, %v337, %v338
      %v340 = vrot.slane %v230, 1
      %v341 = vsel %vm321, %v338, %v340
      %v342 = vrot.slane %v231, 1
      %v343 = vrot.slane %v232, 1
      %v344 = vsel %vm321, %v342, %v343
      %v345 = vrot.slane %v233, 1
      %v346 = vsel %vm321, %v343, %v345
      %v347 = vrot.slane %v234, 1
      %v348 = vrot.slane %v235, 1
      %v349 = vsel %vm321, %v347, %v348
      %v350 = vrot.slane %v236, 1
      %v351 = vsel %vm321, %v348, %v350
      %v352 = vrot.slane %v237, 1
      %v353 = vrot.slane %v238, 1
      %v354 = vsel %vm321, %v352, %v353
      %v355 = vrot.slane %v239, 1
      %v356 = vsel %vm321, %v353, %v355
      %v357 = vrot.slane %v240, 1
      %v358 = vrot.slane %v241, 1
      %v359 = vsel %vm321, %v357, %v358
      %v360 = vrot.slane %v242, 1
      %v361 = vsel %vm321, %v358, %v360
      %v362 = vrot.slane %v243, 1
      %v363 = vrot.slane %v244, 1
      %v364 = vsel %vm321, %v362, %v363
      %v365 = vrot.slane %v245, 1
      %v366 = vsel %vm321, %v363, %v365
      %v367 = vrot.slane %v246, 1
      %v368 = vrot.slane %v247, 1
      %v369 = vsel %vm321, %v367, %v368
      %v370 = vrot.slane %v248, 1
      %v371 = vsel %vm321, %v368, %v370
      %v372 = vrot.slane %v249, 1
      %v373 = vrot.slane %v250, 1
      %v374 = vsel %vm321, %v372, %v373
      %v375 = vrot.slane %v251, 1
      %v376 = vsel %vm321, %v373, %v375
      %v377 = vrot.slane %v252, 1
      %v378 = vrot.slane %v253, 1
      %v379 = vsel %vm321, %v377, %v378
      %v380 = vrot.slane %v254, 1
      %v381 = vsel %vm321, %v378, %v380
      %v382 = vrot.slane %v255, 1
      %v383 = vrot.slane %v256, 1
      %v384 = vsel %vm321, %v382, %v383
      %v385 = vrot.slane %v257, 1
      %v386 = vsel %vm321, %v383, %v385
      %v387 = vrot.slane %v258, 1
      %v388 = vrot.slane %v259, 1
      %v389 = vsel %vm321, %v387, %v388
      %v390 = vrot.slane %v260, 1
      %v391 = vsel %vm321, %v388, %v390
      %v392 = vrot.slane %v261, 1
      %v393 = vrot.slane %v262, 1
      %v394 = vsel %vm321, %v392, %v393
      %v395 = vrot.slane %v263, 1
      %v396 = vsel %vm321, %v393, %v395
      %v397 = vrot.slane %v264, 1
      %v398 = vrot.slane %v265, 1
      %v399 = vsel %vm321, %v397, %v398
      %v400 = vrot.slane %v266, 1
      %v401 = vsel %vm321, %v398, %v400
      %vm434 = vcmask 1045504
      %v435 = vrot.slane %v219, 2
      %v436 = vrot.slane %v220, 2
      %v437 = vsel %vm434, %v435, %v436
      %v438 = vrot.slane %v221, 2
      %v439 = vsel %vm434, %v436, %v438
      %v440 = vrot.slane %v222, 2
      %v441 = vrot.slane %v223, 2
      %v442 = vsel %vm434, %v440, %v441
      %v443 = vrot.slane %v224, 2
      %v444 = vsel %vm434, %v441, %v443
      %v445 = vrot.slane %v225, 2
      %v446 = vrot.slane %v226, 2
      %v447 = vsel %vm434, %v445, %v446
      %v448 = vrot.slane %v227, 2
      %v449 = vsel %vm434, %v446, %v448
      %v450 = vrot.slane %v228, 2
      %v451 = vrot.slane %v229, 2
      %v452 = vsel %vm434, %v450, %v451
      %v453 = vrot.slane %v230, 2
      %v454 = vsel %vm434, %v451, %v453
      %v455 = vrot.slane %v231, 2
      %v456 = vrot.slane %v232, 2
      %v457 = vsel %vm434, %v455, %v456
      %v458 = vrot.slane %v233, 2
      %v459 = vsel %vm434, %v456, %v458
      %v460 = vrot.slane %v234, 2
      %v461 = vrot.slane %v235, 2
      %v462 = vsel %vm434, %v460, %v461
      %v463 = vrot.slane %v236, 2
      %v464 = vsel %vm434, %v461, %v463
      %v465 = vrot.slane %v237, 2
      %v466 = vrot.slane %v238, 2
      %v467 = vsel %vm434, %v465, %v466
      %v468 = vrot.slane %v239, 2
      %v469 = vsel %vm434, %v466, %v468
      %v470 = vrot.slane %v240, 2
      %v471 = vrot.slane %v241, 2
      %v472 = vsel %vm434, %v470, %v471
      %v473 = vrot.slane %v242, 2
      %v474 = vsel %vm434, %v471, %v473
      %v475 = vrot.slane %v243, 2
      %v476 = vrot.slane %v244, 2
      %v477 = vsel %vm434, %v475, %v476
      %v478 = vrot.slane %v245, 2
      %v479 = vsel %vm434, %v476, %v478
      %v480 = vrot.slane %v246, 2
      %v481 = vrot.slane %v247, 2
      %v482 = vsel %vm434, %v480, %v481
      %v483 = vrot.slane %v248, 2
      %v484 = vsel %vm434, %v481, %v483
      %v485 = vrot.slane %v249, 2
      %v486 = vrot.slane %v250, 2
      %v487 = vsel %vm434, %v485, %v486
      %v488 = vrot.slane %v251, 2
      %v489 = vsel %vm434, %v486, %v488
      %v490 = vrot.slane %v252, 2
      %v491 = vrot.slane %v253, 2
      %v492 = vsel %vm434, %v490, %v491
      %v493 = vrot.slane %v254, 2
      %v494 = vsel %vm434, %v491, %v493
      %v495 = vrot.slane %v255, 2
      %v496 = vrot.slane %v256, 2
      %v497 = vsel %vm434, %v495, %v496
      %v498 = vrot.slane %v257, 2
      %v499 = vsel %vm434, %v496, %v498
      %v500 = vrot.slane %v258, 2
      %v501 = vrot.slane %v259, 2
      %v502 = vsel %vm434, %v500, %v501
      %v503 = vrot.slane %v260, 2
      %v504 = vsel %vm434, %v501, %v503
      %v505 = vrot.slane %v261, 2
      %v506 = vrot.slane %v262, 2
      %v507 = vsel %vm434, %v505, %v506
      %v508 = vrot.slane %v263, 2
      %v509 = vsel %vm434, %v506, %v508
      %v510 = vrot.slane %v264, 2
      %v511 = vrot.slane %v265, 2
      %v512 = vsel %vm434, %v510, %v511
      %v513 = vrot.slane %v266, 2
      %v514 = vsel %vm434, %v511, %v513
      %v550 = vrot.slane %v267, 1
      %v551 = vrot.slane %v268, 1
      %v552 = vsel %vm321, %v550, %v551
      %v553 = vrot.slane %v269, 1
      %v554 = vsel %vm321, %v551, %v553
      %v557 = vrot.slane %v267, 2
      %v558 = vrot.slane %v268, 2
      %v559 = vsel %vm434, %v557, %v558
      %v560 = vrot.slane %v269, 2
      %v561 = vsel %vm434, %v558, %v560
      %v567 = vrot.slane %v270, 1
      %v568 = vrot.slane %v271, 1
      %v569 = vsel %vm321, %v567, %v568
      %v570 = vrot.slane %v272, 1
      %v571 = vsel %vm321, %v568, %v570
      %v574 = vrot.slane %v270, 2
      %v575 = vrot.slane %v271, 2
      %v576 = vsel %vm434, %v574, %v575
      %v577 = vrot.slane %v272, 2
      %v578 = vsel %vm434, %v575, %v577
      %v581 = vld [vmem:[%s1] sm:$0xff]
      %v582 = vld [vmem:[%s1 + $0x8] sm:$0xff]
      %v583 = vld [vmem:[%s1 + $0x10] sm:$0xff]
      %v584 = vld [vmem:[%s1 + $0x18] sm:$0xff]
      %v585 = vld [vmem:[%s1 + $0x20] sm:$0xff]
      %v586 = vld [vmem:[%s1 + $0x28] sm:$0xff]
      %v587 = vld [vmem:[%s1 + $0x30] sm:$0xff]
      %v588 = vld [vmem:[%s1 + $0x38] sm:$0xff]
      %v589 = vld [vmem:[%s1 + $0x40] sm:$0xff]
      %v590 = vld [vmem:[%s1 + $0x48] sm:$0xff]
      %v591 = vld [vmem:[%s1 + $0x50] sm:$0xff]
      %v592 = vld [vmem:[%s1 + $0x58] sm:$0xff]
      %v593 = vld [vmem:[%s1 + $0x60] sm:$0xff]
      %v594 = vld [vmem:[%s1 + $0x68] sm:$0xff]
      %v595 = vld [vmem:[%s1 + $0x70] sm:$0xff]
      %v596 = vld [vmem:[%s1 + $0x78] sm:$0xff]
      %v597 = vld [vmem:[%s1 + $0x80] sm:$0xff]
      %v598 = vld [vmem:[%s1 + $0x88] sm:$0xff]
      %v599 = vld [vmem:[%s1 + $0x90] sm:$0xff]
      %v600 = vld [vmem:[%s1 + $0x98] sm:$0xff]
      %v601 = vld [vmem:[%s1 + $0xa0] sm:$0xff]
      %v602 = vld [vmem:[%s1 + $0xa8] sm:$0xff]
      %v603 = vld [vmem:[%s1 + $0xb0] sm:$0xff]
      %v604 = vld [vmem:[%s1 + $0xb8] sm:$0xff]
      %v605 = vld [vmem:[%s1 + $0xc0] sm:$0xff]
      %v606 = vld [vmem:[%s1 + $0xc8] sm:$0xff]
      %v607 = vld [vmem:[%s1 + $0xd0] sm:$0xff]
      %v608 = vld [vmem:[%s1 + $0xd8] sm:$0xff]
      %v609 = vld [vmem:[%s1 + $0xe0] sm:$0xff]
      %v610 = vld [vmem:[%s1 + $0xe8] sm:$0xff]
      %v611 = vld [vmem:[%s1 + $0xf0] sm:$0xff]
      %v612 = vld [vmem:[%s1 + $0xf8] sm:$0xff]
      %v613 = vld [vmem:[%s1 + $0x100] sm:$0xff]
      %v614 = vld [vmem:[%s1 + $0x108] sm:$0xff]
      %v615 = vld [vmem:[%s1 + $0x110] sm:$0xff]
      %v616 = vld [vmem:[%s1 + $0x118] sm:$0xff]
      %v617 = vld [vmem:[%s1 + $0x120] sm:$0xff]
      %v618 = vld [vmem:[%s1 + $0x128] sm:$0xff]
      %v619 = vld [vmem:[%s1 + $0x130] sm:$0xff]
      %v620 = vld [vmem:[%s1 + $0x138] sm:$0xff]
      %v621 = vld [vmem:[%s1 + $0x140] sm:$0xff]
      %v622 = vld [vmem:[%s1 + $0x148] sm:$0xff]
      %v623 = vld [vmem:[%s1 + $0x150] sm:$0xff]
      %v624 = vld [vmem:[%s1 + $0x158] sm:$0xff]
      %v625 = vld [vmem:[%s1 + $0x160] sm:$0xff]
      %v626 = vld [vmem:[%s1 + $0x168] sm:$0xff]
      %v627 = vld [vmem:[%s1 + $0x170] sm:$0xff]
      %v628 = vld [vmem:[%s1 + $0x178] sm:$0xff]
      %v629 = vld [vmem:[%s1 + $0x180] sm:$0xff]
      %v630 = vld [vmem:[%s1 + $0x188] sm:$0xff]
      %v631 = vld [vmem:[%s1 + $0x190] sm:$0xff]
      %v632 = vld [vmem:[%s1 + $0x198] sm:$0xff]
      %v633 = vld [vmem:[%s1 + $0x1a0] sm:$0xff]
      %v634 = vld [vmem:[%s1 + $0x1a8] sm:$0xff]
      %v635 = vld [vmem:[%s1 + $0x1b0] sm:$0xff]
      %v636 = vld [vmem:[%s1 + $0x1b8] sm:$0xff]
      %v637 = vld [vmem:[%s1 + $0x1c0] sm:$0xff]
      %v638 = vld [vmem:[%s1 + $0x1c8] sm:$0xff]
      %v639 = vld [vmem:[%s1 + $0x1d0] sm:$0xff]
      %v640 = vld [vmem:[%s1 + $0x1d8] sm:$0xff]
      %v641 = vld [vmem:[%s1 + $0x1e0] sm:$0xff]
      %v642 = vld [vmem:[%s1 + $0x1e8] sm:$0xff]
      %v643 = vld [vmem:[%s1 + $0x1f0] sm:$0xff]
      %v644 = vld [vmem:[%s1 + $0x1f8] sm:$0xff]
      %v645 = vld [vmem:[%s1 + $0x200] sm:$0xff]
      %v646 = vld [vmem:[%s1 + $0x208] sm:$0xff]
      %v647 = vld [vmem:[%s1 + $0x210] sm:$0xff]
      %v648 = vld [vmem:[%s1 + $0x218] sm:$0xff]
      %v649 = vld [vmem:[%s1 + $0x220] sm:$0xff]
      %v650 = vld [vmem:[%s1 + $0x228] sm:$0xff]
      %v651 = vld [vmem:[%s1 + $0x230] sm:$0xff]
      %v652 = vld [vmem:[%s1 + $0x238] sm:$0xff]
      %v653 = vld [vmem:[%s1 + $0x240] sm:$0xff]
      %v654 = vld [vmem:[%s1 + $0x248] sm:$0xff]
      %v655 = vld [vmem:[%s1 + $0x250] sm:$0xff]
      %v656 = vld [vmem:[%s1 + $0x258] sm:$0xff]
      %v657 = vld [vmem:[%s1 + $0x260] sm:$0xff]
      %v658 = vld [vmem:[%s1 + $0x268] sm:$0xff]
      %v659 = vld [vmem:[%s1 + $0x270] sm:$0xff]
      %v660 = vld [vmem:[%s1 + $0x278] sm:$0xff]
      %v661 = vld [vmem:[%s1 + $0x280] sm:$0xff]
      %v662 = vld [vmem:[%s1 + $0x288] sm:$0xff]
      %v663 = vld [vmem:[%s1 + $0x290] sm:$0xff]
      %v664 = vld [vmem:[%s1 + $0x298] sm:$0xff]
      %v665 = vld [vmem:[%s1 + $0x2a0] sm:$0xff]
      %v666 = vld [vmem:[%s1 + $0x2a8] sm:$0xff]
      %v667 = vld [vmem:[%s1 + $0x2b0] sm:$0xff]
      %v668 = vld [vmem:[%s1 + $0x2b8] sm:$0xff]
      %v669 = vld [vmem:[%s1 + $0x2c0] sm:$0xff]
      %v670 = vld [vmem:[%s1 + $0x2c8] sm:$0xff]
      %v671 = vld [vmem:[%s1 + $0x2d0] sm:$0xff]
      %v672 = vld [vmem:[%s1 + $0x2d8] sm:$0xff]
      %v673 = vld [vmem:[%s1 + $0x2e0] sm:$0xff]
      %v674 = vld [vmem:[%s1 + $0x2e8] sm:$0xff]
      %v675 = vld [vmem:[%s1 + $0x2f0] sm:$0xff]
      %v676 = vld [vmem:[%s1 + $0x2f8] sm:$0xff]
      %v677 = vld [vmem:[%s1 + $0x300] sm:$0xff]
      %v678 = vld [vmem:[%s1 + $0x308] sm:$0xff]
      %v679 = vld [vmem:[%s1 + $0x310] sm:$0xff]
      %v680 = vld [vmem:[%s1 + $0x318] sm:$0xff]
      %v681 = vld [vmem:[%s1 + $0x320] sm:$0xff]
      %v682 = vld [vmem:[%s1 + $0x328] sm:$0xff]
      %v683 = vld [vmem:[%s1 + $0x330] sm:$0xff]
      %v684 = vld [vmem:[%s1 + $0x338] sm:$0xff]
      %v685 = vld [vmem:[%s1 + $0x340] sm:$0xff]
      %v686 = vld [vmem:[%s1 + $0x348] sm:$0xff]
      %v687 = vld [vmem:[%s1 + $0x350] sm:$0xff]
      %v688 = vld [vmem:[%s1 + $0x358] sm:$0xff]
      %v689 = vld [vmem:[%s1 + $0x360] sm:$0xff]
      %v690 = vld [vmem:[%s1 + $0x368] sm:$0xff]
      %v691 = vld [vmem:[%s1 + $0x370] sm:$0xff]
      %v692 = vld [vmem:[%s1 + $0x378] sm:$0xff]
      %v693 = vld [vmem:[%s1 + $0x380] sm:$0xff]
      %v694 = vld [vmem:[%s1 + $0x388] sm:$0xff]
      %v695 = vld [vmem:[%s1 + $0x390] sm:$0xff]
      %v696 = vld [vmem:[%s1 + $0x398] sm:$0xff]
      %v697 = vld [vmem:[%s1 + $0x3a0] sm:$0xff]
      %v698 = vld [vmem:[%s1 + $0x3a8] sm:$0xff]
      %v699 = vld [vmem:[%s1 + $0x3b0] sm:$0xff]
      %v700 = vld [vmem:[%s1 + $0x3b8] sm:$0xff]
      %v701 = vld [vmem:[%s1 + $0x3c0] sm:$0xff]
      %v702 = vld [vmem:[%s1 + $0x3c8] sm:$0xff]
      %v703 = vld [vmem:[%s1 + $0x3d0] sm:$0xff]
      %v704 = vld [vmem:[%s1 + $0x3d8] sm:$0xff]
      %v705 = vld [vmem:[%s1 + $0x3e0] sm:$0xff]
      %v706 = vld [vmem:[%s1 + $0x3e8] sm:$0xff]
      %v707 = vld [vmem:[%s1 + $0x3f0] sm:$0xff]
      %v708 = vld [vmem:[%s1 + $0x3f8] sm:$0xff]
      %v709 = vld [vmem:[%s1 + $0x400] sm:$0xff]
      %v710 = vld [vmem:[%s1 + $0x408] sm:$0xff]
      %v711 = vld [vmem:[%s1 + $0x410] sm:$0xff]
      %v712 = vld [vmem:[%s1 + $0x418] sm:$0xff]
      %v713 = vld [vmem:[%s1 + $0x420] sm:$0xff]
      %v714 = vld [vmem:[%s1 + $0x428] sm:$0xff]
      %v715 = vld [vmem:[%s1 + $0x430] sm:$0xff]
      %v716 = vld [vmem:[%s1 + $0x438] sm:$0xff]
      %v717 = vld [vmem:[%s1 + $0x440] sm:$0xff]
      %v718 = vld [vmem:[%s1 + $0x448] sm:$0xff]
      %v719 = vld [vmem:[%s1 + $0x450] sm:$0xff]
      %v720 = vld [vmem:[%s1 + $0x458] sm:$0xff]
      %v721 = vld [vmem:[%s1 + $0x460] sm:$0xff]
      %v722 = vld [vmem:[%s1 + $0x468] sm:$0xff]
      %v723 = vld [vmem:[%s1 + $0x470] sm:$0xff]
      %v724 = vld [vmem:[%s1 + $0x478] sm:$0xff]
      %725 = vmatprep.subr.mxu0 0.0
      %726 = vmatpush1.msra.mxu0 %v581
      %727 = vmatprep.subr.mxu0 0.0
      %728 = vmatpush1.msra.mxu0 %v582
      %729 = vmatprep.subr.mxu0 0.0
      %730 = vmatpush1.msra.mxu0 %v583
      %731 = vmatprep.subr.mxu0 0.0
      %732 = vmatpush1.msra.mxu0 %v584
      %733 = vmatprep.subr.mxu0 0.0
      %734 = vmatpush1.msra.mxu0 %v585
      %735 = vmatprep.subr.mxu0 0.0
      %736 = vmatpush1.msra.mxu0 %v586
      %737 = vmatprep.subr.mxu0 0.0
      %738 = vmatpush1.msra.mxu0 %v587
      %739 = vmatprep.subr.mxu0 0.0
      %740 = vmatpush1.msra.mxu0 %v588
      %741 = vmatprep.subr.mxu0 0.0
      %742 = vmatpush1.msra.mxu0 %v589
      %743 = vmatprep.subr.mxu0 0.0
      %744 = vmatpush1.msra.mxu0 %v590
      %745 = vmatprep.subr.mxu0 0.0
      %746 = vmatpush1.msra.mxu0 %v591
      %747 = vmatprep.subr.mxu0 0.0
      %748 = vmatpush1.msra.mxu0 %v592
      %749 = vmatprep.subr.mxu0 0.0
      %750 = vmatpush1.msra.mxu0 %v593
      %751 = vmatprep.subr.mxu0 0.0
      %752 = vmatpush1.msra.mxu0 %v594
      %753 = vmatprep.subr.mxu0 0.0
      %754 = vmatpush1.msra.mxu0 %v595
      %755 = vmatprep.subr.mxu0 0.0
      %756 = vmatpush1.msra.mxu0 %v596
      %757 = vmatprep.subr.mxu0 0.0
      %758 = vmatpush1.msra.mxu0 %v597
      %759 = vmatprep.subr.mxu0 0.0
      %760 = vmatpush1.msra.mxu0 %v598
      %761 = vmatprep.subr.mxu0 0.0
      %762 = vmatpush1.msra.mxu0 %v599
      %763 = vmatprep.subr.mxu0 0.0
      %764 = vmatpush1.msra.mxu0 %v600
      %765 = vmatprep.subr.mxu0 0.0
      %766 = vmatpush1.msra.mxu0 %v601
      %767 = vmatprep.subr.mxu0 0.0
      %768 = vmatpush1.msra.mxu0 %v602
      %769 = vmatprep.subr.mxu0 0.0
      %770 = vmatpush1.msra.mxu0 %v603
      %771 = vmatprep.subr.mxu0 0.0
      %772 = vmatpush1.msra.mxu0 %v604
      %773 = vmatprep.subr.mxu0 0.0
      %774 = vmatpush1.msra.mxu0 %v605
      %775 = vmatprep.subr.mxu0 0.0
      %776 = vmatpush1.msra.mxu0 %v606
      %777 = vmatprep.subr.mxu0 0.0
      %778 = vmatpush1.msra.mxu0 %v607
      %779 = vmatprep.subr.mxu0 0.0
      %780 = vmatpush1.msra.mxu0 %v608
      %781 = vmatprep.subr.mxu0 0.0
      %782 = vmatpush1.msra.mxu0 %v609
      %783 = vmatprep.subr.mxu0 0.0
      %784 = vmatpush1.msra.mxu0 %v610
      %785 = vmatprep.subr.mxu0 0.0
      %786 = vmatpush1.msra.mxu0 %v611
      %787 = vmatprep.subr.mxu0 0.0
      %788 = vmatpush1.msra.mxu0 %v612
      %789 = vmatprep.mubr.f32.mxu0 %v324
      %790 = vmatmul.mubr.f32.gmra.mrb[0].mxu0 %v219
      %v791 = vpop.f32.mrb[0].mxu0
      %v792 = vadd.f32 0.0, %v791
      %v793 = vpop.f32.mrb[0].mxu0
      %794 = vmatprep.mubr.f32.mxu0 %v326
      %795 = vmatmul.mubr.f32.gmra.mrb[0].mxu0 %v220
      %v796 = vpop.f32.mrb[0].mxu0
      %v797 = vadd.f32 0.0, %v796
      %v798 = vpop.f32.mrb[0].mxu0
      %799 = vmatprep.mubr.f32.mxu0 %v329
      %800 = vmatmul.mubr.f32.gmra.mrb[0].mxu0 %v222
      %v801 = vpop.f32.mrb[0].mxu0
      %v802 = vadd.f32 0.0, %v801
      %v803 = vpop.f32.mrb[0].mxu0
      %804 = vmatprep.mubr.f32.mxu0 %v331
      %805 = vmatmul.mubr.f32.gmra.mrb[0].mxu0 %v223
      %v806 = vpop.f32.mrb[0].mxu0
      %v807 = vadd.f32 0.0, %v806
      %v808 = vpop.f32.mrb[0].mxu0
      %809 = vmatprep.mubr.f32.mxu0 %v334
      %810 = vmatmul.mubr.f32.gmra.mrb[0].mxu0 %v225
      %v811 = vpop.f32.mrb[0].mxu0
      %v812 = vadd.f32 0.0, %v811
      %v813 = vpop.f32.mrb[0].mxu0
      %814 = vmatprep.mubr.f32.mxu0 %v336
      %815 = vmatmul.mubr.f32.gmra.mrb[0].mxu0 %v226
      %v816 = vpop.f32.mrb[0].mxu0
      %v817 = vadd.f32 0.0, %v816
      %v818 = vpop.f32.mrb[0].mxu0
      %819 = vmatprep.mubr.f32.mxu0 %v339
      %820 = vmatmul.mubr.f32.gmra.mrb[0].mxu0 %v228
      %v821 = vpop.f32.mrb[0].mxu0
      %v822 = vadd.f32 0.0, %v821
      %v823 = vpop.f32.mrb[0].mxu0
      %824 = vmatprep.mubr.f32.mxu0 %v341
      %825 = vmatmul.mubr.f32.gmra.mrb[0].mxu0 %v229
      %v826 = vpop.f32.mrb[0].mxu0
      %v827 = vadd.f32 0.0, %v826
      %v828 = vpop.f32.mrb[0].mxu0
      %829 = vmatprep.mubr.f32.mxu0 %v344
      %830 = vmatmul.mubr.f32.gmra.mrb[0].mxu0 %v231
      %v831 = vpop.f32.mrb[0].mxu0
      %v832 = vadd.f32 0.0, %v831
      %v833 = vpop.f32.mrb[0].mxu0
      %834 = vmatprep.mubr.f32.mxu0 %v346
      %835 = vmatmul.mubr.f32.gmra.mrb[0].mxu0 %v232
      %v836 = vpop.f32.mrb[0].mxu0
      %v837 = vadd.f32 0.0, %v836
      %v838 = vpop.f32.mrb[0].mxu0
      %839 = vmatprep.mubr.f32.mxu0 %v349
      %840 = vmatmul.mubr.f32.gmra.mrb[0].mxu0 %v234
      %v841 = vpop.f32.mrb[0].mxu0
      %v842 = vadd.f32 0.0, %v841
      %v843 = vpop.f32.mrb[0].mxu0
      %844 = vmatprep.mubr.f32.mxu0 %v351
      %845 = vmatmul.mubr.f32.gmra.mrb[0].mxu0 %v235
      %v846 = vpop.f32.mrb[0].mxu0
      %v847 = vadd.f32 0.0, %v846
      %v848 = vpop.f32.mrb[0].mxu0
      %849 = vmatprep.mubr.f32.mxu0 %v354
      %850 = vmatmul.mubr.f32.gmra.mrb[0].mxu0 %v237
      %v851 = vpop.f32.mrb[0].mxu0
      %v852 = vadd.f32 0.0, %v851
      %v853 = vpop.f32.mrb[0].mxu0
      %854 = vmatprep.mubr.f32.mxu0 %v356
      %855 = vmatmul.mubr.f32.gmra.mrb[0].mxu0 %v238
      %v856 = vpop.f32.mrb[0].mxu0
      %v857 = vadd.f32 0.0, %v856
      %v858 = vpop.f32.mrb[0].mxu0
      %859 = vmatprep.mubr.f32.mxu0 %v359
      %860 = vmatmul.mubr.f32.gmra.mrb[0].mxu0 %v240
      %v861 = vpop.f32.mrb[0].mxu0
      %v862 = vadd.f32 0.0, %v861
      %v863 = vpop.f32.mrb[0].mxu0
      %864 = vmatprep.mubr.f32.mxu0 %v361
      %865 = vmatmul.mubr.f32.gmra.mrb[0].mxu0 %v241
      %v866 = vpop.f32.mrb[0].mxu0
      %v867 = vadd.f32 0.0, %v866
      %v868 = vpop.f32.mrb[0].mxu0
      %869 = vmatprep.mubr.f32.mxu0 %v364
      %870 = vmatmul.mubr.f32.gmra.mrb[0].mxu0 %v243
      %v871 = vpop.f32.mrb[0].mxu0
      %v872 = vadd.f32 0.0, %v871
      %v873 = vpop.f32.mrb[0].mxu0
      %874 = vmatprep.mubr.f32.mxu0 %v366
      %875 = vmatmul.mubr.f32.gmra.mrb[0].mxu0 %v244
      %v876 = vpop.f32.mrb[0].mxu0
      %v877 = vadd.f32 0.0, %v876
      %v878 = vpop.f32.mrb[0].mxu0
      %879 = vmatprep.mubr.f32.mxu0 %v369
      %880 = vmatmul.mubr.f32.gmra.mrb[0].mxu0 %v246
      %v881 = vpop.f32.mrb[0].mxu0
      %v882 = vadd.f32 0.0, %v881
      %v883 = vpop.f32.mrb[0].mxu0
      %884 = vmatprep.mubr.f32.mxu0 %v371
      %885 = vmatmul.mubr.f32.gmra.mrb[0].mxu0 %v247
      %v886 = vpop.f32.mrb[0].mxu0
      %v887 = vadd.f32 0.0, %v886
      %v888 = vpop.f32.mrb[0].mxu0
      %889 = vmatprep.mubr.f32.mxu0 %v374
      %890 = vmatmul.mubr.f32.gmra.mrb[0].mxu0 %v249
      %v891 = vpop.f32.mrb[0].mxu0
      %v892 = vadd.f32 0.0, %v891
      %v893 = vpop.f32.mrb[0].mxu0
      %894 = vmatprep.mubr.f32.mxu0 %v376
      %895 = vmatmul.mubr.f32.gmra.mrb[0].mxu0 %v250
      %v896 = vpop.f32.mrb[0].mxu0
      %v897 = vadd.f32 0.0, %v896
      %v898 = vpop.f32.mrb[0].mxu0
      %899 = vmatprep.mubr.f32.mxu0 %v379
      %900 = vmatmul.mubr.f32.gmra.mrb[0].mxu0 %v252
      %v901 = vpop.f32.mrb[0].mxu0
      %v902 = vadd.f32 0.0, %v901
      %v903 = vpop.f32.mrb[0].mxu0
      %904 = vmatprep.mubr.f32.mxu0 %v381
      %905 = vmatmul.mubr.f32.gmra.mrb[0].mxu0 %v253
      %v906 = vpop.f32.mrb[0].mxu0
      %v907 = vadd.f32 0.0, %v906
      %v908 = vpop.f32.mrb[0].mxu0
      %909 = vmatprep.mubr.f32.mxu0 %v384
      %910 = vmatmul.mubr.f32.gmra.mrb[0].mxu0 %v255
      %v911 = vpop.f32.mrb[0].mxu0
      %v912 = vadd.f32 0.0, %v911
      %v913 = vpop.f32.mrb[0].mxu0
      %914 = vmatprep.mubr.f32.mxu0 %v386
      %915 = vmatmul.mubr.f32.gmra.mrb[0].mxu0 %v256
      %v916 = vpop.f32.mrb[0].mxu0
      %v917 = vadd.f32 0.0, %v916
      %v918 = vpop.f32.mrb[0].mxu0
      %919 = vmatprep.mubr.f32.mxu0 %v389
      %920 = vmatmul.mubr.f32.gmra.mrb[0].mxu0 %v258
      %v921 = vpop.f32.mrb[0].mxu0
      %v922 = vadd.f32 0.0, %v921
      %v923 = vpop.f32.mrb[0].mxu0
      %924 = vmatprep.mubr.f32.mxu0 %v391
      %925 = vmatmul.mubr.f32.gmra.mrb[0].mxu0 %v259
      %v926 = vpop.f32.mrb[0].mxu0
      %v927 = vadd.f32 0.0, %v926
      %v928 = vpop.f32.mrb[0].mxu0
      %929 = vmatprep.mubr.f32.mxu0 %v394
      %930 = vmatmul.mubr.f32.gmra.mrb[0].mxu0 %v261
      %v931 = vpop.f32.mrb[0].mxu0
      %v932 = vadd.f32 0.0, %v931
      %v933 = vpop.f32.mrb[0].mxu0
      %934 = vmatprep.mubr.f32.mxu0 %v396
      %935 = vmatmul.mubr.f32.gmra.mrb[0].mxu0 %v262
      %v936 = vpop.f32.mrb[0].mxu0
      %v937 = vadd.f32 0.0, %v936
      %v938 = vpop.f32.mrb[0].mxu0
      %939 = vmatprep.mubr.f32.mxu0 %v399
      %940 = vmatmul.mubr.f32.gmra.mrb[0].mxu0 %v264
      %v941 = vpop.f32.mrb[0].mxu0
      %v942 = vadd.f32 0.0, %v941
      %v943 = vpop.f32.mrb[0].mxu0
      %944 = vmatprep.mubr.f32.mxu0 %v401
      %945 = vmatmul.mubr.f32.gmra.mrb[0].mxu0 %v265
      %v946 = vpop.f32.mrb[0].mxu0
      %v947 = vadd.f32 0.0, %v946
      %v948 = vpop.f32.mrb[0].mxu0
      %949 = vdwg.mxu0
      %950 = vmatprep.subr.mxu0 0.0
      %951 = vmatpush1.msra.mxu0 %v613
      %952 = vmatprep.subr.mxu0 0.0
      %953 = vmatpush1.msra.mxu0 %v614
      %954 = vmatprep.subr.mxu0 0.0
      %955 = vmatpush1.msra.mxu0 %v615
      %956 = vmatprep.subr.mxu0 0.0
      %957 = vmatpush1.msra.mxu0 %v616
      %958 = vmatprep.subr.mxu0 0.0
      %959 = vmatpush1.msra.mxu0 %v617
      %960 = vmatprep.subr.mxu0 0.0
      %961 = vmatpush1.msra.mxu0 %v618
      %962 = vmatprep.subr.mxu0 0.0
      %963 = vmatpush1.msra.mxu0 %v619
      %964 = vmatprep.subr.mxu0 0.0
      %965 = vmatpush1.msra.mxu0 %v620
      %966 = vmatprep.subr.mxu0 0.0
      %967 = vmatpush1.msra.mxu0 %v621
      %968 = vmatprep.subr.mxu0 0.0
      %969 = vmatpush1.msra.mxu0 %v622
      %970 = vmatprep.subr.mxu0 0.0
      %971 = vmatpush1.msra.mxu0 %v623
      %972 = vmatprep.subr.mxu0 0.0
      %973 = vmatpush1.msra.mxu0 %v624
      %974 = vmatprep.subr.mxu0 0.0
      %975 = vmatpush1.msra.mxu0 %v625
      %976 = vmatprep.subr.mxu0 0.0
      %977 = vmatpush1.msra.mxu0 %v626
      %978 = vmatprep.subr.mxu0 0.0
      %979 = vmatpush1.msra.mxu0 %v627
      %980 = vmatprep.subr.mxu0 0.0
      %981 = vmatpush1.msra.mxu0 %v628
      %982 = vmatprep.subr.mxu0 0.0
      %983 = vmatpush1.msra.mxu0 %v629
      %984 = vmatprep.subr.mxu0 0.0
      %985 = vmatpush1.msra.mxu0 %v630
      %986 = vmatprep.subr.mxu0 0.0
      %987 = vmatpush1.msra.mxu0 %v631
      %988 = vmatprep.subr.mxu0 0.0
      %989 = vmatpush1.msra.mxu0 %v632
      %990 = vmatprep.subr.mxu0 0.0
      %991 = vmatpush1.msra.mxu0 %v633
      %992 = vmatprep.subr.mxu0 0.0
      %993 = vmatpush1.msra.mxu0 %v634
      %994 = vmatprep.subr.mxu0 0.0
      %995 = vmatpush1.msra.mxu0 %v635
      %996 = vmatprep.subr.mxu0 0.0
      %997 = vmatpush1.msra.mxu0 %v636
      %998 = vmatprep.subr.mxu0 0.0
      %999 = vmatpush1.msra.mxu0 %v637
      %1000 = vmatprep.subr.mxu0 0.0
      %1001 = vmatpush1.msra.mxu0 %v638
      %1002 = vmatprep.subr.mxu0 0.0
      %1003 = vmatpush1.msra.mxu0 %v639
      %1004 = vmatprep.subr.mxu0 0.0
      %1005 = vmatpush1.msra.mxu0 %v640
      %1006 = vmatprep.subr.mxu0 0.0
      %1007 = vmatpush1.msra.mxu0 %v641
      %1008 = vmatprep.subr.mxu0 0.0
      %1009 = vmatpush1.msra.mxu0 %v642
      %1010 = vmatprep.subr.mxu0 0.0
      %1011 = vmatpush1.msra.mxu0 %v643
      %1012 = vmatprep.subr.mxu0 0.0
      %1013 = vmatpush1.msra.mxu0 %v644
      %1014 = vmatprep.mubr.f32.mxu0 %v222
      %1015 = vmatmul.mubr.f32.gmra.mrb[0].mxu0 %v437
      %v1016 = vpop.f32.mrb[0].mxu0
      %v1017 = vadd.f32 %v792, %v1016
      %v1018 = vpop.f32.mrb[0].mxu0
      %1019 = vmatprep.mubr.f32.mxu0 %v223
      %1020 = vmatmul.mubr.f32.gmra.mrb[0].mxu0 %v439
      %v1021 = vpop.f32.mrb[0].mxu0
      %v1022 = vadd.f32 %v797, %v1021
      %v1023 = vpop.f32.mrb[0].mxu0
      %1024 = vmatprep.mubr.f32.mxu0 %v225
      %1025 = vmatmul.mubr.f32.gmra.mrb[0].mxu0 %v442
      %v1026 = vpop.f32.mrb[0].mxu0
      %v1027 = vadd.f32 %v802, %v1026
      %v1028 = vpop.f32.mrb[0].mxu0
      %1029 = vmatprep.mubr.f32.mxu0 %v226
      %1030 = vmatmul.mubr.f32.gmra.mrb[0].mxu0 %v444
      %v1031 = vpop.f32.mrb[0].mxu0
      %v1032 = vadd.f32 %v807, %v1031
      %v1033 = vpop.f32.mrb[0].mxu0
      %1034 = vmatprep.mubr.f32.mxu0 %v228
      %1035 = vmatmul.mubr.f32.gmra.mrb[0].mxu0 %v447
      %v1036 = vpop.f32.mrb[0].mxu0
      %v1037 = vadd.f32 %v812, %v1036
      %v1038 = vpop.f32.mrb[0].mxu0
      %1039 = vmatprep.mubr.f32.mxu0 %v229
      %1040 = vmatmul.mubr.f32.gmra.mrb[0].mxu0 %v449
      %v1041 = vpop.f32.mrb[0].mxu0
      %v1042 = vadd.f32 %v817, %v1041
      %v1043 = vpop.f32.mrb[0].mxu0
      %1044 = vmatprep.mubr.f32.mxu0 %v231
      %1045 = vmatmul.mubr.f32.gmra.mrb[0].mxu0 %v452
      %v1046 = vpop.f32.mrb[0].mxu0
      %v1047 = vadd.f32 %v822, %v1046
      %v1048 = vpop.f32.mrb[0].mxu0
      %1049 = vmatprep.mubr.f32.mxu0 %v232
      %1050 = vmatmul.mubr.f32.gmra.mrb[0].mxu0 %v454
      %v1051 = vpop.f32.mrb[0].mxu0
      %v1052 = vadd.f32 %v827, %v1051
      %v1053 = vpop.f32.mrb[0].mxu0
      %1054 = vmatprep.mubr.f32.mxu0 %v234
      %1055 = vmatmul.mubr.f32.gmra.mrb[0].mxu0 %v457
      %v1056 = vpop.f32.mrb[0].mxu0
      %v1057 = vadd.f32 %v832, %v1056
      %v1058 = vpop.f32.mrb[0].mxu0
      %1059 = vmatprep.mubr.f32.mxu0 %v235
      %1060 = vmatmul.mubr.f32.gmra.mrb[0].mxu0 %v459
      %v1061 = vpop.f32.mrb[0].mxu0
      %v1062 = vadd.f32 %v837, %v1061
      %v1063 = vpop.f32.mrb[0].mxu0
      %1064 = vmatprep.mubr.f32.mxu0 %v237
      %1065 = vmatmul.mubr.f32.gmra.mrb[0].mxu0 %v462
      %v1066 = vpop.f32.mrb[0].mxu0
      %v1067 = vadd.f32 %v842, %v1066
      %v1068 = vpop.f32.mrb[0].mxu0
      %1069 = vmatprep.mubr.f32.mxu0 %v238
      %1070 = vmatmul.mubr.f32.gmra.mrb[0].mxu0 %v464
      %v1071 = vpop.f32.mrb[0].mxu0
      %v1072 = vadd.f32 %v847, %v1071
      %v1073 = vpop.f32.mrb[0].mxu0
      %1074 = vmatprep.mubr.f32.mxu0 %v240
      %1075 = vmatmul.mubr.f32.gmra.mrb[0].mxu0 %v467
      %v1076 = vpop.f32.mrb[0].mxu0
      %v1077 = vadd.f32 %v852, %v1076
      %v1078 = vpop.f32.mrb[0].mxu0
      %1079 = vmatprep.mubr.f32.mxu0 %v241
      %1080 = vmatmul.mubr.f32.gmra.mrb[0].mxu0 %v469
      %v1081 = vpop.f32.mrb[0].mxu0
      %v1082 = vadd.f32 %v857, %v1081
      %v1083 = vpop.f32.mrb[0].mxu0
      %1084 = vmatprep.mubr.f32.mxu0 %v243
      %1085 = vmatmul.mubr.f32.gmra.mrb[0].mxu0 %v472
      %v1086 = vpop.f32.mrb[0].mxu0
      %v1087 = vadd.f32 %v862, %v1086
      %v1088 = vpop.f32.mrb[0].mxu0
      %1089 = vmatprep.mubr.f32.mxu0 %v244
      %1090 = vmatmul.mubr.f32.gmra.mrb[0].mxu0 %v474
      %v1091 = vpop.f32.mrb[0].mxu0
      %v1092 = vadd.f32 %v867, %v1091
      %v1093 = vpop.f32.mrb[0].mxu0
      %1094 = vmatprep.mubr.f32.mxu0 %v246
      %1095 = vmatmul.mubr.f32.gmra.mrb[0].mxu0 %v477
      %v1096 = vpop.f32.mrb[0].mxu0
      %v1097 = vadd.f32 %v872, %v1096
      %v1098 = vpop.f32.mrb[0].mxu0
      %1099 = vmatprep.mubr.f32.mxu0 %v247
      %1100 = vmatmul.mubr.f32.gmra.mrb[0].mxu0 %v479
      %v1101 = vpop.f32.mrb[0].mxu0
      %v1102 = vadd.f32 %v877, %v1101
      %v1103 = vpop.f32.mrb[0].mxu0
      %1104 = vmatprep.mubr.f32.mxu0 %v249
      %1105 = vmatmul.mubr.f32.gmra.mrb[0].mxu0 %v482
      %v1106 = vpop.f32.mrb[0].mxu0
      %v1107 = vadd.f32 %v882, %v1106
      %v1108 = vpop.f32.mrb[0].mxu0
      %1109 = vmatprep.mubr.f32.mxu0 %v250
      %1110 = vmatmul.mubr.f32.gmra.mrb[0].mxu0 %v484
      %v1111 = vpop.f32.mrb[0].mxu0
      %v1112 = vadd.f32 %v887, %v1111
      %v1113 = vpop.f32.mrb[0].mxu0
      %1114 = vmatprep.mubr.f32.mxu0 %v252
      %1115 = vmatmul.mubr.f32.gmra.mrb[0].mxu0 %v487
      %v1116 = vpop.f32.mrb[0].mxu0
      %v1117 = vadd.f32 %v892, %v1116
      %v1118 = vpop.f32.mrb[0].mxu0
      %1119 = vmatprep.mubr.f32.mxu0 %v253
      %1120 = vmatmul.mubr.f32.gmra.mrb[0].mxu0 %v489
      %v1121 = vpop.f32.mrb[0].mxu0
      %v1122 = vadd.f32 %v897, %v1121
      %v1123 = vpop.f32.mrb[0].mxu0
      %1124 = vmatprep.mubr.f32.mxu0 %v255
      %1125 = vmatmul.mubr.f32.gmra.mrb[0].mxu0 %v492
      %v1126 = vpop.f32.mrb[0].mxu0
      %v1127 = vadd.f32 %v902, %v1126
      %v1128 = vpop.f32.mrb[0].mxu0
      %1129 = vmatprep.mubr.f32.mxu0 %v256
      %1130 = vmatmul.mubr.f32.gmra.mrb[0].mxu0 %v494
      %v1131 = vpop.f32.mrb[0].mxu0
      %v1132 = vadd.f32 %v907, %v1131
      %v1133 = vpop.f32.mrb[0].mxu0
      %1134 = vmatprep.mubr.f32.mxu0 %v258
      %1135 = vmatmul.mubr.f32.gmra.mrb[0].mxu0 %v497
      %v1136 = vpop.f32.mrb[0].mxu0
      %v1137 = vadd.f32 %v912, %v1136
      %v1138 = vpop.f32.mrb[0].mxu0
      %1139 = vmatprep.mubr.f32.mxu0 %v259
      %1140 = vmatmul.mubr.f32.gmra.mrb[0].mxu0 %v499
      %v1141 = vpop.f32.mrb[0].mxu0
      %v1142 = vadd.f32 %v917, %v1141
      %v1143 = vpop.f32.mrb[0].mxu0
      %1144 = vmatprep.mubr.f32.mxu0 %v261
      %1145 = vmatmul.mubr.f32.gmra.mrb[0].mxu0 %v502
      %v1146 = vpop.f32.mrb[0].mxu0
      %v1147 = vadd.f32 %v922, %v1146
      %v1148 = vpop.f32.mrb[0].mxu0
      %1149 = vmatprep.mubr.f32.mxu0 %v262
      %1150 = vmatmul.mubr.f32.gmra.mrb[0].mxu0 %v504
      %v1151 = vpop.f32.mrb[0].mxu0
      %v1152 = vadd.f32 %v927, %v1151
      %v1153 = vpop.f32.mrb[0].mxu0
      %1154 = vmatprep.mubr.f32.mxu0 %v264
      %1155 = vmatmul.mubr.f32.gmra.mrb[0].mxu0 %v507
      %v1156 = vpop.f32.mrb[0].mxu0
      %v1157 = vadd.f32 %v932, %v1156
      %v1158 = vpop.f32.mrb[0].mxu0
      %1159 = vmatprep.mubr.f32.mxu0 %v265
      %1160 = vmatmul.mubr.f32.gmra.mrb[0].mxu0 %v509
      %v1161 = vpop.f32.mrb[0].mxu0
      %v1162 = vadd.f32 %v937, %v1161
      %v1163 = vpop.f32.mrb[0].mxu0
      %1164 = vmatprep.mubr.f32.mxu0 %v267
      %1165 = vmatmul.mubr.f32.gmra.mrb[0].mxu0 %v512
      %v1166 = vpop.f32.mrb[0].mxu0
      %v1167 = vadd.f32 %v942, %v1166
      %v1168 = vpop.f32.mrb[0].mxu0
      %1169 = vmatprep.mubr.f32.mxu0 %v268
      %1170 = vmatmul.mubr.f32.gmra.mrb[0].mxu0 %v514
      %v1171 = vpop.f32.mrb[0].mxu0
      %v1172 = vadd.f32 %v947, %v1171
      %v1173 = vpop.f32.mrb[0].mxu0
      %1174 = vdwg.mxu0
      %1175 = vmatprep.subr.mxu0 0.0
      %1176 = vmatpush1.msra.mxu0 %v645
      %1177 = vmatprep.subr.mxu0 0.0
      %1178 = vmatpush1.msra.mxu0 %v646
      %1179 = vmatprep.subr.mxu0 0.0
      %1180 = vmatpush1.msra.mxu0 %v647
      %1181 = vmatprep.subr.mxu0 0.0
      %1182 = vmatpush1.msra.mxu0 %v648
      %1183 = vmatprep.subr.mxu0 0.0
      %1184 = vmatpush1.msra.mxu0 %v649
      %1185 = vmatprep.subr.mxu0 0.0
      %1186 = vmatpush1.msra.mxu0 %v650
      %1187 = vmatprep.subr.mxu0 0.0
      %1188 = vmatpush1.msra.mxu0 %v651
      %1189 = vmatprep.subr.mxu0 0.0
      %1190 = vmatpush1.msra.mxu0 %v652
      %1191 = vmatprep.subr.mxu0 0.0
      %1192 = vmatpush1.msra.mxu0 %v653
      %1193 = vmatprep.subr.mxu0 0.0
      %1194 = vmatpush1.msra.mxu0 %v654
      %1195 = vmatprep.subr.mxu0 0.0
      %1196 = vmatpush1.msra.mxu0 %v655
      %1197 = vmatprep.subr.mxu0 0.0
      %1198 = vmatpush1.msra.mxu0 %v656
      %1199 = vmatprep.subr.mxu0 0.0
      %1200 = vmatpush1.msra.mxu0 %v657
      %1201 = vmatprep.subr.mxu0 0.0
      %1202 = vmatpush1.msra.mxu0 %v658
      %1203 = vmatprep.subr.mxu0 0.0
      %1204 = vmatpush1.msra.mxu0 %v659
      %1205 = vmatprep.subr.mxu0 0.0
      %1206 = vmatpush1.msra.mxu0 %v660
      %1207 = vmatprep.subr.mxu0 0.0
      %1208 = vmatpush1.msra.mxu0 %v661
      %1209 = vmatprep.subr.mxu0 0.0
      %1210 = vmatpush1.msra.mxu0 %v662
      %1211 = vmatprep.subr.mxu0 0.0
      %1212 = vmatpush1.msra.mxu0 %v663
      %1213 = vmatprep.subr.mxu0 0.0
      %1214 = vmatpush1.msra.mxu0 %v664
      %1215 = vmatprep.subr.mxu0 0.0
      %1216 = vmatpush1.msra.mxu0 %v665
      %1217 = vmatprep.subr.mxu0 0.0
      %1218 = vmatpush1.msra.mxu0 %v666
      %1219 = vmatprep.subr.mxu0 0.0
      %1220 = vmatpush1.msra.mxu0 %v667
      %1221 = vmatprep.subr.mxu0 0.0
      %1222 = vmatpush1.msra.mxu0 %v668
      %1223 = vmatprep.subr.mxu0 0.0
      %1224 = vmatpush1.msra.mxu0 %v669
      %1225 = vmatprep.subr.mxu0 0.0
      %1226 = vmatpush1.msra.mxu0 %v670
      %1227 = vmatprep.subr.mxu0 0.0
      %1228 = vmatpush1.msra.mxu0 %v671
      %1229 = vmatprep.subr.mxu0 0.0
      %1230 = vmatpush1.msra.mxu0 %v672
      %1231 = vmatprep.subr.mxu0 0.0
      %1232 = vmatpush1.msra.mxu0 %v673
      %1233 = vmatprep.subr.mxu0 0.0
      %1234 = vmatpush1.msra.mxu0 %v674
      %1235 = vmatprep.subr.mxu0 0.0
      %1236 = vmatpush1.msra.mxu0 %v675
      %1237 = vmatprep.subr.mxu0 0.0
      %1238 = vmatpush1.msra.mxu0 %v676
      %1239 = vmatprep.mubr.f32.mxu0 %v442
      %1240 = vmatmul.mubr.f32.gmra.mrb[0].mxu0 %v329
      %v1241 = vpop.f32.mrb[0].mxu0
      %v1242 = vadd.f32 %v1017, %v1241
      %v1243 = vpop.f32.mrb[0].mxu0
      %1244 = vmatprep.mubr.f32.mxu0 %v444
      %1245 = vmatmul.mubr.f32.gmra.mrb[0].mxu0 %v331
      %v1246 = vpop.f32.mrb[0].mxu0
      %v1247 = vadd.f32 %v1022, %v1246
      %v1248 = vpop.f32.mrb[0].mxu0
      %1249 = vmatprep.mubr.f32.mxu0 %v447
      %1250 = vmatmul.mubr.f32.gmra.mrb[0].mxu0 %v334
      %v1251 = vpop.f32.mrb[0].mxu0
      %v1252 = vadd.f32 %v1027, %v1251
      %v1253 = vpop.f32.mrb[0].mxu0
      %1254 = vmatprep.mubr.f32.mxu0 %v449
      %1255 = vmatmul.mubr.f32.gmra.mrb[0].mxu0 %v336
      %v1256 = vpop.f32.mrb[0].mxu0
      %v1257 = vadd.f32 %v1032, %v1256
      %v1258 = vpop.f32.mrb[0].mxu0
      %1259 = vmatprep.mubr.f32.mxu0 %v452
      %1260 = vmatmul.mubr.f32.gmra.mrb[0].mxu0 %v339
      %v1261 = vpop.f32.mrb[0].mxu0
      %v1262 = vadd.f32 %v1037, %v1261
      %v1263 = vpop.f32.mrb[0].mxu0
      %1264 = vmatprep.mubr.f32.mxu0 %v454
      %1265 = vmatmul.mubr.f32.gmra.mrb[0].mxu0 %v341
      %v1266 = vpop.f32.mrb[0].mxu0
      %v1267 = vadd.f32 %v1042, %v1266
      %v1268 = vpop.f32.mrb[0].mxu0
      %1269 = vmatprep.mubr.f32.mxu0 %v457
      %1270 = vmatmul.mubr.f32.gmra.mrb[0].mxu0 %v344
      %v1271 = vpop.f32.mrb[0].mxu0
      %v1272 = vadd.f32 %v1047, %v1271
      %v1273 = vpop.f32.mrb[0].mxu0
      %1274 = vmatprep.mubr.f32.mxu0 %v459
      %1275 = vmatmul.mubr.f32.gmra.mrb[0].mxu0 %v346
      %v1276 = vpop.f32.mrb[0].mxu0
      %v1277 = vadd.f32 %v1052, %v1276
      %v1278 = vpop.f32.mrb[0].mxu0
      %1279 = vmatprep.mubr.f32.mxu0 %v462
      %1280 = vmatmul.mubr.f32.gmra.mrb[0].mxu0 %v349
      %v1281 = vpop.f32.mrb[0].mxu0
      %v1282 = vadd.f32 %v1057, %v1281
      %v1283 = vpop.f32.mrb[0].mxu0
      %1284 = vmatprep.mubr.f32.mxu0 %v464
      %1285 = vmatmul.mubr.f32.gmra.mrb[0].mxu0 %v351
      %v1286 = vpop.f32.mrb[0].mxu0
      %v1287 = vadd.f32 %v1062, %v1286
      %v1288 = vpop.f32.mrb[0].mxu0
      %1289 = vmatprep.mubr.f32.mxu0 %v467
      %1290 = vmatmul.mubr.f32.gmra.mrb[0].mxu0 %v354
      %v1291 = vpop.f32.mrb[0].mxu0
      %v1292 = vadd.f32 %v1067, %v1291
      %v1293 = vpop.f32.mrb[0].mxu0
      %1294 = vmatprep.mubr.f32.mxu0 %v469
      %1295 = vmatmul.mubr.f32.gmra.mrb[0].mxu0 %v356
      %v1296 = vpop.f32.mrb[0].mxu0
      %v1297 = vadd.f32 %v1072, %v1296
      %v1298 = vpop.f32.mrb[0].mxu0
      %1299 = vmatprep.mubr.f32.mxu0 %v472
      %1300 = vmatmul.mubr.f32.gmra.mrb[0].mxu0 %v359
      %v1301 = vpop.f32.mrb[0].mxu0
      %v1302 = vadd.f32 %v1077, %v1301
      %v1303 = vpop.f32.mrb[0].mxu0
      %1304 = vmatprep.mubr.f32.mxu0 %v474
      %1305 = vmatmul.mubr.f32.gmra.mrb[0].mxu0 %v361
      %v1306 = vpop.f32.mrb[0].mxu0
      %v1307 = vadd.f32 %v1082, %v1306
      %v1308 = vpop.f32.mrb[0].mxu0
      %1309 = vmatprep.mubr.f32.mxu0 %v477
      %1310 = vmatmul.mubr.f32.gmra.mrb[0].mxu0 %v364
      %v1311 = vpop.f32.mrb[0].mxu0
      %v1312 = vadd.f32 %v1087, %v1311
      %v1313 = vpop.f32.mrb[0].mxu0
      %1314 = vmatprep.mubr.f32.mxu0 %v479
      %1315 = vmatmul.mubr.f32.gmra.mrb[0].mxu0 %v366
      %v1316 = vpop.f32.mrb[0].mxu0
      %v1317 = vadd.f32 %v1092, %v1316
      %v1318 = vpop.f32.mrb[0].mxu0
      %1319 = vmatprep.mubr.f32.mxu0 %v482
      %1320 = vmatmul.mubr.f32.gmra.mrb[0].mxu0 %v369
      %v1321 = vpop.f32.mrb[0].mxu0
      %v1322 = vadd.f32 %v1097, %v1321
      %v1323 = vpop.f32.mrb[0].mxu0
      %1324 = vmatprep.mubr.f32.mxu0 %v484
      %1325 = vmatmul.mubr.f32.gmra.mrb[0].mxu0 %v371
      %v1326 = vpop.f32.mrb[0].mxu0
      %v1327 = vadd.f32 %v1102, %v1326
      %v1328 = vpop.f32.mrb[0].mxu0
      %1329 = vmatprep.mubr.f32.mxu0 %v487
      %1330 = vmatmul.mubr.f32.gmra.mrb[0].mxu0 %v374
      %v1331 = vpop.f32.mrb[0].mxu0
      %v1332 = vadd.f32 %v1107, %v1331
      %v1333 = vpop.f32.mrb[0].mxu0
      %1334 = vmatprep.mubr.f32.mxu0 %v489
      %1335 = vmatmul.mubr.f32.gmra.mrb[0].mxu0 %v376
      %v1336 = vpop.f32.mrb[0].mxu0
      %v1337 = vadd.f32 %v1112, %v1336
      %v1338 = vpop.f32.mrb[0].mxu0
      %1339 = vmatprep.mubr.f32.mxu0 %v492
      %1340 = vmatmul.mubr.f32.gmra.mrb[0].mxu0 %v379
      %v1341 = vpop.f32.mrb[0].mxu0
      %v1342 = vadd.f32 %v1117, %v1341
      %v1343 = vpop.f32.mrb[0].mxu0
      %1344 = vmatprep.mubr.f32.mxu0 %v494
      %1345 = vmatmul.mubr.f32.gmra.mrb[0].mxu0 %v381
      %v1346 = vpop.f32.mrb[0].mxu0
      %v1347 = vadd.f32 %v1122, %v1346
      %v1348 = vpop.f32.mrb[0].mxu0
      %1349 = vmatprep.mubr.f32.mxu0 %v497
      %1350 = vmatmul.mubr.f32.gmra.mrb[0].mxu0 %v384
      %v1351 = vpop.f32.mrb[0].mxu0
      %v1352 = vadd.f32 %v1127, %v1351
      %v1353 = vpop.f32.mrb[0].mxu0
      %1354 = vmatprep.mubr.f32.mxu0 %v499
      %1355 = vmatmul.mubr.f32.gmra.mrb[0].mxu0 %v386
      %v1356 = vpop.f32.mrb[0].mxu0
      %v1357 = vadd.f32 %v1132, %v1356
      %v1358 = vpop.f32.mrb[0].mxu0
      %1359 = vmatprep.mubr.f32.mxu0 %v502
      %1360 = vmatmul.mubr.f32.gmra.mrb[0].mxu0 %v389
      %v1361 = vpop.f32.mrb[0].mxu0
      %v1362 = vadd.f32 %v1137, %v1361
      %v1363 = vpop.f32.mrb[0].mxu0
      %1364 = vmatprep.mubr.f32.mxu0 %v504
      %1365 = vmatmul.mubr.f32.gmra.mrb[0].mxu0 %v391
      %v1366 = vpop.f32.mrb[0].mxu0
      %v1367 = vadd.f32 %v1142, %v1366
      %v1368 = vpop.f32.mrb[0].mxu0
      %1369 = vmatprep.mubr.f32.mxu0 %v507
      %1370 = vmatmul.mubr.f32.gmra.mrb[0].mxu0 %v394
      %v1371 = vpop.f32.mrb[0].mxu0
      %v1372 = vadd.f32 %v1147, %v1371
      %v1373 = vpop.f32.mrb[0].mxu0
      %1374 = vmatprep.mubr.f32.mxu0 %v509
      %1375 = vmatmul.mubr.f32.gmra.mrb[0].mxu0 %v396
      %v1376 = vpop.f32.mrb[0].mxu0
      %v1377 = vadd.f32 %v1152, %v1376
      %v1378 = vpop.f32.mrb[0].mxu0
      %1379 = vmatprep.mubr.f32.mxu0 %v512
      %1380 = vmatmul.mubr.f32.gmra.mrb[0].mxu0 %v399
      %v1381 = vpop.f32.mrb[0].mxu0
      %v1382 = vadd.f32 %v1157, %v1381
      %v1383 = vpop.f32.mrb[0].mxu0
      %1384 = vmatprep.mubr.f32.mxu0 %v514
      %1385 = vmatmul.mubr.f32.gmra.mrb[0].mxu0 %v401
      %v1386 = vpop.f32.mrb[0].mxu0
      %v1387 = vadd.f32 %v1162, %v1386
      %v1388 = vpop.f32.mrb[0].mxu0
      %1389 = vmatprep.mubr.f32.mxu0 %v559
      %1390 = vmatmul.mubr.f32.gmra.mrb[0].mxu0 %v552
      %v1391 = vpop.f32.mrb[0].mxu0
      %v1392 = vadd.f32 %v1167, %v1391
      %v1393 = vpop.f32.mrb[0].mxu0
      %1394 = vmatprep.mubr.f32.mxu0 %v561
      %1395 = vmatmul.mubr.f32.gmra.mrb[0].mxu0 %v554
      %v1396 = vpop.f32.mrb[0].mxu0
      %v1397 = vadd.f32 %v1172, %v1396
      %v1398 = vpop.f32.mrb[0].mxu0
      %1399 = vdwg.mxu0
      %1400 = vmatprep.subr.mxu0 0.0
      %1401 = vmatpush1.msra.mxu0 %v677
      %1402 = vmatprep.subr.mxu0 0.0
      %1403 = vmatpush1.msra.mxu0 %v678
      %1404 = vmatprep.subr.mxu0 0.0
      %1405 = vmatpush1.msra.mxu0 %v679
      %1406 = vmatprep.subr.mxu0 0.0
      %1407 = vmatpush1.msra.mxu0 %v680
      %1408 = vmatprep.subr.mxu0 0.0
      %1409 = vmatpush1.msra.mxu0 %v681
      %1410 = vmatprep.subr.mxu0 0.0
      %1411 = vmatpush1.msra.mxu0 %v682
      %1412 = vmatprep.subr.mxu0 0.0
      %1413 = vmatpush1.msra.mxu0 %v683
      %1414 = vmatprep.subr.mxu0 0.0
      %1415 = vmatpush1.msra.mxu0 %v684
      %1416 = vmatprep.subr.mxu0 0.0
      %1417 = vmatpush1.msra.mxu0 %v685
      %1418 = vmatprep.subr.mxu0 0.0
      %1419 = vmatpush1.msra.mxu0 %v686
      %1420 = vmatprep.subr.mxu0 0.0
      %1421 = vmatpush1.msra.mxu0 %v687
      %1422 = vmatprep.subr.mxu0 0.0
      %1423 = vmatpush1.msra.mxu0 %v688
      %1424 = vmatprep.subr.mxu0 0.0
      %1425 = vmatpush1.msra.mxu0 %v689
      %1426 = vmatprep.subr.mxu0 0.0
      %1427 = vmatpush1.msra.mxu0 %v690
      %1428 = vmatprep.subr.mxu0 0.0
      %1429 = vmatpush1.msra.mxu0 %v691
      %1430 = vmatprep.subr.mxu0 0.0
      %1431 = vmatpush1.msra.mxu0 %v692
      %1432 = vmatprep.subr.mxu0 0.0
      %1433 = vmatpush1.msra.mxu0 %v693
      %1434 = vmatprep.subr.mxu0 0.0
      %1435 = vmatpush1.msra.mxu0 %v694
      %1436 = vmatprep.subr.mxu0 0.0
      %1437 = vmatpush1.msra.mxu0 %v695
      %1438 = vmatprep.subr.mxu0 0.0
      %1439 = vmatpush1.msra.mxu0 %v696
      %1440 = vmatprep.subr.mxu0 0.0
      %1441 = vmatpush1.msra.mxu0 %v697
      %1442 = vmatprep.subr.mxu0 0.0
      %1443 = vmatpush1.msra.mxu0 %v698
      %1444 = vmatprep.subr.mxu0 0.0
      %1445 = vmatpush1.msra.mxu0 %v699
      %1446 = vmatprep.subr.mxu0 0.0
      %1447 = vmatpush1.msra.mxu0 %v700
      %1448 = vmatprep.subr.mxu0 0.0
      %1449 = vmatpush1.msra.mxu0 %v701
      %1450 = vmatprep.subr.mxu0 0.0
      %1451 = vmatpush1.msra.mxu0 %v702
      %1452 = vmatprep.subr.mxu0 0.0
      %1453 = vmatpush1.msra.mxu0 %v703
      %1454 = vmatprep.subr.mxu0 0.0
      %1455 = vmatpush1.msra.mxu0 %v704
      %1456 = vmatprep.subr.mxu0 0.0
      %1457 = vmatpush1.msra.mxu0 %v705
      %1458 = vmatprep.subr.mxu0 0.0
      %1459 = vmatpush1.msra.mxu0 %v706
      %1460 = vmatprep.subr.mxu0 0.0
      %1461 = vmatpush1.msra.mxu0 %v707
      %1462 = vmatprep.subr.mxu0 0.0
      %1463 = vmatpush1.msra.mxu0 %v708
      %1464 = vmatprep.mubr.f32.mxu0 %v334
      %1465 = vmatmul.mubr.f32.gmra.mrb[0].mxu0 %v225
      %v1466 = vpop.f32.mrb[0].mxu0
      %v1467 = vadd.f32 %v1242, %v1466
      %v1468 = vpop.f32.mrb[0].mxu0
      %1469 = vmatprep.mubr.f32.mxu0 %v336
      %1470 = vmatmul.mubr.f32.gmra.mrb[0].mxu0 %v226
      %v1471 = vpop.f32.mrb[0].mxu0
      %v1472 = vadd.f32 %v1247, %v1471
      %v1473 = vpop.f32.mrb[0].mxu0
      %1474 = vmatprep.mubr.f32.mxu0 %v339
      %1475 = vmatmul.mubr.f32.gmra.mrb[0].mxu0 %v228
      %v1476 = vpop.f32.mrb[0].mxu0
      %v1477 = vadd.f32 %v1252, %v1476
      %v1478 = vpop.f32.mrb[0].mxu0
      %1479 = vmatprep.mubr.f32.mxu0 %v341
      %1480 = vmatmul.mubr.f32.gmra.mrb[0].mxu0 %v229
      %v1481 = vpop.f32.mrb[0].mxu0
      %v1482 = vadd.f32 %v1257, %v1481
      %v1483 = vpop.f32.mrb[0].mxu0
      %1484 = vmatprep.mubr.f32.mxu0 %v344
      %1485 = vmatmul.mubr.f32.gmra.mrb[0].mxu0 %v231
      %v1486 = vpop.f32.mrb[0].mxu0
      %v1487 = vadd.f32 %v1262, %v1486
      %v1488 = vpop.f32.mrb[0].mxu0
      %1489 = vmatprep.mubr.f32.mxu0 %v346
      %1490 = vmatmul.mubr.f32.gmra.mrb[0].mxu0 %v232
      %v1491 = vpop.f32.mrb[0].mxu0
      %v1492 = vadd.f32 %v1267, %v1491
      %v1493 = vpop.f32.mrb[0].mxu0
      %1494 = vmatprep.mubr.f32.mxu0 %v349
      %1495 = vmatmul.mubr.f32.gmra.mrb[0].mxu0 %v234
      %v1496 = vpop.f32.mrb[0].mxu0
      %v1497 = vadd.f32 %v1272, %v1496
      %v1498 = vpop.f32.mrb[0].mxu0
      %1499 = vmatprep.mubr.f32.mxu0 %v351
      %1500 = vmatmul.mubr.f32.gmra.mrb[0].mxu0 %v235
      %v1501 = vpop.f32.mrb[0].mxu0
      %v1502 = vadd.f32 %v1277, %v1501
      %v1503 = vpop.f32.mrb[0].mxu0
      %1504 = vmatprep.mubr.f32.mxu0 %v354
      %1505 = vmatmul.mubr.f32.gmra.mrb[0].mxu0 %v237
      %v1506 = vpop.f32.mrb[0].mxu0
      %v1507 = vadd.f32 %v1282, %v1506
      %v1508 = vpop.f32.mrb[0].mxu0
      %1509 = vmatprep.mubr.f32.mxu0 %v356
      %1510 = vmatmul.mubr.f32.gmra.mrb[0].mxu0 %v238
      %v1511 = vpop.f32.mrb[0].mxu0
      %v1512 = vadd.f32 %v1287, %v1511
      %v1513 = vpop.f32.mrb[0].mxu0
      %1514 = vmatprep.mubr.f32.mxu0 %v359
      %1515 = vmatmul.mubr.f32.gmra.mrb[0].mxu0 %v240
      %v1516 = vpop.f32.mrb[0].mxu0
      %v1517 = vadd.f32 %v1292, %v1516
      %v1518 = vpop.f32.mrb[0].mxu0
      %1519 = vmatprep.mubr.f32.mxu0 %v361
      %1520 = vmatmul.mubr.f32.gmra.mrb[0].mxu0 %v241
      %v1521 = vpop.f32.mrb[0].mxu0
      %v1522 = vadd.f32 %v1297, %v1521
      %v1523 = vpop.f32.mrb[0].mxu0
      %1524 = vmatprep.mubr.f32.mxu0 %v364
      %1525 = vmatmul.mubr.f32.gmra.mrb[0].mxu0 %v243
      %v1526 = vpop.f32.mrb[0].mxu0
      %v1527 = vadd.f32 %v1302, %v1526
      %v1528 = vpop.f32.mrb[0].mxu0
      %1529 = vmatprep.mubr.f32.mxu0 %v366
      %1530 = vmatmul.mubr.f32.gmra.mrb[0].mxu0 %v244
      %v1531 = vpop.f32.mrb[0].mxu0
      %v1532 = vadd.f32 %v1307, %v1531
      %v1533 = vpop.f32.mrb[0].mxu0
      %1534 = vmatprep.mubr.f32.mxu0 %v369
      %1535 = vmatmul.mubr.f32.gmra.mrb[0].mxu0 %v246
      %v1536 = vpop.f32.mrb[0].mxu0
      %v1537 = vadd.f32 %v1312, %v1536
      %v1538 = vpop.f32.mrb[0].mxu0
      %1539 = vmatprep.mubr.f32.mxu0 %v371
      %1540 = vmatmul.mubr.f32.gmra.mrb[0].mxu0 %v247
      %v1541 = vpop.f32.mrb[0].mxu0
      %v1542 = vadd.f32 %v1317, %v1541
      %v1543 = vpop.f32.mrb[0].mxu0
      %1544 = vmatprep.mubr.f32.mxu0 %v374
      %1545 = vmatmul.mubr.f32.gmra.mrb[0].mxu0 %v249
      %v1546 = vpop.f32.mrb[0].mxu0
      %v1547 = vadd.f32 %v1322, %v1546
      %v1548 = vpop.f32.mrb[0].mxu0
      %1549 = vmatprep.mubr.f32.mxu0 %v376
      %1550 = vmatmul.mubr.f32.gmra.mrb[0].mxu0 %v250
      %v1551 = vpop.f32.mrb[0].mxu0
      %v1552 = vadd.f32 %v1327, %v1551
      %v1553 = vpop.f32.mrb[0].mxu0
      %1554 = vmatprep.mubr.f32.mxu0 %v379
      %1555 = vmatmul.mubr.f32.gmra.mrb[0].mxu0 %v252
      %v1556 = vpop.f32.mrb[0].mxu0
      %v1557 = vadd.f32 %v1332, %v1556
      %v1558 = vpop.f32.mrb[0].mxu0
      %1559 = vmatprep.mubr.f32.mxu0 %v381
      %1560 = vmatmul.mubr.f32.gmra.mrb[0].mxu0 %v253
      %v1561 = vpop.f32.mrb[0].mxu0
      %v1562 = vadd.f32 %v1337, %v1561
      %v1563 = vpop.f32.mrb[0].mxu0
      %1564 = vmatprep.mubr.f32.mxu0 %v384
      %1565 = vmatmul.mubr.f32.gmra.mrb[0].mxu0 %v255
      %v1566 = vpop.f32.mrb[0].mxu0
      %v1567 = vadd.f32 %v1342, %v1566
      %v1568 = vpop.f32.mrb[0].mxu0
      %1569 = vmatprep.mubr.f32.mxu0 %v386
      %1570 = vmatmul.mubr.f32.gmra.mrb[0].mxu0 %v256
      %v1571 = vpop.f32.mrb[0].mxu0
      %v1572 = vadd.f32 %v1347, %v1571
      %v1573 = vpop.f32.mrb[0].mxu0
      %1574 = vmatprep.mubr.f32.mxu0 %v389
      %1575 = vmatmul.mubr.f32.gmra.mrb[0].mxu0 %v258
      %v1576 = vpop.f32.mrb[0].mxu0
      %v1577 = vadd.f32 %v1352, %v1576
      %v1578 = vpop.f32.mrb[0].mxu0
      %1579 = vmatprep.mubr.f32.mxu0 %v391
      %1580 = vmatmul.mubr.f32.gmra.mrb[0].mxu0 %v259
      %v1581 = vpop.f32.mrb[0].mxu0
      %v1582 = vadd.f32 %v1357, %v1581
      %v1583 = vpop.f32.mrb[0].mxu0
      %1584 = vmatprep.mubr.f32.mxu0 %v394
      %1585 = vmatmul.mubr.f32.gmra.mrb[0].mxu0 %v261
      %v1586 = vpop.f32.mrb[0].mxu0
      %v1587 = vadd.f32 %v1362, %v1586
      %v1588 = vpop.f32.mrb[0].mxu0
      %1589 = vmatprep.mubr.f32.mxu0 %v396
      %1590 = vmatmul.mubr.f32.gmra.mrb[0].mxu0 %v262
      %v1591 = vpop.f32.mrb[0].mxu0
      %v1592 = vadd.f32 %v1367, %v1591
      %v1593 = vpop.f32.mrb[0].mxu0
      %1594 = vmatprep.mubr.f32.mxu0 %v399
      %1595 = vmatmul.mubr.f32.gmra.mrb[0].mxu0 %v264
      %v1596 = vpop.f32.mrb[0].mxu0
      %v1597 = vadd.f32 %v1372, %v1596
      %v1598 = vpop.f32.mrb[0].mxu0
      %1599 = vmatprep.mubr.f32.mxu0 %v401
      %1600 = vmatmul.mubr.f32.gmra.mrb[0].mxu0 %v265
      %v1601 = vpop.f32.mrb[0].mxu0
      %v1602 = vadd.f32 %v1377, %v1601
      %v1603 = vpop.f32.mrb[0].mxu0
      %1604 = vmatprep.mubr.f32.mxu0 %v552
      %1605 = vmatmul.mubr.f32.gmra.mrb[0].mxu0 %v267
      %v1606 = vpop.f32.mrb[0].mxu0
      %v1607 = vadd.f32 %v1382, %v1606
      %v1608 = vpop.f32.mrb[0].mxu0
      %1609 = vmatprep.mubr.f32.mxu0 %v554
      %1610 = vmatmul.mubr.f32.gmra.mrb[0].mxu0 %v268
      %v1611 = vpop.f32.mrb[0].mxu0
      %v1612 = vadd.f32 %v1387, %v1611
      %v1613 = vpop.f32.mrb[0].mxu0
      %1614 = vmatprep.mubr.f32.mxu0 %v569
      %1615 = vmatmul.mubr.f32.gmra.mrb[0].mxu0 %v270
      %v1616 = vpop.f32.mrb[0].mxu0
      %v1617 = vadd.f32 %v1392, %v1616
      %v1618 = vpop.f32.mrb[0].mxu0
      %1619 = vmatprep.mubr.f32.mxu0 %v571
      %1620 = vmatmul.mubr.f32.gmra.mrb[0].mxu0 %v271
      %v1621 = vpop.f32.mrb[0].mxu0
      %v1622 = vadd.f32 %v1397, %v1621
      %v1623 = vpop.f32.mrb[0].mxu0
      %1624 = vdwg.mxu0
      %1625 = vmatprep.subr.mxu0 0.0
      %1626 = vmatpush1.msra.mxu0 %v709
      %1627 = vmatprep.subr.mxu0 0.0
      %1628 = vmatpush1.msra.mxu0 %v710
      %1629 = vmatprep.subr.mxu0 0.0
      %1630 = vmatpush1.msra.mxu0 %v711
      %1631 = vmatprep.subr.mxu0 0.0
      %1632 = vmatpush1.msra.mxu0 %v712
      %1633 = vmatprep.subr.mxu0 0.0
      %1634 = vmatpush1.msra.mxu0 %v713
      %1635 = vmatprep.subr.mxu0 0.0
      %1636 = vmatpush1.msra.mxu0 %v714
      %1637 = vmatprep.subr.mxu0 0.0
      %1638 = vmatpush1.msra.mxu0 %v715
      %1639 = vmatprep.subr.mxu0 0.0
      %1640 = vmatpush1.msra.mxu0 %v716
      %1641 = vmatprep.subr.mxu0 0.0
      %1642 = vmatpush1.msra.mxu0 %v717
      %1643 = vmatprep.subr.mxu0 0.0
      %1644 = vmatpush1.msra.mxu0 %v718
      %1645 = vmatprep.subr.mxu0 0.0
      %1646 = vmatpush1.msra.mxu0 %v719
      %1647 = vmatprep.subr.mxu0 0.0
      %1648 = vmatpush1.msra.mxu0 %v720
      %1649 = vmatprep.subr.mxu0 0.0
      %1650 = vmatpush1.msra.mxu0 %v721
      %1651 = vmatprep.subr.mxu0 0.0
      %1652 = vmatpush1.msra.mxu0 %v722
      %1653 = vmatprep.subr.mxu0 0.0
      %1654 = vmatpush1.msra.mxu0 %v723
      %1655 = vmatprep.subr.mxu0 0.0
      %1656 = vmatpush1.msra.mxu0 %v724
      %1657 = vmatprep.subr.mxu0 0.0
      %1658 = vmatpush1.msra.mxu0 0.0
      %1659 = vmatprep.subr.mxu0 0.0
      %1660 = vmatpush1.msra.mxu0 0.0
      %1661 = vmatprep.subr.mxu0 0.0
      %1662 = vmatpush1.msra.mxu0 0.0
      %1663 = vmatprep.subr.mxu0 0.0
      %1664 = vmatpush1.msra.mxu0 0.0
      %1665 = vmatprep.subr.mxu0 0.0
      %1666 = vmatpush1.msra.mxu0 0.0
      %1667 = vmatprep.subr.mxu0 0.0
      %1668 = vmatpush1.msra.mxu0 0.0
      %1669 = vmatprep.subr.mxu0 0.0
      %1670 = vmatpush1.msra.mxu0 0.0
      %1671 = vmatprep.subr.mxu0 0.0
      %1672 = vmatpush1.msra.mxu0 0.0
      %1673 = vmatprep.subr.mxu0 0.0
      %1674 = vmatpush1.msra.mxu0 0.0
      %1675 = vmatprep.subr.mxu0 0.0
      %1676 = vmatpush1.msra.mxu0 0.0
      %1677 = vmatprep.subr.mxu0 0.0
      %1678 = vmatpush1.msra.mxu0 0.0
      %1679 = vmatprep.subr.mxu0 0.0
      %1680 = vmatpush1.msra.mxu0 0.0
      %1681 = vmatprep.subr.mxu0 0.0
      %1682 = vmatpush1.msra.mxu0 0.0
      %1683 = vmatprep.subr.mxu0 0.0
      %1684 = vmatpush1.msra.mxu0 0.0
      %1685 = vmatprep.subr.mxu0 0.0
      %1686 = vmatpush1.msra.mxu0 0.0
      %1687 = vmatprep.subr.mxu0 0.0
      %1688 = vmatpush1.msra.mxu0 0.0
      %1689 = vmatprep.mubr.f32.mxu0 0.0
      %1690 = vmatmul.mubr.f32.gmra.mrb[0].mxu0 %v447
      %v1691 = vpop.f32.mrb[0].mxu0
      %v1692 = vadd.f32 %v1467, %v1691
      %v1693 = vpop.f32.mrb[0].mxu0
      %1694 = vmatprep.mubr.f32.mxu0 0.0
      %1695 = vmatmul.mubr.f32.gmra.mrb[0].mxu0 %v449
      %v1696 = vpop.f32.mrb[0].mxu0
      %v1697 = vadd.f32 %v1472, %v1696
      %v1698 = vpop.f32.mrb[0].mxu0
      %1699 = vmatprep.mubr.f32.mxu0 0.0
      %1700 = vmatmul.mubr.f32.gmra.mrb[0].mxu0 %v452
      %v1701 = vpop.f32.mrb[0].mxu0
      %v1702 = vadd.f32 %v1477, %v1701
      %v1703 = vpop.f32.mrb[0].mxu0
      %1704 = vmatprep.mubr.f32.mxu0 0.0
      %1705 = vmatmul.mubr.f32.gmra.mrb[0].mxu0 %v454
      %v1706 = vpop.f32.mrb[0].mxu0
      %v1707 = vadd.f32 %v1482, %v1706
      %v1708 = vpop.f32.mrb[0].mxu0
      %1709 = vmatprep.mubr.f32.mxu0 0.0
      %1710 = vmatmul.mubr.f32.gmra.mrb[0].mxu0 %v457
      %v1711 = vpop.f32.mrb[0].mxu0
      %v1712 = vadd.f32 %v1487, %v1711
      %v1713 = vpop.f32.mrb[0].mxu0
      %1714 = vmatprep.mubr.f32.mxu0 0.0
      %1715 = vmatmul.mubr.f32.gmra.mrb[0].mxu0 %v459
      %v1716 = vpop.f32.mrb[0].mxu0
      %v1717 = vadd.f32 %v1492, %v1716
      %v1718 = vpop.f32.mrb[0].mxu0
      %1719 = vmatprep.mubr.f32.mxu0 0.0
      %1720 = vmatmul.mubr.f32.gmra.mrb[0].mxu0 %v462
      %v1721 = vpop.f32.mrb[0].mxu0
      %v1722 = vadd.f32 %v1497, %v1721
      %v1723 = vpop.f32.mrb[0].mxu0
      %1724 = vmatprep.mubr.f32.mxu0 0.0
      %1725 = vmatmul.mubr.f32.gmra.mrb[0].mxu0 %v464
      %v1726 = vpop.f32.mrb[0].mxu0
      %v1727 = vadd.f32 %v1502, %v1726
      %v1728 = vpop.f32.mrb[0].mxu0
      %1729 = vmatprep.mubr.f32.mxu0 0.0
      %1730 = vmatmul.mubr.f32.gmra.mrb[0].mxu0 %v467
      %v1731 = vpop.f32.mrb[0].mxu0
      %v1732 = vadd.f32 %v1507, %v1731
      %v1733 = vpop.f32.mrb[0].mxu0
      %1734 = vmatprep.mubr.f32.mxu0 0.0
      %1735 = vmatmul.mubr.f32.gmra.mrb[0].mxu0 %v469
      %v1736 = vpop.f32.mrb[0].mxu0
      %v1737 = vadd.f32 %v1512, %v1736
      %v1738 = vpop.f32.mrb[0].mxu0
      %1739 = vmatprep.mubr.f32.mxu0 0.0
      %1740 = vmatmul.mubr.f32.gmra.mrb[0].mxu0 %v472
      %v1741 = vpop.f32.mrb[0].mxu0
      %v1742 = vadd.f32 %v1517, %v1741
      %v1743 = vpop.f32.mrb[0].mxu0
      %1744 = vmatprep.mubr.f32.mxu0 0.0
      %1745 = vmatmul.mubr.f32.gmra.mrb[0].mxu0 %v474
      %v1746 = vpop.f32.mrb[0].mxu0
      %v1747 = vadd.f32 %v1522, %v1746
      %v1748 = vpop.f32.mrb[0].mxu0
      %1749 = vmatprep.mubr.f32.mxu0 0.0
      %1750 = vmatmul.mubr.f32.gmra.mrb[0].mxu0 %v477
      %v1751 = vpop.f32.mrb[0].mxu0
      %v1752 = vadd.f32 %v1527, %v1751
      %v1753 = vpop.f32.mrb[0].mxu0
      %1754 = vmatprep.mubr.f32.mxu0 0.0
      %1755 = vmatmul.mubr.f32.gmra.mrb[0].mxu0 %v479
      %v1756 = vpop.f32.mrb[0].mxu0
      %v1757 = vadd.f32 %v1532, %v1756
      %v1758 = vpop.f32.mrb[0].mxu0
      %1759 = vmatprep.mubr.f32.mxu0 0.0
      %1760 = vmatmul.mubr.f32.gmra.mrb[0].mxu0 %v482
      %v1761 = vpop.f32.mrb[0].mxu0
      %v1762 = vadd.f32 %v1537, %v1761
      %v1763 = vpop.f32.mrb[0].mxu0
      %1764 = vmatprep.mubr.f32.mxu0 0.0
      %1765 = vmatmul.mubr.f32.gmra.mrb[0].mxu0 %v484
      %v1766 = vpop.f32.mrb[0].mxu0
      %v1767 = vadd.f32 %v1542, %v1766
      %v1768 = vpop.f32.mrb[0].mxu0
      %1769 = vmatprep.mubr.f32.mxu0 0.0
      %1770 = vmatmul.mubr.f32.gmra.mrb[0].mxu0 %v487
      %v1771 = vpop.f32.mrb[0].mxu0
      %v1772 = vadd.f32 %v1547, %v1771
      %v1773 = vpop.f32.mrb[0].mxu0
      %1774 = vmatprep.mubr.f32.mxu0 0.0
      %1775 = vmatmul.mubr.f32.gmra.mrb[0].mxu0 %v489
      %v1776 = vpop.f32.mrb[0].mxu0
      %v1777 = vadd.f32 %v1552, %v1776
      %v1778 = vpop.f32.mrb[0].mxu0
      %1779 = vmatprep.mubr.f32.mxu0 0.0
      %1780 = vmatmul.mubr.f32.gmra.mrb[0].mxu0 %v492
      %v1781 = vpop.f32.mrb[0].mxu0
      %v1782 = vadd.f32 %v1557, %v1781
      %v1783 = vpop.f32.mrb[0].mxu0
      %1784 = vmatprep.mubr.f32.mxu0 0.0
      %1785 = vmatmul.mubr.f32.gmra.mrb[0].mxu0 %v494
      %v1786 = vpop.f32.mrb[0].mxu0
      %v1787 = vadd.f32 %v1562, %v1786
      %v1788 = vpop.f32.mrb[0].mxu0
      %1789 = vmatprep.mubr.f32.mxu0 0.0
      %1790 = vmatmul.mubr.f32.gmra.mrb[0].mxu0 %v497
      %v1791 = vpop.f32.mrb[0].mxu0
      %v1792 = vadd.f32 %v1567, %v1791
      %v1793 = vpop.f32.mrb[0].mxu0
      %1794 = vmatprep.mubr.f32.mxu0 0.0
      %1795 = vmatmul.mubr.f32.gmra.mrb[0].mxu0 %v499
      %v1796 = vpop.f32.mrb[0].mxu0
      %v1797 = vadd.f32 %v1572, %v1796
      %v1798 = vpop.f32.mrb[0].mxu0
      %1799 = vmatprep.mubr.f32.mxu0 0.0
      %1800 = vmatmul.mubr.f32.gmra.mrb[0].mxu0 %v502
      %v1801 = vpop.f32.mrb[0].mxu0
      %v1802 = vadd.f32 %v1577, %v1801
      %v1803 = vpop.f32.mrb[0].mxu0
      %1804 = vmatprep.mubr.f32.mxu0 0.0
      %1805 = vmatmul.mubr.f32.gmra.mrb[0].mxu0 %v504
      %v1806 = vpop.f32.mrb[0].mxu0
      %v1807 = vadd.f32 %v1582, %v1806
      %v1808 = vpop.f32.mrb[0].mxu0
      %1809 = vmatprep.mubr.f32.mxu0 0.0
      %1810 = vmatmul.mubr.f32.gmra.mrb[0].mxu0 %v507
      %v1811 = vpop.f32.mrb[0].mxu0
      %v1812 = vadd.f32 %v1587, %v1811
      %v1813 = vpop.f32.mrb[0].mxu0
      %1814 = vmatprep.mubr.f32.mxu0 0.0
      %1815 = vmatmul.mubr.f32.gmra.mrb[0].mxu0 %v509
      %v1816 = vpop.f32.mrb[0].mxu0
      %v1817 = vadd.f32 %v1592, %v1816
      %v1818 = vpop.f32.mrb[0].mxu0
      %1819 = vmatprep.mubr.f32.mxu0 0.0
      %1820 = vmatmul.mubr.f32.gmra.mrb[0].mxu0 %v512
      %v1821 = vpop.f32.mrb[0].mxu0
      %v1822 = vadd.f32 %v1597, %v1821
      %v1823 = vpop.f32.mrb[0].mxu0
      %1824 = vmatprep.mubr.f32.mxu0 0.0
      %1825 = vmatmul.mubr.f32.gmra.mrb[0].mxu0 %v514
      %v1826 = vpop.f32.mrb[0].mxu0
      %v1827 = vadd.f32 %v1602, %v1826
      %v1828 = vpop.f32.mrb[0].mxu0
      %1829 = vmatprep.mubr.f32.mxu0 0.0
      %1830 = vmatmul.mubr.f32.gmra.mrb[0].mxu0 %v559
      %v1831 = vpop.f32.mrb[0].mxu0
      %v1832 = vadd.f32 %v1607, %v1831
      %v1833 = vpop.f32.mrb[0].mxu0
      %1834 = vmatprep.mubr.f32.mxu0 0.0
      %1835 = vmatmul.mubr.f32.gmra.mrb[0].mxu0 %v561
      %v1836 = vpop.f32.mrb[0].mxu0
      %v1837 = vadd.f32 %v1612, %v1836
      %v1838 = vpop.f32.mrb[0].mxu0
      %1839 = vmatprep.mubr.f32.mxu0 0.0
      %1840 = vmatmul.mubr.f32.gmra.mrb[0].mxu0 %v576
      %v1841 = vpop.f32.mrb[0].mxu0
      %v1842 = vadd.f32 %v1617, %v1841
      %v1843 = vpop.f32.mrb[0].mxu0
      %1844 = vmatprep.mubr.f32.mxu0 0.0
      %1845 = vmatmul.mubr.f32.gmra.mrb[0].mxu0 %v578
      %v1846 = vpop.f32.mrb[0].mxu0
      %v1847 = vadd.f32 %v1622, %v1846
      %v1848 = vpop.f32.mrb[0].mxu0
      %1849 = vdwg.mxu0
      %1850 = vst [vmem:[%s211] sm:$0xff] %v1692
      %1851 = vst [vmem:[%s211 + $0x8] sm:$0xff] %v1697
      %1852 = vst [vmem:[%s211 + $0x10] sm:$0xff] %v1702
      %1853 = vst [vmem:[%s211 + $0x18] sm:$0xff] %v1707
      %1854 = vst [vmem:[%s211 + $0x20] sm:$0xff] %v1712
      %1855 = vst [vmem:[%s211 + $0x28] sm:$0xff] %v1717
      %1856 = vst [vmem:[%s211 + $0x30] sm:$0xff] %v1722
      %1857 = vst [vmem:[%s211 + $0x38] sm:$0xff] %v1727
      %1858 = vst [vmem:[%s211 + $0x40] sm:$0xff] %v1732
      %1859 = vst [vmem:[%s211 + $0x48] sm:$0xff] %v1737
      %1860 = vst [vmem:[%s211 + $0x50] sm:$0xff] %v1742
      %1861 = vst [vmem:[%s211 + $0x58] sm:$0xff] %v1747
      %1862 = vst [vmem:[%s211 + $0x60] sm:$0xff] %v1752
      %1863 = vst [vmem:[%s211 + $0x68] sm:$0xff] %v1757
      %1864 = vst [vmem:[%s211 + $0x70] sm:$0xff] %v1762
      %1865 = vst [vmem:[%s211 + $0x78] sm:$0xff] %v1767
      %1866 = vst [vmem:[%s211 + $0x80] sm:$0xff] %v1772
      %1867 = vst [vmem:[%s211 + $0x88] sm:$0xff] %v1777
      %1868 = vst [vmem:[%s211 + $0x90] sm:$0xff] %v1782
      %1869 = vst [vmem:[%s211 + $0x98] sm:$0xff] %v1787
      %1870 = vst [vmem:[%s211 + $0xa0] sm:$0xff] %v1792
      %1871 = vst [vmem:[%s211 + $0xa8] sm:$0xff] %v1797
      %1872 = vst [vmem:[%s211 + $0xb0] sm:$0xff] %v1802
      %1873 = vst [vmem:[%s211 + $0xb8] sm:$0xff] %v1807
      %1874 = vst [vmem:[%s211 + $0xc0] sm:$0xff] %v1812
      %1875 = vst [vmem:[%s211 + $0xc8] sm:$0xff] %v1817
      %1876 = vst [vmem:[%s211 + $0xd0] sm:$0xff] %v1822
      %1877 = vst [vmem:[%s211 + $0xd8] sm:$0xff] %v1827
      %1878 = vst [vmem:[%s211 + $0xe0] sm:$0xff] %v1832
      %1879 = vst [vmem:[%s211 + $0xe8] sm:$0xff] %v1837
      %1880 = vst [vmem:[%s211 + $0xf0] sm:$0xff] %v1842
      %1881 = vst [vmem:[%s211 + $0xf8] sm:$0xff] %v1847
      %v1882 = vadd.f32 %v1692, %v1697
      %v1883 = vadd.f32 %v1882, %v1702
      %v1884 = vadd.f32 %v1883, %v1707
      %v1885 = vadd.f32 %v1884, %v1712
      %v1886 = vadd.f32 %v1885, %v1717
      %v1887 = vadd.f32 %v1886, %v1722
      %v1888 = vadd.f32 %v1887, %v1727
      %v1889 = vadd.f32 %v1888, %v1732
      %v1890 = vadd.f32 %v1889, %v1737
      %v1891 = vadd.f32 %v1890, %v1742
      %v1892 = vadd.f32 %v1891, %v1747
      %v1893 = vadd.f32 %v1892, %v1752
      %v1894 = vadd.f32 %v1893, %v1757
      %v1895 = vadd.f32 %v1894, %v1762
      %v1896 = vadd.f32 %v1895, %v1767
      %v1897 = vadd.f32 %v1896, %v1772
      %v1898 = vadd.f32 %v1897, %v1777
      %v1899 = vadd.f32 %v1898, %v1782
      %v1900 = vadd.f32 %v1899, %v1787
      %v1901 = vadd.f32 %v1900, %v1792
      %v1902 = vadd.f32 %v1901, %v1797
      %v1903 = vadd.f32 %v1902, %v1802
      %v1904 = vadd.f32 %v1903, %v1807
      %v1905 = vadd.f32 %v1904, %v1812
      %v1906 = vadd.f32 %v1905, %v1817
      %v1907 = vadd.f32 %v1906, %v1822
      %v1908 = vadd.f32 %v1907, %v1827
      %v1909 = vadd.f32 %v1908, %v1832
      %v1910 = vadd.f32 %v1909, %v1837
      %v1911 = vadd.f32 %v1910, %v1842
      %v1912 = vadd.f32 %v1911, %v1847
      %v1913 = vrot.slane %v1912, 4
      %v1914 = vadd.f32 %v1912, %v1913
      %v1915 = vrot.slane %v1914, 2
      %v1916 = vadd.f32 %v1914, %v1915
      %v1917 = vrot.slane %v1916, 1
      %v1918 = vadd.f32 %v1916, %v1917
      %v1919 = vmul.f32 %v1918, 0.00390625
      %v1920 = vsub.f32 %v1692, %v1919
      %v1921 = vsub.f32 %v1697, %v1919
      %v1922 = vsub.f32 %v1702, %v1919
      %v1923 = vsub.f32 %v1707, %v1919
      %v1924 = vsub.f32 %v1712, %v1919
      %v1925 = vsub.f32 %v1717, %v1919
      %v1926 = vsub.f32 %v1722, %v1919
      %v1927 = vsub.f32 %v1727, %v1919
      %v1928 = vsub.f32 %v1732, %v1919
      %v1929 = vsub.f32 %v1737, %v1919
      %v1930 = vsub.f32 %v1742, %v1919
      %v1931 = vsub.f32 %v1747, %v1919
      %v1932 = vsub.f32 %v1752, %v1919
      %v1933 = vsub.f32 %v1757, %v1919
      %v1934 = vsub.f32 %v1762, %v1919
      %v1935 = vsub.f32 %v1767, %v1919
      %v1936 = vsub.f32 %v1772, %v1919
      %v1937 = vsub.f32 %v1777, %v1919
      %v1938 = vsub.f32 %v1782, %v1919
      %v1939 = vsub.f32 %v1787, %v1919
      %v1940 = vsub.f32 %v1792, %v1919
      %v1941 = vsub.f32 %v1797, %v1919
      %v1942 = vsub.f32 %v1802, %v1919
      %v1943 = vsub.f32 %v1807, %v1919
      %v1944 = vsub.f32 %v1812, %v1919
      %v1945 = vsub.f32 %v1817, %v1919
      %v1946 = vsub.f32 %v1822, %v1919
      %v1947 = vsub.f32 %v1827, %v1919
      %v1948 = vsub.f32 %v1832, %v1919
      %v1949 = vsub.f32 %v1837, %v1919
      %v1950 = vsub.f32 %v1842, %v1919
      %v1951 = vsub.f32 %v1847, %v1919
      %v1952 = vmul.f32 %v1920, %v1920
      %v1953 = vmul.f32 %v1921, %v1921
      %v1954 = vmul.f32 %v1922, %v1922
      %v1955 = vmul.f32 %v1923, %v1923
      %v1956 = vmul.f32 %v1924, %v1924
      %v1957 = vmul.f32 %v1925, %v1925
      %v1958 = vmul.f32 %v1926, %v1926
      %v1959 = vmul.f32 %v1927, %v1927
      %v1960 = vmul.f32 %v1928, %v1928
      %v1961 = vmul.f32 %v1929, %v1929
      %v1962 = vmul.f32 %v1930, %v1930
      %v1963 = vmul.f32 %v1931, %v1931
      %v1964 = vmul.f32 %v1932, %v1932
      %v1965 = vmul.f32 %v1933, %v1933
      %v1966 = vmul.f32 %v1934, %v1934
      %v1967 = vmul.f32 %v1935, %v1935
      %v1968 = vmul.f32 %v1936, %v1936
      %v1969 = vmul.f32 %v1937, %v1937
      %v1970 = vmul.f32 %v1938, %v1938
      %v1971 = vmul.f32 %v1939, %v1939
      %v1972 = vmul.f32 %v1940, %v1940
      %v1973 = vmul.f32 %v1941, %v1941
      %v1974 = vmul.f32 %v1942, %v1942
      %v1975 = vmul.f32 %v1943, %v1943
      %v1976 = vmul.f32 %v1944, %v1944
      %v1977 = vmul.f32 %v1945, %v1945
      %v1978 = vmul.f32 %v1946, %v1946
      %v1979 = vmul.f32 %v1947, %v1947
      %v1980 = vmul.f32 %v1948, %v1948
      %v1981 = vmul.f32 %v1949, %v1949
      %v1982 = vmul.f32 %v1950, %v1950
      %v1983 = vmul.f32 %v1951, %v1951
      %v1984 = vadd.f32 %v1952, %v1953
      %v1985 = vadd.f32 %v1984, %v1954
      %v1986 = vadd.f32 %v1985, %v1955
      %v1987 = vadd.f32 %v1986, %v1956
      %v1988 = vadd.f32 %v1987, %v1957
      %v1989 = vadd.f32 %v1988, %v1958
      %v1990 = vadd.f32 %v1989, %v1959
      %v1991 = vadd.f32 %v1990, %v1960
      %v1992 = vadd.f32 %v1991, %v1961
      %v1993 = vadd.f32 %v1992, %v1962
      %v1994 = vadd.f32 %v1993, %v1963
      %v1995 = vadd.f32 %v1994, %v1964
      %v1996 = vadd.f32 %v1995, %v1965
      %v1997 = vadd.f32 %v1996, %v1966
      %v1998 = vadd.f32 %v1997, %v1967
      %v1999 = vadd.f32 %v1998, %v1968
      %v2000 = vadd.f32 %v1999, %v1969
      %v2001 = vadd.f32 %v2000, %v1970
      %v2002 = vadd.f32 %v2001, %v1971
      %v2003 = vadd.f32 %v2002, %v1972
      %v2004 = vadd.f32 %v2003, %v1973
      %v2005 = vadd.f32 %v2004, %v1974
      %v2006 = vadd.f32 %v2005, %v1975
      %v2007 = vadd.f32 %v2006, %v1976
      %v2008 = vadd.f32 %v2007, %v1977
      %v2009 = vadd.f32 %v2008, %v1978
      %v2010 = vadd.f32 %v2009, %v1979
      %v2011 = vadd.f32 %v2010, %v1980
      %v2012 = vadd.f32 %v2011, %v1981
      %v2013 = vadd.f32 %v2012, %v1982
      %v2014 = vadd.f32 %v2013, %v1983
      %v2015 = vrot.slane %v2014, 4
      %v2016 = vadd.f32 %v2014, %v2015
      %v2017 = vrot.slane %v2016, 2
      %v2018 = vadd.f32 %v2016, %v2017
      %v2019 = vrot.slane %v2018, 1
      %v2020 = vadd.f32 %v2018, %v2019
      %vm2021 = vcmask 1040384
      %v2022 = vsel %vm2021, %v1918, %v2020
      %2023 = vst [vmem:[%s217] sm:$0x3] %v2022
      %s2024 = smul.u32 16, %s20
      %p2025 = scmp.lt.s32.totalorder %s19, 1
      %s2026 = scalar_select %p2025, %s19, 1
      %p2027 = scmp.lt.s32.totalorder %s2024, 15
      %s2028 = scalar_select %p2027, %s2024, 15
      %s2029 = smul.addr %s2028, 2
      %s2030 = smul.addr %s2026, 32
      %s2031 = sadd.s32 %s2029, %s2030
      %s2032 = smul.addr %s2031, 8
      %s2033 = scalar_lea.vmem %s2, %s2032
      %s2034 = sadd.s32 %s19, %s20
      %p2035 = scmp.lt.s32.totalorder %s2034, 1
      %s2036 = scalar_select %p2035, %s2034, 1
      %s2037 = smul.addr %s2036, 2
      %s2038 = scalar_lea.vmem %s3, %s2037
      // Predicated region
      $region29: #{double_conv.3} parent=27 // pred_check
        %p2039 = pneg %p96
      $region30: #{double_conv.3} parent=27 // pred_check_branch
        %2041 = sbr.rel (%p2039) target = $region32
      $region31: #{double_conv.3} parent=27 // pred_region
        %s2042 = smul.u32 16, %s20
      $region32: #{double_conv.3} parent=27 // pred_fallthru
        _
      // Predicated region
      $region33: #{double_conv.3} parent=27 // pred_check
        %p2043 = pneg %p124
      $region34: #{double_conv.3} parent=27 // pred_check_branch
        %2045 = sbr.rel (%p2043) target = $region36
      $region35: #{double_conv.3} parent=27 // pred_region
        %s2046 = sadd.s32 %s19, %s20
      $region36: #{double_conv.3} parent=27 // pred_fallthru
        _
    $region28: #{double_conv.3} parent=5 // pred_fallthru
      _
    %p2047 = scmp.le.s32.totalorder 2, %s10
    // Predicated region
    $region37: #{double_conv.3} parent=5 // pred_check
      %p2048 = pneg %p2047
    $region38: #{double_conv.3} parent=5 // pred_check_branch
      %2050 = sbr.rel (%p2048) target = $region40
    $region39: #{double_conv.3} parent=5 // pred_region
      %s2051 = ssub.s32 %s10, 2
      // Predicated region
      $region41: #{double_conv.3} parent=39 // pred_check
        %p2052 = pneg %p102
      $region42: #{double_conv.3} parent=39 // pred_check_branch
        %2054 = sbr.rel (%p2052) target = $region44
      $region43: #{double_conv.3} parent=39 // pred_region
        %s2055 = smul.u32 16, %s22
        %p2056 = scmp.lt.s32.totalorder %s21, 1
        %s2057 = scalar_select %p2056, %s21, 1
        %p2058 = scmp.lt.s32.totalorder %s2055, 15
        %s2059 = scalar_select %p2058, %s2055, 15
        %s2060 = smul.addr %s2059, 2
        %s2061 = smul.addr %s2057, 32
        %s2062 = sadd.s32 %s2060, %s2061
        %s2063 = smul.addr %s2062, 8
        %s2064 = scalar_lea.vmem %s2, %s2063
      $region44: #{double_conv.3} parent=39 // pred_fallthru
        _
      // Predicated region
      $region45: #{double_conv.3} parent=39 // pred_check
        %p2065 = pneg %p130
      $region46: #{double_conv.3} parent=39 // pred_check_branch
        %2067 = sbr.rel (%p2065) target = $region48
      $region47: #{double_conv.3} parent=39 // pred_region
        %s2068 = sadd.s32 %s21, %s22
        %p2069 = scmp.lt.s32.totalorder %s2068, 1
        %s2070 = scalar_select %p2069, %s2068, 1
        %s2071 = smul.addr %s2070, 2
        %s2072 = scalar_lea.vmem %s3, %s2071
      $region48: #{double_conv.3} parent=39 // pred_fallthru
        _
    $region40: #{double_conv.3} parent=5 // pred_fallthru
      _
  $region6: #{double_conv.3} parent=0 // loop_footer
    %s14 = sadd.s32 1, %s10
  $region7: #{double_conv.3} parent=0 // loop_footer_branch
    %9 = sbr.rel target = $region3
  $region8: #{double_conv.3} parent=0 // loop_exit
    _

</llo_original>
